<compile_context>
chip_gen: v7x
topology: tpu7x:2x2x1
jax: 0.10.0
libtpu: 0.0.40
codegen_flags: <defaults>
</compile_context>

<pallas_src>
import functools

import jax
import jax.numpy as jnp
from jax import lax
from jax.experimental import pallas as pl
from jax.experimental.pallas import tpu as pltpu

K_POS = 15   # hard-positive index hardcoded in _batch_hard (sorted[:, 15])
K_NEG = 30   # hard-negative index hardcoded in _batch_hard (sorted[:, 30])
_OUT_SUB, _OUT_LANE = 8, 128   # (sublane, lane)-aligned per-block output tile


def _triplet_kernel(x_ref, y_ref, out_ref, *, margin, n, tm,
                    normalize_feature):
    i = pl.program_id(0)

    x = x_ref[...].astype(jnp.float32)                           # (TM, D)
    y = y_ref[...].astype(jnp.float32)                           # (N, D)

    if normalize_feature:
        # F.normalize(emb): x / max(||x||, 1e-12) == x * rsqrt(max(||x||^2, 1e-24))
        sq = jnp.sum(x * x, axis=1, keepdims=True)
        x = x * lax.rsqrt(jnp.maximum(sq, 1e-24))

    # --- squared euclidean distances (MXU + elementwise) ---------------------
    xx = jnp.sum(x * x, axis=1, keepdims=True)                   # (TM, 1)
    yy = jnp.sum(y * y, axis=1)[None, :]                         # (1, N)
    xyT = lax.dot_general(x, y,
                          dimension_numbers=(((1,), (1,)), ((), ())),
                          preferred_element_type=jnp.float32)    # (TM, N)
    dist2 = jnp.maximum(xx + yy - 2.0 * xyT, 1e-12)              # (TM, N)
    # selection happens on dist2; sqrt only the selected values at the end.

    # --- 31-step iterative min-extraction (exact k-th order statistic) -------
    zeros_col = jnp.zeros((tm, 1), jnp.float32)

    def body(_, carry):
        work, removed, hp2, hn2 = carry
        cur = jnp.min(work, axis=1, keepdims=True)               # (TM, 1)
        is_min = work == cur                                     # (TM, N)
        cnt = jnp.sum(is_min.astype(jnp.float32), axis=1, keepdims=True)
        new_removed = removed + cnt
        # sorted[k] == cur  iff  removed <= k < removed + cnt  (ties included)
        hit_p = jnp.logical_and(removed <= K_POS, new_removed > K_POS)
        hit_n = jnp.logical_and(removed <= K_NEG, new_removed > K_NEG)
        hp2 = jnp.where(hit_p, cur, hp2)
        hn2 = jnp.where(hit_n, cur, hn2)
        work = jnp.where(is_min, jnp.inf, work)
        return work, new_removed, hp2, hn2

    _, _, hp2, hn2 = lax.fori_loop(
        0, K_NEG + 1, body, (dist2, zeros_col, zeros_col, zeros_col),
        unroll=True)

    hard_p = jnp.sqrt(hp2)                                       # (TM, 1)
    hard_n = jnp.sqrt(hn2)                                       # (TM, 1)

    # --- MarginRankingLoss(margin), y = 1: max(0, margin + d_ap - d_an) ------
    per = jnp.maximum(0.0, jnp.float32(margin) + hard_p - hard_n)
    # mask padding rows of a ragged last block (they may hold garbage/NaN)
    row_id = i * tm + lax.broadcasted_iota(jnp.int32, (tm, 1), 0)
    per = jnp.where(row_id < n, per, 0.0)
    partial = jnp.sum(per)                                       # scalar

    # per-block partial sum in an (8,128)-aligned tile: value at [0,0], zeros
    # elsewhere (full unmasked store; no cross-iteration accumulator).
    r = lax.broadcasted_iota(jnp.int32, (_OUT_SUB, _OUT_LANE), 0)
    c = lax.broadcasted_iota(jnp.int32, (_OUT_SUB, _OUT_LANE), 1)
    out_ref[...] = jnp.where(jnp.logical_and(r == 0, c == 0), partial, 0.0)


def triplet_loss_pallas(emb, emb2, label=None, *, margin=0.3,
                        normalize_feature=False, block_rows=256):
    del label  # unused in the reference forward pass
    n, d = emb.shape
    n2, d2 = emb2.shape
    assert n2 == n, "distance matrix must be square"
    assert n > K_NEG, "_batch_hard indexes column 30; need N >= 31"

    if n <= block_rows:
        tm = n                    # single block (block dim == full dim allowed)
    else:
        tm = block_rows
        assert tm % 8 == 0, "row-block must be a sublane multiple"
    num_blocks = pl.cdiv(n, tm)

    kernel = functools.partial(
        _triplet_kernel, margin=float(margin), n=n, tm=tm,
        normalize_feature=normalize_feature)

    grid_spec = pltpu.PrefetchScalarGridSpec(
        num_scalar_prefetch=0,
        grid=(num_blocks,),
        in_specs=[
            pl.BlockSpec((tm, d), lambda i: (i, 0)),       # x row block
            pl.BlockSpec((n2, d2), lambda i: (0, 0)),      # y fully resident
        ],
        # one (8,128) partial-sum tile per row block -> parallel grid axis
        out_specs=pl.BlockSpec((_OUT_SUB, _OUT_LANE), lambda i: (i, 0)),
    )

    # Explicit VMEM budget (v7x has only 64 MiB physical): double-buffered x
    # block + resident y + selection working set + output tiles, 2x headroom.
    est_bytes = 4 * (2 * tm * d + 2 * n2 * d2 + 4 * tm * n2 + 16 * tm
                     + 2 * _OUT_SUB * _OUT_LANE)
    vmem_limit = int(min(max(2 * est_bytes, 16 * 1024 * 1024),
                         48 * 1024 * 1024))

    out = pl.pallas_call(
        kernel,
        out_shape=jax.ShapeDtypeStruct((_OUT_SUB * num_blocks, _OUT_LANE),
                                       jnp.float32),
        grid_spec=grid_spec,
        compiler_params=pltpu.CompilerParams(
            dimension_semantics=("parallel",),
            vmem_limit_bytes=vmem_limit),
    )(emb, emb2)
    # only the [block*8, 0] entries are nonzero; sum recovers the total.
    return jnp.sum(out) / jnp.float32(n)


def triplet_loss_ref(emb, emb2, *, margin=0.3, normalize_feature=False):
    """Pure-JAX reference mirroring the PyTorch forward."""
    x = emb
    if normalize_feature:
        x = x / jnp.maximum(
            jnp.sqrt(jnp.sum(x * x, axis=1, keepdims=True)), 1e-12)
    xx = jnp.sum(x * x, axis=1, keepdims=True)
    yy = jnp.sum(emb2 * emb2, axis=1)[None, :]
    dist = jnp.sqrt(jnp.clip(xx + yy - 2.0 * x @ emb2.T, 1e-12, None))
    s = jnp.sort(dist, axis=1)
    hard_p, hard_n = s[:, K_POS], s[:, K_NEG]
    return jnp.mean(jnp.maximum(0.0, margin + hard_p - hard_n))


# TODO(synk): the SoftMarginLoss branch (margin=None) and the `prec` statistic
# (computed but not returned by the PyTorch forward) are not implemented.

if __name__ == "__main__":
    key = jax.random.PRNGKey(0)
    k1, k2, k3, k4 = jax.random.split(key, 4)

    margin = 0.3  # TripletLoss(margin=0.3)

    # case 1: single row-block path (N >= 31 required by the hardcoded indices)
    N, D = 32, 64
    emb = jax.random.normal(k1, (N, D), dtype=jnp.float32)
    emb2 = jax.random.normal(k2, (N, D), dtype=jnp.float32)
    label = jax.random.randint(k3, (N,), 0, 8)        # unused, API parity
    loss = jax.block_until_ready(
        triplet_loss_pallas(emb, emb2, label, margin=margin))
    loss_ref = triplet_loss_ref(emb, emb2, margin=margin)
    assert jnp.allclose(loss, loss_ref, atol=1e-5, rtol=1e-5), (loss, loss_ref)

    # case 2: multi-block path with a ragged last row block (exercises masking
    # and the parallel per-block partial-sum outputs)
    N2, D2 = 40, 64
    emb_b = jax.random.normal(k4, (N2, D2), dtype=jnp.float32)
    emb2_b = jax.random.normal(k2, (N2, D2), dtype=jnp.float32)
    loss_b = jax.block_until_ready(
        triplet_loss_pallas(emb_b, emb2_b, None, margin=margin, block_rows=16))
    loss_b_ref = triplet_loss_ref(emb_b, emb2_b, margin=margin)
    assert jnp.allclose(loss_b, loss_b_ref, atol=1e-5, rtol=1e-5), (
        loss_b, loss_b_ref)

    # case 3: normalize_feature=True path
    loss_n = jax.block_until_ready(
        triplet_loss_pallas(emb, emb2, label, margin=margin,
                            normalize_feature=True))
    loss_n_ref = triplet_loss_ref(emb, emb2, margin=margin,
                                  normalize_feature=True)
    assert jnp.allclose(loss_n, loss_n_ref, atol=1e-5, rtol=1e-5), (
        loss_n, loss_n_ref)

    print("KERNEL_OK")
</pallas_src>

<mosaic_0001>
module attributes {stable_mosaic.version = 11 : i64} {
  func.func @_triplet_kernel(%arg0: i32, %arg1: memref<32x64xf32, #tpu.memory_space<vmem>>, %arg2: memref<32x64xf32, #tpu.memory_space<vmem>>, %arg3: memref<8x128xf32, #tpu.memory_space<vmem>>) attributes {dimension_semantics = [#tpu.dimension_semantics<parallel>], iteration_bounds = array<i64: 1>, scalar_prefetch = 0 : i64, scratch_operands = 0 : i64, tpu.core_type = #tpu.core_type<tc>, window_params = [{transform_indices = @transform_0, window_bounds = array<i64: 32, 64>}, {pipeline_mode = #tpu.pipeline_mode<synchronous>, transform_indices = @transform_1, window_bounds = array<i64: 32, 64>}, {transform_indices = @transform_2, window_bounds = array<i64: 8, 128>}]} {
    %c0 = arith.constant 0 : index
    %c0_0 = arith.constant 0 : index
    %0 = vector.load %arg1[%c0, %c0_0] : memref<32x64xf32, #tpu.memory_space<vmem>>, vector<32x64xf32>
    %c0_1 = arith.constant 0 : index
    %c0_2 = arith.constant 0 : index
    %1 = vector.load %arg2[%c0_1, %c0_2] : memref<32x64xf32, #tpu.memory_space<vmem>>, vector<32x64xf32>
    %2 = arith.mulf %0, %0 : vector<32x64xf32>
    %cst = arith.constant dense<0.000000e+00> : vector<32xf32>
    %3 = vector.multi_reduction <add>, %2, %cst [1] : vector<32x64xf32> to vector<32xf32>
    %4 = vector.shape_cast %3 : vector<32xf32> to vector<32x1xf32>
    %5 = arith.mulf %1, %1 : vector<32x64xf32>
    %cst_3 = arith.constant dense<0.000000e+00> : vector<32xf32>
    %6 = vector.multi_reduction <add>, %5, %cst_3 [1] : vector<32x64xf32> to vector<32xf32>
    %7 = vector.shape_cast %6 : vector<32xf32> to vector<1x32xf32>
    %cst_4 = arith.constant dense<0.000000e+00> : vector<32x32xf32>
    %8 = tpu.matmul %0, %1, %cst_4 {dimension_numbers = #tpu.dot_dimension_numbers<[1], [1], [0], [0], [0, 0, 1, 0], [], []>} : vector<32x64xf32>, vector<32x64xf32>, vector<32x32xf32> -> vector<32x32xf32>
    %9 = vector.broadcast %4 : vector<32x1xf32> to vector<32x32xf32>
    %10 = vector.broadcast %7 : vector<1x32xf32> to vector<32x32xf32>
    %11 = arith.addf %9, %10 : vector<32x32xf32>
    %cst_5 = arith.constant 2.000000e+00 : f32
    %12 = vector.broadcast %cst_5 : f32 to vector<32x32xf32>
    %13 = arith.mulf %12, %8 : vector<32x32xf32>
    %14 = arith.subf %11, %13 : vector<32x32xf32>
    %cst_6 = arith.constant 9.99999996E-13 : f32
    %15 = vector.broadcast %cst_6 : f32 to vector<32x32xf32>
    %16 = arith.maximumf %14, %15 : vector<32x32xf32>
    %cst_7 = arith.constant 0.000000e+00 : f32
    %17 = vector.broadcast %cst_7 : f32 to vector<32x1xf32>
    %c0_i32 = arith.constant 0 : i32
    %cst_8 = arith.constant dense<0x7F800000> : vector<32xf32>
    %18 = vector.multi_reduction <minimumf>, %16, %cst_8 [1] : vector<32x32xf32> to vector<32xf32>
    %19 = vector.shape_cast %18 : vector<32xf32> to vector<32x1xf32>
    %20 = vector.broadcast %19 : vector<32x1xf32> to vector<32x32xf32>
    %21 = arith.cmpf oeq, %16, %20 : vector<32x32xf32>
    %22 = arith.extui %21 : vector<32x32xi1> to vector<32x32xi32>
    %23 = arith.sitofp %22 : vector<32x32xi32> to vector<32x32xf32>
    %cst_9 = arith.constant dense<0.000000e+00> : vector<32xf32>
    %24 = vector.multi_reduction <add>, %23, %cst_9 [1] : vector<32x32xf32> to vector<32xf32>
    %25 = vector.shape_cast %24 : vector<32xf32> to vector<32x1xf32>
    %26 = arith.addf %17, %25 : vector<32x1xf32>
    %cst_10 = arith.constant 1.500000e+01 : f32
    %27 = vector.broadcast %cst_10 : f32 to vector<32x1xf32>
    %28 = arith.cmpf ole, %17, %27 : vector<32x1xf32>
    %cst_11 = arith.constant 1.500000e+01 : f32
    %29 = vector.broadcast %cst_11 : f32 to vector<32x1xf32>
    %30 = arith.cmpf ogt, %26, %29 : vector<32x1xf32>
    %31 = arith.andi %28, %30 : vector<32x1xi1>
    %cst_12 = arith.constant 3.000000e+01 : f32
    %32 = vector.broadcast %cst_12 : f32 to vector<32x1xf32>
    %33 = arith.cmpf ole, %17, %32 : vector<32x1xf32>
    %cst_13 = arith.constant 3.000000e+01 : f32
    %34 = vector.broadcast %cst_13 : f32 to vector<32x1xf32>
    %35 = arith.cmpf ogt, %26, %34 : vector<32x1xf32>
    %36 = arith.andi %33, %35 : vector<32x1xi1>
    %37 = arith.select %31, %19, %17 : vector<32x1xi1>, vector<32x1xf32>
    %38 = arith.select %36, %19, %17 : vector<32x1xi1>, vector<32x1xf32>
    %cst_14 = arith.constant 0x7F800000 : f32
    %39 = vector.broadcast %cst_14 : f32 to vector<32x32xf32>
    %40 = arith.select %21, %39, %16 : vector<32x32xi1>, vector<32x32xf32>
    %c1_i32 = arith.constant 1 : i32
    %cst_15 = arith.constant dense<0x7F800000> : vector<32xf32>
    %41 = vector.multi_reduction <minimumf>, %40, %cst_15 [1] : vector<32x32xf32> to vector<32xf32>
    %42 = vector.shape_cast %41 : vector<32xf32> to vector<32x1xf32>
    %43 = vector.broadcast %42 : vector<32x1xf32> to vector<32x32xf32>
    %44 = arith.cmpf oeq, %40, %43 : vector<32x32xf32>
    %45 = arith.extui %44 : vector<32x32xi1> to vector<32x32xi32>
    %46 = arith.sitofp %45 : vector<32x32xi32> to vector<32x32xf32>
    %cst_16 = arith.constant dense<0.000000e+00> : vector<32xf32>
    %47 = vector.multi_reduction <add>, %46, %cst_16 [1] : vector<32x32xf32> to vector<32xf32>
    %48 = vector.shape_cast %47 : vector<32xf32> to vector<32x1xf32>
    %49 = arith.addf %26, %48 : vector<32x1xf32>
    %cst_17 = arith.constant 1.500000e+01 : f32
    %50 = vector.broadcast %cst_17 : f32 to vector<32x1xf32>
    %51 = arith.cmpf ole, %26, %50 : vector<32x1xf32>
    %cst_18 = arith.constant 1.500000e+01 : f32
    %52 = vector.broadcast %cst_18 : f32 to vector<32x1xf32>
    %53 = arith.cmpf ogt, %49, %52 : vector<32x1xf32>
    %54 = arith.andi %51, %53 : vector<32x1xi1>
    %cst_19 = arith.constant 3.000000e+01 : f32
    %55 = vector.broadcast %cst_19 : f32 to vector<32x1xf32>
    %56 = arith.cmpf ole, %26, %55 : vector<32x1xf32>
    %cst_20 = arith.constant 3.000000e+01 : f32
    %57 = vector.broadcast %cst_20 : f32 to vector<32x1xf32>
    %58 = arith.cmpf ogt, %49, %57 : vector<32x1xf32>
    %59 = arith.andi %56, %58 : vector<32x1xi1>
    %60 = arith.select %54, %42, %37 : vector<32x1xi1>, vector<32x1xf32>
    %61 = arith.select %59, %42, %38 : vector<32x1xi1>, vector<32x1xf32>
    %cst_21 = arith.constant 0x7F800000 : f32
    %62 = vector.broadcast %cst_21 : f32 to vector<32x32xf32>
    %63 = arith.select %44, %62, %40 : vector<32x32xi1>, vector<32x32xf32>
    %c2_i32 = arith.constant 2 : i32
    %cst_22 = arith.constant dense<0x7F800000> : vector<32xf32>
    %64 = vector.multi_reduction <minimumf>, %63, %cst_22 [1] : vector<32x32xf32> to vector<32xf32>
    %65 = vector.shape_cast %64 : vector<32xf32> to vector<32x1xf32>
    %66 = vector.broadcast %65 : vector<32x1xf32> to vector<32x32xf32>
    %67 = arith.cmpf oeq, %63, %66 : vector<32x32xf32>
    %68 = arith.extui %67 : vector<32x32xi1> to vector<32x32xi32>
    %69 = arith.sitofp %68 : vector<32x32xi32> to vector<32x32xf32>
    %cst_23 = arith.constant dense<0.000000e+00> : vector<32xf32>
    %70 = vector.multi_reduction <add>, %69, %cst_23 [1] : vector<32x32xf32> to vector<32xf32>
    %71 = vector.shape_cast %70 : vector<32xf32> to vector<32x1xf32>
    %72 = arith.addf %49, %71 : vector<32x1xf32>
    %cst_24 = arith.constant 1.500000e+01 : f32
    %73 = vector.broadcast %cst_24 : f32 to vector<32x1xf32>
    %74 = arith.cmpf ole, %49, %73 : vector<32x1xf32>
    %cst_25 = arith.constant 1.500000e+01 : f32
    %75 = vector.broadcast %cst_25 : f32 to vector<32x1xf32>
    %76 = arith.cmpf ogt, %72, %75 : vector<32x1xf32>
    %77 = arith.andi %74, %76 : vector<32x1xi1>
    %cst_26 = arith.constant 3.000000e+01 : f32
    %78 = vector.broadcast %cst_26 : f32 to vector<32x1xf32>
    %79 = arith.cmpf ole, %49, %78 : vector<32x1xf32>
    %cst_27 = arith.constant 3.000000e+01 : f32
    %80 = vector.broadcast %cst_27 : f32 to vector<32x1xf32>
    %81 = arith.cmpf ogt, %72, %80 : vector<32x1xf32>
    %82 = arith.andi %79, %81 : vector<32x1xi1>
    %83 = arith.select %77, %65, %60 : vector<32x1xi1>, vector<32x1xf32>
    %84 = arith.select %82, %65, %61 : vector<32x1xi1>, vector<32x1xf32>
    %cst_28 = arith.constant 0x7F800000 : f32
    %85 = vector.broadcast %cst_28 : f32 to vector<32x32xf32>
    %86 = arith.select %67, %85, %63 : vector<32x32xi1>, vector<32x32xf32>
    %c3_i32 = arith.constant 3 : i32
    %cst_29 = arith.constant dense<0x7F800000> : vector<32xf32>
    %87 = vector.multi_reduction <minimumf>, %86, %cst_29 [1] : vector<32x32xf32> to vector<32xf32>
    %88 = vector.shape_cast %87 : vector<32xf32> to vector<32x1xf32>
    %89 = vector.broadcast %88 : vector<32x1xf32> to vector<32x32xf32>
    %90 = arith.cmpf oeq, %86, %89 : vector<32x32xf32>
    %91 = arith.extui %90 : vector<32x32xi1> to vector<32x32xi32>
    %92 = arith.sitofp %91 : vector<32x32xi32> to vector<32x32xf32>
    %cst_30 = arith.constant dense<0.000000e+00> : vector<32xf32>
    %93 = vector.multi_reduction <add>, %92, %cst_30 [1] : vector<32x32xf32> to vector<32xf32>
    %94 = vector.shape_cast %93 : vector<32xf32> to vector<32x1xf32>
    %95 = arith.addf %72, %94 : vector<32x1xf32>
    %cst_31 = arith.constant 1.500000e+01 : f32
    %96 = vector.broadcast %cst_31 : f32 to vector<32x1xf32>
    %97 = arith.cmpf ole, %72, %96 : vector<32x1xf32>
    %cst_32 = arith.constant 1.500000e+01 : f32
    %98 = vector.broadcast %cst_32 : f32 to vector<32x1xf32>
    %99 = arith.cmpf ogt, %95, %98 : vector<32x1xf32>
    %100 = arith.andi %97, %99 : vector<32x1xi1>
    %cst_33 = arith.constant 3.000000e+01 : f32
    %101 = vector.broadcast %cst_33 : f32 to vector<32x1xf32>
    %102 = arith.cmpf ole, %72, %101 : vector<32x1xf32>
    %cst_34 = arith.constant 3.000000e+01 : f32
    %103 = vector.broadcast %cst_34 : f32 to vector<32x1xf32>
    %104 = arith.cmpf ogt, %95, %103 : vector<32x1xf32>
    %105 = arith.andi %102, %104 : vector<32x1xi1>
    %106 = arith.select %100, %88, %83 : vector<32x1xi1>, vector<32x1xf32>
    %107 = arith.select %105, %88, %84 : vector<32x1xi1>, vector<32x1xf32>
    %cst_35 = arith.constant 0x7F800000 : f32
    %108 = vector.broadcast %cst_35 : f32 to vector<32x32xf32>
    %109 = arith.select %90, %108, %86 : vector<32x32xi1>, vector<32x32xf32>
    %c4_i32 = arith.constant 4 : i32
    %cst_36 = arith.constant dense<0x7F800000> : vector<32xf32>
    %110 = vector.multi_reduction <minimumf>, %109, %cst_36 [1] : vector<32x32xf32> to vector<32xf32>
    %111 = vector.shape_cast %110 : vector<32xf32> to vector<32x1xf32>
    %112 = vector.broadcast %111 : vector<32x1xf32> to vector<32x32xf32>
    %113 = arith.cmpf oeq, %109, %112 : vector<32x32xf32>
    %114 = arith.extui %113 : vector<32x32xi1> to vector<32x32xi32>
    %115 = arith.sitofp %114 : vector<32x32xi32> to vector<32x32xf32>
    %cst_37 = arith.constant dense<0.000000e+00> : vector<32xf32>
    %116 = vector.multi_reduction <add>, %115, %cst_37 [1] : vector<32x32xf32> to vector<32xf32>
    %117 = vector.shape_cast %116 : vector<32xf32> to vector<32x1xf32>
    %118 = arith.addf %95, %117 : vector<32x1xf32>
    %cst_38 = arith.constant 1.500000e+01 : f32
    %119 = vector.broadcast %cst_38 : f32 to vector<32x1xf32>
    %120 = arith.cmpf ole, %95, %119 : vector<32x1xf32>
    %cst_39 = arith.constant 1.500000e+01 : f32
    %121 = vector.broadcast %cst_39 : f32 to vector<32x1xf32>
    %122 = arith.cmpf ogt, %118, %121 : vector<32x1xf32>
    %123 = arith.andi %120, %122 : vector<32x1xi1>
    %cst_40 = arith.constant 3.000000e+01 : f32
    %124 = vector.broadcast %cst_40 : f32 to vector<32x1xf32>
    %125 = arith.cmpf ole, %95, %124 : vector<32x1xf32>
    %cst_41 = arith.constant 3.000000e+01 : f32
    %126 = vector.broadcast %cst_41 : f32 to vector<32x1xf32>
    %127 = arith.cmpf ogt, %118, %126 : vector<32x1xf32>
    %128 = arith.andi %125, %127 : vector<32x1xi1>
    %129 = arith.select %123, %111, %106 : vector<32x1xi1>, vector<32x1xf32>
    %130 = arith.select %128, %111, %107 : vector<32x1xi1>, vector<32x1xf32>
    %cst_42 = arith.constant 0x7F800000 : f32
    %131 = vector.broadcast %cst_42 : f32 to vector<32x32xf32>
    %132 = arith.select %113, %131, %109 : vector<32x32xi1>, vector<32x32xf32>
    %c5_i32 = arith.constant 5 : i32
    %cst_43 = arith.constant dense<0x7F800000> : vector<32xf32>
    %133 = vector.multi_reduction <minimumf>, %132, %cst_43 [1] : vector<32x32xf32> to vector<32xf32>
    %134 = vector.shape_cast %133 : vector<32xf32> to vector<32x1xf32>
    %135 = vector.broadcast %134 : vector<32x1xf32> to vector<32x32xf32>
    %136 = arith.cmpf oeq, %132, %135 : vector<32x32xf32>
    %137 = arith.extui %136 : vector<32x32xi1> to vector<32x32xi32>
    %138 = arith.sitofp %137 : vector<32x32xi32> to vector<32x32xf32>
    %cst_44 = arith.constant dense<0.000000e+00> : vector<32xf32>
    %139 = vector.multi_reduction <add>, %138, %cst_44 [1] : vector<32x32xf32> to vector<32xf32>
    %140 = vector.shape_cast %139 : vector<32xf32> to vector<32x1xf32>
    %141 = arith.addf %118, %140 : vector<32x1xf32>
    %cst_45 = arith.constant 1.500000e+01 : f32
    %142 = vector.broadcast %cst_45 : f32 to vector<32x1xf32>
    %143 = arith.cmpf ole, %118, %142 : vector<32x1xf32>
    %cst_46 = arith.constant 1.500000e+01 : f32
    %144 = vector.broadcast %cst_46 : f32 to vector<32x1xf32>
    %145 = arith.cmpf ogt, %141, %144 : vector<32x1xf32>
    %146 = arith.andi %143, %145 : vector<32x1xi1>
    %cst_47 = arith.constant 3.000000e+01 : f32
    %147 = vector.broadcast %cst_47 : f32 to vector<32x1xf32>
    %148 = arith.cmpf ole, %118, %147 : vector<32x1xf32>
    %cst_48 = arith.constant 3.000000e+01 : f32
    %149 = vector.broadcast %cst_48 : f32 to vector<32x1xf32>
    %150 = arith.cmpf ogt, %141, %149 : vector<32x1xf32>
    %151 = arith.andi %148, %150 : vector<32x1xi1>
    %152 = arith.select %146, %134, %129 : vector<32x1xi1>, vector<32x1xf32>
    %153 = arith.select %151, %134, %130 : vector<32x1xi1>, vector<32x1xf32>
    %cst_49 = arith.constant 0x7F800000 : f32
    %154 = vector.broadcast %cst_49 : f32 to vector<32x32xf32>
    %155 = arith.select %136, %154, %132 : vector<32x32xi1>, vector<32x32xf32>
    %c6_i32 = arith.constant 6 : i32
    %cst_50 = arith.constant dense<0x7F800000> : vector<32xf32>
    %156 = vector.multi_reduction <minimumf>, %155, %cst_50 [1] : vector<32x32xf32> to vector<32xf32>
    %157 = vector.shape_cast %156 : vector<32xf32> to vector<32x1xf32>
    %158 = vector.broadcast %157 : vector<32x1xf32> to vector<32x32xf32>
    %159 = arith.cmpf oeq, %155, %158 : vector<32x32xf32>
    %160 = arith.extui %159 : vector<32x32xi1> to vector<32x32xi32>
    %161 = arith.sitofp %160 : vector<32x32xi32> to vector<32x32xf32>
    %cst_51 = arith.constant dense<0.000000e+00> : vector<32xf32>
    %162 = vector.multi_reduction <add>, %161, %cst_51 [1] : vector<32x32xf32> to vector<32xf32>
    %163 = vector.shape_cast %162 : vector<32xf32> to vector<32x1xf32>
    %164 = arith.addf %141, %163 : vector<32x1xf32>
    %cst_52 = arith.constant 1.500000e+01 : f32
    %165 = vector.broadcast %cst_52 : f32 to vector<32x1xf32>
    %166 = arith.cmpf ole, %141, %165 : vector<32x1xf32>
    %cst_53 = arith.constant 1.500000e+01 : f32
    %167 = vector.broadcast %cst_53 : f32 to vector<32x1xf32>
    %168 = arith.cmpf ogt, %164, %167 : vector<32x1xf32>
    %169 = arith.andi %166, %168 : vector<32x1xi1>
    %cst_54 = arith.constant 3.000000e+01 : f32
    %170 = vector.broadcast %cst_54 : f32 to vector<32x1xf32>
    %171 = arith.cmpf ole, %141, %170 : vector<32x1xf32>
    %cst_55 = arith.constant 3.000000e+01 : f32
    %172 = vector.broadcast %cst_55 : f32 to vector<32x1xf32>
    %173 = arith.cmpf ogt, %164, %172 : vector<32x1xf32>
    %174 = arith.andi %171, %173 : vector<32x1xi1>
    %175 = arith.select %169, %157, %152 : vector<32x1xi1>, vector<32x1xf32>
    %176 = arith.select %174, %157, %153 : vector<32x1xi1>, vector<32x1xf32>
    %cst_56 = arith.constant 0x7F800000 : f32
    %177 = vector.broadcast %cst_56 : f32 to vector<32x32xf32>
    %178 = arith.select %159, %177, %155 : vector<32x32xi1>, vector<32x32xf32>
    %c7_i32 = arith.constant 7 : i32
    %cst_57 = arith.constant dense<0x7F800000> : vector<32xf32>
    %179 = vector.multi_reduction <minimumf>, %178, %cst_57 [1] : vector<32x32xf32> to vector<32xf32>
    %180 = vector.shape_cast %179 : vector<32xf32> to vector<32x1xf32>
    %181 = vector.broadcast %180 : vector<32x1xf32> to vector<32x32xf32>
    %182 = arith.cmpf oeq, %178, %181 : vector<32x32xf32>
    %183 = arith.extui %182 : vector<32x32xi1> to vector<32x32xi32>
    %184 = arith.sitofp %183 : vector<32x32xi32> to vector<32x32xf32>
    %cst_58 = arith.constant dense<0.000000e+00> : vector<32xf32>
    %185 = vector.multi_reduction <add>, %184, %cst_58 [1] : vector<32x32xf32> to vector<32xf32>
    %186 = vector.shape_cast %185 : vector<32xf32> to vector<32x1xf32>
    %187 = arith.addf %164, %186 : vector<32x1xf32>
    %cst_59 = arith.constant 1.500000e+01 : f32
    %188 = vector.broadcast %cst_59 : f32 to vector<32x1xf32>
    %189 = arith.cmpf ole, %164, %188 : vector<32x1xf32>
    %cst_60 = arith.constant 1.500000e+01 : f32
    %190 = vector.broadcast %cst_60 : f32 to vector<32x1xf32>
    %191 = arith.cmpf ogt, %187, %190 : vector<32x1xf32>
    %192 = arith.andi %189, %191 : vector<32x1xi1>
    %cst_61 = arith.constant 3.000000e+01 : f32
    %193 = vector.broadcast %cst_61 : f32 to vector<32x1xf32>
    %194 = arith.cmpf ole, %164, %193 : vector<32x1xf32>
    %cst_62 = arith.constant 3.000000e+01 : f32
    %195 = vector.broadcast %cst_62 : f32 to vector<32x1xf32>
    %196 = arith.cmpf ogt, %187, %195 : vector<32x1xf32>
    %197 = arith.andi %194, %196 : vector<32x1xi1>
    %198 = arith.select %192, %180, %175 : vector<32x1xi1>, vector<32x1xf32>
    %199 = arith.select %197, %180, %176 : vector<32x1xi1>, vector<32x1xf32>
    %cst_63 = arith.constant 0x7F800000 : f32
    %200 = vector.broadcast %cst_63 : f32 to vector<32x32xf32>
    %201 = arith.select %182, %200, %178 : vector<32x32xi1>, vector<32x32xf32>
    %c8_i32 = arith.constant 8 : i32
    %cst_64 = arith.constant dense<0x7F800000> : vector<32xf32>
    %202 = vector.multi_reduction <minimumf>, %201, %cst_64 [1] : vector<32x32xf32> to vector<32xf32>
    %203 = vector.shape_cast %202 : vector<32xf32> to vector<32x1xf32>
    %204 = vector.broadcast %203 : vector<32x1xf32> to vector<32x32xf32>
    %205 = arith.cmpf oeq, %201, %204 : vector<32x32xf32>
    %206 = arith.extui %205 : vector<32x32xi1> to vector<32x32xi32>
    %207 = arith.sitofp %206 : vector<32x32xi32> to vector<32x32xf32>
    %cst_65 = arith.constant dense<0.000000e+00> : vector<32xf32>
    %208 = vector.multi_reduction <add>, %207, %cst_65 [1] : vector<32x32xf32> to vector<32xf32>
    %209 = vector.shape_cast %208 : vector<32xf32> to vector<32x1xf32>
    %210 = arith.addf %187, %209 : vector<32x1xf32>
    %cst_66 = arith.constant 1.500000e+01 : f32
    %211 = vector.broadcast %cst_66 : f32 to vector<32x1xf32>
    %212 = arith.cmpf ole, %187, %211 : vector<32x1xf32>
    %cst_67 = arith.constant 1.500000e+01 : f32
    %213 = vector.broadcast %cst_67 : f32 to vector<32x1xf32>
    %214 = arith.cmpf ogt, %210, %213 : vector<32x1xf32>
    %215 = arith.andi %212, %214 : vector<32x1xi1>
    %cst_68 = arith.constant 3.000000e+01 : f32
    %216 = vector.broadcast %cst_68 : f32 to vector<32x1xf32>
    %217 = arith.cmpf ole, %187, %216 : vector<32x1xf32>
    %cst_69 = arith.constant 3.000000e+01 : f32
    %218 = vector.broadcast %cst_69 : f32 to vector<32x1xf32>
    %219 = arith.cmpf ogt, %210, %218 : vector<32x1xf32>
    %220 = arith.andi %217, %219 : vector<32x1xi1>
    %221 = arith.select %215, %203, %198 : vector<32x1xi1>, vector<32x1xf32>
    %222 = arith.select %220, %203, %199 : vector<32x1xi1>, vector<32x1xf32>
    %cst_70 = arith.constant 0x7F800000 : f32
    %223 = vector.broadcast %cst_70 : f32 to vector<32x32xf32>
    %224 = arith.select %205, %223, %201 : vector<32x32xi1>, vector<32x32xf32>
    %c9_i32 = arith.constant 9 : i32
    %cst_71 = arith.constant dense<0x7F800000> : vector<32xf32>
    %225 = vector.multi_reduction <minimumf>, %224, %cst_71 [1] : vector<32x32xf32> to vector<32xf32>
    %226 = vector.shape_cast %225 : vector<32xf32> to vector<32x1xf32>
    %227 = vector.broadcast %226 : vector<32x1xf32> to vector<32x32xf32>
    %228 = arith.cmpf oeq, %224, %227 : vector<32x32xf32>
    %229 = arith.extui %228 : vector<32x32xi1> to vector<32x32xi32>
    %230 = arith.sitofp %229 : vector<32x32xi32> to vector<32x32xf32>
    %cst_72 = arith.constant dense<0.000000e+00> : vector<32xf32>
    %231 = vector.multi_reduction <add>, %230, %cst_72 [1] : vector<32x32xf32> to vector<32xf32>
    %232 = vector.shape_cast %231 : vector<32xf32> to vector<32x1xf32>
    %233 = arith.addf %210, %232 : vector<32x1xf32>
    %cst_73 = arith.constant 1.500000e+01 : f32
    %234 = vector.broadcast %cst_73 : f32 to vector<32x1xf32>
    %235 = arith.cmpf ole, %210, %234 : vector<32x1xf32>
    %cst_74 = arith.constant 1.500000e+01 : f32
    %236 = vector.broadcast %cst_74 : f32 to vector<32x1xf32>
    %237 = arith.cmpf ogt, %233, %236 : vector<32x1xf32>
    %238 = arith.andi %235, %237 : vector<32x1xi1>
    %cst_75 = arith.constant 3.000000e+01 : f32
    %239 = vector.broadcast %cst_75 : f32 to vector<32x1xf32>
    %240 = arith.cmpf ole, %210, %239 : vector<32x1xf32>
    %cst_76 = arith.constant 3.000000e+01 : f32
    %241 = vector.broadcast %cst_76 : f32 to vector<32x1xf32>
    %242 = arith.cmpf ogt, %233, %241 : vector<32x1xf32>
    %243 = arith.andi %240, %242 : vector<32x1xi1>
    %244 = arith.select %238, %226, %221 : vector<32x1xi1>, vector<32x1xf32>
    %245 = arith.select %243, %226, %222 : vector<32x1xi1>, vector<32x1xf32>
    %cst_77 = arith.constant 0x7F800000 : f32
    %246 = vector.broadcast %cst_77 : f32 to vector<32x32xf32>
    %247 = arith.select %228, %246, %224 : vector<32x32xi1>, vector<32x32xf32>
    %c10_i32 = arith.constant 10 : i32
    %cst_78 = arith.constant dense<0x7F800000> : vector<32xf32>
    %248 = vector.multi_reduction <minimumf>, %247, %cst_78 [1] : vector<32x32xf32> to vector<32xf32>
    %249 = vector.shape_cast %248 : vector<32xf32> to vector<32x1xf32>
    %250 = vector.broadcast %249 : vector<32x1xf32> to vector<32x32xf32>
    %251 = arith.cmpf oeq, %247, %250 : vector<32x32xf32>
    %252 = arith.extui %251 : vector<32x32xi1> to vector<32x32xi32>
    %253 = arith.sitofp %252 : vector<32x32xi32> to vector<32x32xf32>
    %cst_79 = arith.constant dense<0.000000e+00> : vector<32xf32>
    %254 = vector.multi_reduction <add>, %253, %cst_79 [1] : vector<32x32xf32> to vector<32xf32>
    %255 = vector.shape_cast %254 : vector<32xf32> to vector<32x1xf32>
    %256 = arith.addf %233, %255 : vector<32x1xf32>
    %cst_80 = arith.constant 1.500000e+01 : f32
    %257 = vector.broadcast %cst_80 : f32 to vector<32x1xf32>
    %258 = arith.cmpf ole, %233, %257 : vector<32x1xf32>
    %cst_81 = arith.constant 1.500000e+01 : f32
    %259 = vector.broadcast %cst_81 : f32 to vector<32x1xf32>
    %260 = arith.cmpf ogt, %256, %259 : vector<32x1xf32>
    %261 = arith.andi %258, %260 : vector<32x1xi1>
    %cst_82 = arith.constant 3.000000e+01 : f32
    %262 = vector.broadcast %cst_82 : f32 to vector<32x1xf32>
    %263 = arith.cmpf ole, %233, %262 : vector<32x1xf32>
    %cst_83 = arith.constant 3.000000e+01 : f32
    %264 = vector.broadcast %cst_83 : f32 to vector<32x1xf32>
    %265 = arith.cmpf ogt, %256, %264 : vector<32x1xf32>
    %266 = arith.andi %263, %265 : vector<32x1xi1>
    %267 = arith.select %261, %249, %244 : vector<32x1xi1>, vector<32x1xf32>
    %268 = arith.select %266, %249, %245 : vector<32x1xi1>, vector<32x1xf32>
    %cst_84 = arith.constant 0x7F800000 : f32
    %269 = vector.broadcast %cst_84 : f32 to vector<32x32xf32>
    %270 = arith.select %251, %269, %247 : vector<32x32xi1>, vector<32x32xf32>
    %c11_i32 = arith.constant 11 : i32
    %cst_85 = arith.constant dense<0x7F800000> : vector<32xf32>
    %271 = vector.multi_reduction <minimumf>, %270, %cst_85 [1] : vector<32x32xf32> to vector<32xf32>
    %272 = vector.shape_cast %271 : vector<32xf32> to vector<32x1xf32>
    %273 = vector.broadcast %272 : vector<32x1xf32> to vector<32x32xf32>
    %274 = arith.cmpf oeq, %270, %273 : vector<32x32xf32>
    %275 = arith.extui %274 : vector<32x32xi1> to vector<32x32xi32>
    %276 = arith.sitofp %275 : vector<32x32xi32> to vector<32x32xf32>
    %cst_86 = arith.constant dense<0.000000e+00> : vector<32xf32>
    %277 = vector.multi_reduction <add>, %276, %cst_86 [1] : vector<32x32xf32> to vector<32xf32>
    %278 = vector.shape_cast %277 : vector<32xf32> to vector<32x1xf32>
    %279 = arith.addf %256, %278 : vector<32x1xf32>
    %cst_87 = arith.constant 1.500000e+01 : f32
    %280 = vector.broadcast %cst_87 : f32 to vector<32x1xf32>
    %281 = arith.cmpf ole, %256, %280 : vector<32x1xf32>
    %cst_88 = arith.constant 1.500000e+01 : f32
    %282 = vector.broadcast %cst_88 : f32 to vector<32x1xf32>
    %283 = arith.cmpf ogt, %279, %282 : vector<32x1xf32>
    %284 = arith.andi %281, %283 : vector<32x1xi1>
    %cst_89 = arith.constant 3.000000e+01 : f32
    %285 = vector.broadcast %cst_89 : f32 to vector<32x1xf32>
    %286 = arith.cmpf ole, %256, %285 : vector<32x1xf32>
    %cst_90 = arith.constant 3.000000e+01 : f32
    %287 = vector.broadcast %cst_90 : f32 to vector<32x1xf32>
    %288 = arith.cmpf ogt, %279, %287 : vector<32x1xf32>
    %289 = arith.andi %286, %288 : vector<32x1xi1>
    %290 = arith.select %284, %272, %267 : vector<32x1xi1>, vector<32x1xf32>
    %291 = arith.select %289, %272, %268 : vector<32x1xi1>, vector<32x1xf32>
    %cst_91 = arith.constant 0x7F800000 : f32
    %292 = vector.broadcast %cst_91 : f32 to vector<32x32xf32>
    %293 = arith.select %274, %292, %270 : vector<32x32xi1>, vector<32x32xf32>
    %c12_i32 = arith.constant 12 : i32
    %cst_92 = arith.constant dense<0x7F800000> : vector<32xf32>
    %294 = vector.multi_reduction <minimumf>, %293, %cst_92 [1] : vector<32x32xf32> to vector<32xf32>
    %295 = vector.shape_cast %294 : vector<32xf32> to vector<32x1xf32>
    %296 = vector.broadcast %295 : vector<32x1xf32> to vector<32x32xf32>
    %297 = arith.cmpf oeq, %293, %296 : vector<32x32xf32>
    %298 = arith.extui %297 : vector<32x32xi1> to vector<32x32xi32>
    %299 = arith.sitofp %298 : vector<32x32xi32> to vector<32x32xf32>
    %cst_93 = arith.constant dense<0.000000e+00> : vector<32xf32>
    %300 = vector.multi_reduction <add>, %299, %cst_93 [1] : vector<32x32xf32> to vector<32xf32>
    %301 = vector.shape_cast %300 : vector<32xf32> to vector<32x1xf32>
    %302 = arith.addf %279, %301 : vector<32x1xf32>
    %cst_94 = arith.constant 1.500000e+01 : f32
    %303 = vector.broadcast %cst_94 : f32 to vector<32x1xf32>
    %304 = arith.cmpf ole, %279, %303 : vector<32x1xf32>
    %cst_95 = arith.constant 1.500000e+01 : f32
    %305 = vector.broadcast %cst_95 : f32 to vector<32x1xf32>
    %306 = arith.cmpf ogt, %302, %305 : vector<32x1xf32>
    %307 = arith.andi %304, %306 : vector<32x1xi1>
    %cst_96 = arith.constant 3.000000e+01 : f32
    %308 = vector.broadcast %cst_96 : f32 to vector<32x1xf32>
    %309 = arith.cmpf ole, %279, %308 : vector<32x1xf32>
    %cst_97 = arith.constant 3.000000e+01 : f32
    %310 = vector.broadcast %cst_97 : f32 to vector<32x1xf32>
    %311 = arith.cmpf ogt, %302, %310 : vector<32x1xf32>
    %312 = arith.andi %309, %311 : vector<32x1xi1>
    %313 = arith.select %307, %295, %290 : vector<32x1xi1>, vector<32x1xf32>
    %314 = arith.select %312, %295, %291 : vector<32x1xi1>, vector<32x1xf32>
    %cst_98 = arith.constant 0x7F800000 : f32
    %315 = vector.broadcast %cst_98 : f32 to vector<32x32xf32>
    %316 = arith.select %297, %315, %293 : vector<32x32xi1>, vector<32x32xf32>
    %c13_i32 = arith.constant 13 : i32
    %cst_99 = arith.constant dense<0x7F800000> : vector<32xf32>
    %317 = vector.multi_reduction <minimumf>, %316, %cst_99 [1] : vector<32x32xf32> to vector<32xf32>
    %318 = vector.shape_cast %317 : vector<32xf32> to vector<32x1xf32>
    %319 = vector.broadcast %318 : vector<32x1xf32> to vector<32x32xf32>
    %320 = arith.cmpf oeq, %316, %319 : vector<32x32xf32>
    %321 = arith.extui %320 : vector<32x32xi1> to vector<32x32xi32>
    %322 = arith.sitofp %321 : vector<32x32xi32> to vector<32x32xf32>
    %cst_100 = arith.constant dense<0.000000e+00> : vector<32xf32>
    %323 = vector.multi_reduction <add>, %322, %cst_100 [1] : vector<32x32xf32> to vector<32xf32>
    %324 = vector.shape_cast %323 : vector<32xf32> to vector<32x1xf32>
    %325 = arith.addf %302, %324 : vector<32x1xf32>
    %cst_101 = arith.constant 1.500000e+01 : f32
    %326 = vector.broadcast %cst_101 : f32 to vector<32x1xf32>
    %327 = arith.cmpf ole, %302, %326 : vector<32x1xf32>
    %cst_102 = arith.constant 1.500000e+01 : f32
    %328 = vector.broadcast %cst_102 : f32 to vector<32x1xf32>
    %329 = arith.cmpf ogt, %325, %328 : vector<32x1xf32>
    %330 = arith.andi %327, %329 : vector<32x1xi1>
    %cst_103 = arith.constant 3.000000e+01 : f32
    %331 = vector.broadcast %cst_103 : f32 to vector<32x1xf32>
    %332 = arith.cmpf ole, %302, %331 : vector<32x1xf32>
    %cst_104 = arith.constant 3.000000e+01 : f32
    %333 = vector.broadcast %cst_104 : f32 to vector<32x1xf32>
    %334 = arith.cmpf ogt, %325, %333 : vector<32x1xf32>
    %335 = arith.andi %332, %334 : vector<32x1xi1>
    %336 = arith.select %330, %318, %313 : vector<32x1xi1>, vector<32x1xf32>
    %337 = arith.select %335, %318, %314 : vector<32x1xi1>, vector<32x1xf32>
    %cst_105 = arith.constant 0x7F800000 : f32
    %338 = vector.broadcast %cst_105 : f32 to vector<32x32xf32>
    %339 = arith.select %320, %338, %316 : vector<32x32xi1>, vector<32x32xf32>
    %c14_i32 = arith.constant 14 : i32
    %cst_106 = arith.constant dense<0x7F800000> : vector<32xf32>
    %340 = vector.multi_reduction <minimumf>, %339, %cst_106 [1] : vector<32x32xf32> to vector<32xf32>
    %341 = vector.shape_cast %340 : vector<32xf32> to vector<32x1xf32>
    %342 = vector.broadcast %341 : vector<32x1xf32> to vector<32x32xf32>
    %343 = arith.cmpf oeq, %339, %342 : vector<32x32xf32>
    %344 = arith.extui %343 : vector<32x32xi1> to vector<32x32xi32>
    %345 = arith.sitofp %344 : vector<32x32xi32> to vector<32x32xf32>
    %cst_107 = arith.constant dense<0.000000e+00> : vector<32xf32>
    %346 = vector.multi_reduction <add>, %345, %cst_107 [1] : vector<32x32xf32> to vector<32xf32>
    %347 = vector.shape_cast %346 : vector<32xf32> to vector<32x1xf32>
    %348 = arith.addf %325, %347 : vector<32x1xf32>
    %cst_108 = arith.constant 1.500000e+01 : f32
    %349 = vector.broadcast %cst_108 : f32 to vector<32x1xf32>
    %350 = arith.cmpf ole, %325, %349 : vector<32x1xf32>
    %cst_109 = arith.constant 1.500000e+01 : f32
    %351 = vector.broadcast %cst_109 : f32 to vector<32x1xf32>
    %352 = arith.cmpf ogt, %348, %351 : vector<32x1xf32>
    %353 = arith.andi %350, %352 : vector<32x1xi1>
    %cst_110 = arith.constant 3.000000e+01 : f32
    %354 = vector.broadcast %cst_110 : f32 to vector<32x1xf32>
    %355 = arith.cmpf ole, %325, %354 : vector<32x1xf32>
    %cst_111 = arith.constant 3.000000e+01 : f32
    %356 = vector.broadcast %cst_111 : f32 to vector<32x1xf32>
    %357 = arith.cmpf ogt, %348, %356 : vector<32x1xf32>
    %358 = arith.andi %355, %357 : vector<32x1xi1>
    %359 = arith.select %353, %341, %336 : vector<32x1xi1>, vector<32x1xf32>
    %360 = arith.select %358, %341, %337 : vector<32x1xi1>, vector<32x1xf32>
    %cst_112 = arith.constant 0x7F800000 : f32
    %361 = vector.broadcast %cst_112 : f32 to vector<32x32xf32>
    %362 = arith.select %343, %361, %339 : vector<32x32xi1>, vector<32x32xf32>
    %c15_i32 = arith.constant 15 : i32
    %cst_113 = arith.constant dense<0x7F800000> : vector<32xf32>
    %363 = vector.multi_reduction <minimumf>, %362, %cst_113 [1] : vector<32x32xf32> to vector<32xf32>
    %364 = vector.shape_cast %363 : vector<32xf32> to vector<32x1xf32>
    %365 = vector.broadcast %364 : vector<32x1xf32> to vector<32x32xf32>
    %366 = arith.cmpf oeq, %362, %365 : vector<32x32xf32>
    %367 = arith.extui %366 : vector<32x32xi1> to vector<32x32xi32>
    %368 = arith.sitofp %367 : vector<32x32xi32> to vector<32x32xf32>
    %cst_114 = arith.constant dense<0.000000e+00> : vector<32xf32>
    %369 = vector.multi_reduction <add>, %368, %cst_114 [1] : vector<32x32xf32> to vector<32xf32>
    %370 = vector.shape_cast %369 : vector<32xf32> to vector<32x1xf32>
    %371 = arith.addf %348, %370 : vector<32x1xf32>
    %cst_115 = arith.constant 1.500000e+01 : f32
    %372 = vector.broadcast %cst_115 : f32 to vector<32x1xf32>
    %373 = arith.cmpf ole, %348, %372 : vector<32x1xf32>
    %cst_116 = arith.constant 1.500000e+01 : f32
    %374 = vector.broadcast %cst_116 : f32 to vector<32x1xf32>
    %375 = arith.cmpf ogt, %371, %374 : vector<32x1xf32>
    %376 = arith.andi %373, %375 : vector<32x1xi1>
    %cst_117 = arith.constant 3.000000e+01 : f32
    %377 = vector.broadcast %cst_117 : f32 to vector<32x1xf32>
    %378 = arith.cmpf ole, %348, %377 : vector<32x1xf32>
    %cst_118 = arith.constant 3.000000e+01 : f32
    %379 = vector.broadcast %cst_118 : f32 to vector<32x1xf32>
    %380 = arith.cmpf ogt, %371, %379 : vector<32x1xf32>
    %381 = arith.andi %378, %380 : vector<32x1xi1>
    %382 = arith.select %376, %364, %359 : vector<32x1xi1>, vector<32x1xf32>
    %383 = arith.select %381, %364, %360 : vector<32x1xi1>, vector<32x1xf32>
    %cst_119 = arith.constant 0x7F800000 : f32
    %384 = vector.broadcast %cst_119 : f32 to vector<32x32xf32>
    %385 = arith.select %366, %384, %362 : vector<32x32xi1>, vector<32x32xf32>
    %c16_i32 = arith.constant 16 : i32
    %cst_120 = arith.constant dense<0x7F800000> : vector<32xf32>
    %386 = vector.multi_reduction <minimumf>, %385, %cst_120 [1] : vector<32x32xf32> to vector<32xf32>
    %387 = vector.shape_cast %386 : vector<32xf32> to vector<32x1xf32>
    %388 = vector.broadcast %387 : vector<32x1xf32> to vector<32x32xf32>
    %389 = arith.cmpf oeq, %385, %388 : vector<32x32xf32>
    %390 = arith.extui %389 : vector<32x32xi1> to vector<32x32xi32>
    %391 = arith.sitofp %390 : vector<32x32xi32> to vector<32x32xf32>
    %cst_121 = arith.constant dense<0.000000e+00> : vector<32xf32>
    %392 = vector.multi_reduction <add>, %391, %cst_121 [1] : vector<32x32xf32> to vector<32xf32>
    %393 = vector.shape_cast %392 : vector<32xf32> to vector<32x1xf32>
    %394 = arith.addf %371, %393 : vector<32x1xf32>
    %cst_122 = arith.constant 1.500000e+01 : f32
    %395 = vector.broadcast %cst_122 : f32 to vector<32x1xf32>
    %396 = arith.cmpf ole, %371, %395 : vector<32x1xf32>
    %cst_123 = arith.constant 1.500000e+01 : f32
    %397 = vector.broadcast %cst_123 : f32 to vector<32x1xf32>
    %398 = arith.cmpf ogt, %394, %397 : vector<32x1xf32>
    %399 = arith.andi %396, %398 : vector<32x1xi1>
    %cst_124 = arith.constant 3.000000e+01 : f32
    %400 = vector.broadcast %cst_124 : f32 to vector<32x1xf32>
    %401 = arith.cmpf ole, %371, %400 : vector<32x1xf32>
    %cst_125 = arith.constant 3.000000e+01 : f32
    %402 = vector.broadcast %cst_125 : f32 to vector<32x1xf32>
    %403 = arith.cmpf ogt, %394, %402 : vector<32x1xf32>
    %404 = arith.andi %401, %403 : vector<32x1xi1>
    %405 = arith.select %399, %387, %382 : vector<32x1xi1>, vector<32x1xf32>
    %406 = arith.select %404, %387, %383 : vector<32x1xi1>, vector<32x1xf32>
    %cst_126 = arith.constant 0x7F800000 : f32
    %407 = vector.broadcast %cst_126 : f32 to vector<32x32xf32>
    %408 = arith.select %389, %407, %385 : vector<32x32xi1>, vector<32x32xf32>
    %c17_i32 = arith.constant 17 : i32
    %cst_127 = arith.constant dense<0x7F800000> : vector<32xf32>
    %409 = vector.multi_reduction <minimumf>, %408, %cst_127 [1] : vector<32x32xf32> to vector<32xf32>
    %410 = vector.shape_cast %409 : vector<32xf32> to vector<32x1xf32>
    %411 = vector.broadcast %410 : vector<32x1xf32> to vector<32x32xf32>
    %412 = arith.cmpf oeq, %408, %411 : vector<32x32xf32>
    %413 = arith.extui %412 : vector<32x32xi1> to vector<32x32xi32>
    %414 = arith.sitofp %413 : vector<32x32xi32> to vector<32x32xf32>
    %cst_128 = arith.constant dense<0.000000e+00> : vector<32xf32>
    %415 = vector.multi_reduction <add>, %414, %cst_128 [1] : vector<32x32xf32> to vector<32xf32>
    %416 = vector.shape_cast %415 : vector<32xf32> to vector<32x1xf32>
    %417 = arith.addf %394, %416 : vector<32x1xf32>
    %cst_129 = arith.constant 1.500000e+01 : f32
    %418 = vector.broadcast %cst_129 : f32 to vector<32x1xf32>
    %419 = arith.cmpf ole, %394, %418 : vector<32x1xf32>
    %cst_130 = arith.constant 1.500000e+01 : f32
    %420 = vector.broadcast %cst_130 : f32 to vector<32x1xf32>
    %421 = arith.cmpf ogt, %417, %420 : vector<32x1xf32>
    %422 = arith.andi %419, %421 : vector<32x1xi1>
    %cst_131 = arith.constant 3.000000e+01 : f32
    %423 = vector.broadcast %cst_131 : f32 to vector<32x1xf32>
    %424 = arith.cmpf ole, %394, %423 : vector<32x1xf32>
    %cst_132 = arith.constant 3.000000e+01 : f32
    %425 = vector.broadcast %cst_132 : f32 to vector<32x1xf32>
    %426 = arith.cmpf ogt, %417, %425 : vector<32x1xf32>
    %427 = arith.andi %424, %426 : vector<32x1xi1>
    %428 = arith.select %422, %410, %405 : vector<32x1xi1>, vector<32x1xf32>
    %429 = arith.select %427, %410, %406 : vector<32x1xi1>, vector<32x1xf32>
    %cst_133 = arith.constant 0x7F800000 : f32
    %430 = vector.broadcast %cst_133 : f32 to vector<32x32xf32>
    %431 = arith.select %412, %430, %408 : vector<32x32xi1>, vector<32x32xf32>
    %c18_i32 = arith.constant 18 : i32
    %cst_134 = arith.constant dense<0x7F800000> : vector<32xf32>
    %432 = vector.multi_reduction <minimumf>, %431, %cst_134 [1] : vector<32x32xf32> to vector<32xf32>
    %433 = vector.shape_cast %432 : vector<32xf32> to vector<32x1xf32>
    %434 = vector.broadcast %433 : vector<32x1xf32> to vector<32x32xf32>
    %435 = arith.cmpf oeq, %431, %434 : vector<32x32xf32>
    %436 = arith.extui %435 : vector<32x32xi1> to vector<32x32xi32>
    %437 = arith.sitofp %436 : vector<32x32xi32> to vector<32x32xf32>
    %cst_135 = arith.constant dense<0.000000e+00> : vector<32xf32>
    %438 = vector.multi_reduction <add>, %437, %cst_135 [1] : vector<32x32xf32> to vector<32xf32>
    %439 = vector.shape_cast %438 : vector<32xf32> to vector<32x1xf32>
    %440 = arith.addf %417, %439 : vector<32x1xf32>
    %cst_136 = arith.constant 1.500000e+01 : f32
    %441 = vector.broadcast %cst_136 : f32 to vector<32x1xf32>
    %442 = arith.cmpf ole, %417, %441 : vector<32x1xf32>
    %cst_137 = arith.constant 1.500000e+01 : f32
    %443 = vector.broadcast %cst_137 : f32 to vector<32x1xf32>
    %444 = arith.cmpf ogt, %440, %443 : vector<32x1xf32>
    %445 = arith.andi %442, %444 : vector<32x1xi1>
    %cst_138 = arith.constant 3.000000e+01 : f32
    %446 = vector.broadcast %cst_138 : f32 to vector<32x1xf32>
    %447 = arith.cmpf ole, %417, %446 : vector<32x1xf32>
    %cst_139 = arith.constant 3.000000e+01 : f32
    %448 = vector.broadcast %cst_139 : f32 to vector<32x1xf32>
    %449 = arith.cmpf ogt, %440, %448 : vector<32x1xf32>
    %450 = arith.andi %447, %449 : vector<32x1xi1>
    %451 = arith.select %445, %433, %428 : vector<32x1xi1>, vector<32x1xf32>
    %452 = arith.select %450, %433, %429 : vector<32x1xi1>, vector<32x1xf32>
    %cst_140 = arith.constant 0x7F800000 : f32
    %453 = vector.broadcast %cst_140 : f32 to vector<32x32xf32>
    %454 = arith.select %435, %453, %431 : vector<32x32xi1>, vector<32x32xf32>
    %c19_i32 = arith.constant 19 : i32
    %cst_141 = arith.constant dense<0x7F800000> : vector<32xf32>
    %455 = vector.multi_reduction <minimumf>, %454, %cst_141 [1] : vector<32x32xf32> to vector<32xf32>
    %456 = vector.shape_cast %455 : vector<32xf32> to vector<32x1xf32>
    %457 = vector.broadcast %456 : vector<32x1xf32> to vector<32x32xf32>
    %458 = arith.cmpf oeq, %454, %457 : vector<32x32xf32>
    %459 = arith.extui %458 : vector<32x32xi1> to vector<32x32xi32>
    %460 = arith.sitofp %459 : vector<32x32xi32> to vector<32x32xf32>
    %cst_142 = arith.constant dense<0.000000e+00> : vector<32xf32>
    %461 = vector.multi_reduction <add>, %460, %cst_142 [1] : vector<32x32xf32> to vector<32xf32>
    %462 = vector.shape_cast %461 : vector<32xf32> to vector<32x1xf32>
    %463 = arith.addf %440, %462 : vector<32x1xf32>
    %cst_143 = arith.constant 1.500000e+01 : f32
    %464 = vector.broadcast %cst_143 : f32 to vector<32x1xf32>
    %465 = arith.cmpf ole, %440, %464 : vector<32x1xf32>
    %cst_144 = arith.constant 1.500000e+01 : f32
    %466 = vector.broadcast %cst_144 : f32 to vector<32x1xf32>
    %467 = arith.cmpf ogt, %463, %466 : vector<32x1xf32>
    %468 = arith.andi %465, %467 : vector<32x1xi1>
    %cst_145 = arith.constant 3.000000e+01 : f32
    %469 = vector.broadcast %cst_145 : f32 to vector<32x1xf32>
    %470 = arith.cmpf ole, %440, %469 : vector<32x1xf32>
    %cst_146 = arith.constant 3.000000e+01 : f32
    %471 = vector.broadcast %cst_146 : f32 to vector<32x1xf32>
    %472 = arith.cmpf ogt, %463, %471 : vector<32x1xf32>
    %473 = arith.andi %470, %472 : vector<32x1xi1>
    %474 = arith.select %468, %456, %451 : vector<32x1xi1>, vector<32x1xf32>
    %475 = arith.select %473, %456, %452 : vector<32x1xi1>, vector<32x1xf32>
    %cst_147 = arith.constant 0x7F800000 : f32
    %476 = vector.broadcast %cst_147 : f32 to vector<32x32xf32>
    %477 = arith.select %458, %476, %454 : vector<32x32xi1>, vector<32x32xf32>
    %c20_i32 = arith.constant 20 : i32
    %cst_148 = arith.constant dense<0x7F800000> : vector<32xf32>
    %478 = vector.multi_reduction <minimumf>, %477, %cst_148 [1] : vector<32x32xf32> to vector<32xf32>
    %479 = vector.shape_cast %478 : vector<32xf32> to vector<32x1xf32>
    %480 = vector.broadcast %479 : vector<32x1xf32> to vector<32x32xf32>
    %481 = arith.cmpf oeq, %477, %480 : vector<32x32xf32>
    %482 = arith.extui %481 : vector<32x32xi1> to vector<32x32xi32>
    %483 = arith.sitofp %482 : vector<32x32xi32> to vector<32x32xf32>
    %cst_149 = arith.constant dense<0.000000e+00> : vector<32xf32>
    %484 = vector.multi_reduction <add>, %483, %cst_149 [1] : vector<32x32xf32> to vector<32xf32>
    %485 = vector.shape_cast %484 : vector<32xf32> to vector<32x1xf32>
    %486 = arith.addf %463, %485 : vector<32x1xf32>
    %cst_150 = arith.constant 1.500000e+01 : f32
    %487 = vector.broadcast %cst_150 : f32 to vector<32x1xf32>
    %488 = arith.cmpf ole, %463, %487 : vector<32x1xf32>
    %cst_151 = arith.constant 1.500000e+01 : f32
    %489 = vector.broadcast %cst_151 : f32 to vector<32x1xf32>
    %490 = arith.cmpf ogt, %486, %489 : vector<32x1xf32>
    %491 = arith.andi %488, %490 : vector<32x1xi1>
    %cst_152 = arith.constant 3.000000e+01 : f32
    %492 = vector.broadcast %cst_152 : f32 to vector<32x1xf32>
    %493 = arith.cmpf ole, %463, %492 : vector<32x1xf32>
    %cst_153 = arith.constant 3.000000e+01 : f32
    %494 = vector.broadcast %cst_153 : f32 to vector<32x1xf32>
    %495 = arith.cmpf ogt, %486, %494 : vector<32x1xf32>
    %496 = arith.andi %493, %495 : vector<32x1xi1>
    %497 = arith.select %491, %479, %474 : vector<32x1xi1>, vector<32x1xf32>
    %498 = arith.select %496, %479, %475 : vector<32x1xi1>, vector<32x1xf32>
    %cst_154 = arith.constant 0x7F800000 : f32
    %499 = vector.broadcast %cst_154 : f32 to vector<32x32xf32>
    %500 = arith.select %481, %499, %477 : vector<32x32xi1>, vector<32x32xf32>
    %c21_i32 = arith.constant 21 : i32
    %cst_155 = arith.constant dense<0x7F800000> : vector<32xf32>
    %501 = vector.multi_reduction <minimumf>, %500, %cst_155 [1] : vector<32x32xf32> to vector<32xf32>
    %502 = vector.shape_cast %501 : vector<32xf32> to vector<32x1xf32>
    %503 = vector.broadcast %502 : vector<32x1xf32> to vector<32x32xf32>
    %504 = arith.cmpf oeq, %500, %503 : vector<32x32xf32>
    %505 = arith.extui %504 : vector<32x32xi1> to vector<32x32xi32>
    %506 = arith.sitofp %505 : vector<32x32xi32> to vector<32x32xf32>
    %cst_156 = arith.constant dense<0.000000e+00> : vector<32xf32>
    %507 = vector.multi_reduction <add>, %506, %cst_156 [1] : vector<32x32xf32> to vector<32xf32>
    %508 = vector.shape_cast %507 : vector<32xf32> to vector<32x1xf32>
    %509 = arith.addf %486, %508 : vector<32x1xf32>
    %cst_157 = arith.constant 1.500000e+01 : f32
    %510 = vector.broadcast %cst_157 : f32 to vector<32x1xf32>
    %511 = arith.cmpf ole, %486, %510 : vector<32x1xf32>
    %cst_158 = arith.constant 1.500000e+01 : f32
    %512 = vector.broadcast %cst_158 : f32 to vector<32x1xf32>
    %513 = arith.cmpf ogt, %509, %512 : vector<32x1xf32>
    %514 = arith.andi %511, %513 : vector<32x1xi1>
    %cst_159 = arith.constant 3.000000e+01 : f32
    %515 = vector.broadcast %cst_159 : f32 to vector<32x1xf32>
    %516 = arith.cmpf ole, %486, %515 : vector<32x1xf32>
    %cst_160 = arith.constant 3.000000e+01 : f32
    %517 = vector.broadcast %cst_160 : f32 to vector<32x1xf32>
    %518 = arith.cmpf ogt, %509, %517 : vector<32x1xf32>
    %519 = arith.andi %516, %518 : vector<32x1xi1>
    %520 = arith.select %514, %502, %497 : vector<32x1xi1>, vector<32x1xf32>
    %521 = arith.select %519, %502, %498 : vector<32x1xi1>, vector<32x1xf32>
    %cst_161 = arith.constant 0x7F800000 : f32
    %522 = vector.broadcast %cst_161 : f32 to vector<32x32xf32>
    %523 = arith.select %504, %522, %500 : vector<32x32xi1>, vector<32x32xf32>
    %c22_i32 = arith.constant 22 : i32
    %cst_162 = arith.constant dense<0x7F800000> : vector<32xf32>
    %524 = vector.multi_reduction <minimumf>, %523, %cst_162 [1] : vector<32x32xf32> to vector<32xf32>
    %525 = vector.shape_cast %524 : vector<32xf32> to vector<32x1xf32>
    %526 = vector.broadcast %525 : vector<32x1xf32> to vector<32x32xf32>
    %527 = arith.cmpf oeq, %523, %526 : vector<32x32xf32>
    %528 = arith.extui %527 : vector<32x32xi1> to vector<32x32xi32>
    %529 = arith.sitofp %528 : vector<32x32xi32> to vector<32x32xf32>
    %cst_163 = arith.constant dense<0.000000e+00> : vector<32xf32>
    %530 = vector.multi_reduction <add>, %529, %cst_163 [1] : vector<32x32xf32> to vector<32xf32>
    %531 = vector.shape_cast %530 : vector<32xf32> to vector<32x1xf32>
    %532 = arith.addf %509, %531 : vector<32x1xf32>
    %cst_164 = arith.constant 1.500000e+01 : f32
    %533 = vector.broadcast %cst_164 : f32 to vector<32x1xf32>
    %534 = arith.cmpf ole, %509, %533 : vector<32x1xf32>
    %cst_165 = arith.constant 1.500000e+01 : f32
    %535 = vector.broadcast %cst_165 : f32 to vector<32x1xf32>
    %536 = arith.cmpf ogt, %532, %535 : vector<32x1xf32>
    %537 = arith.andi %534, %536 : vector<32x1xi1>
    %cst_166 = arith.constant 3.000000e+01 : f32
    %538 = vector.broadcast %cst_166 : f32 to vector<32x1xf32>
    %539 = arith.cmpf ole, %509, %538 : vector<32x1xf32>
    %cst_167 = arith.constant 3.000000e+01 : f32
    %540 = vector.broadcast %cst_167 : f32 to vector<32x1xf32>
    %541 = arith.cmpf ogt, %532, %540 : vector<32x1xf32>
    %542 = arith.andi %539, %541 : vector<32x1xi1>
    %543 = arith.select %537, %525, %520 : vector<32x1xi1>, vector<32x1xf32>
    %544 = arith.select %542, %525, %521 : vector<32x1xi1>, vector<32x1xf32>
    %cst_168 = arith.constant 0x7F800000 : f32
    %545 = vector.broadcast %cst_168 : f32 to vector<32x32xf32>
    %546 = arith.select %527, %545, %523 : vector<32x32xi1>, vector<32x32xf32>
    %c23_i32 = arith.constant 23 : i32
    %cst_169 = arith.constant dense<0x7F800000> : vector<32xf32>
    %547 = vector.multi_reduction <minimumf>, %546, %cst_169 [1] : vector<32x32xf32> to vector<32xf32>
    %548 = vector.shape_cast %547 : vector<32xf32> to vector<32x1xf32>
    %549 = vector.broadcast %548 : vector<32x1xf32> to vector<32x32xf32>
    %550 = arith.cmpf oeq, %546, %549 : vector<32x32xf32>
    %551 = arith.extui %550 : vector<32x32xi1> to vector<32x32xi32>
    %552 = arith.sitofp %551 : vector<32x32xi32> to vector<32x32xf32>
    %cst_170 = arith.constant dense<0.000000e+00> : vector<32xf32>
    %553 = vector.multi_reduction <add>, %552, %cst_170 [1] : vector<32x32xf32> to vector<32xf32>
    %554 = vector.shape_cast %553 : vector<32xf32> to vector<32x1xf32>
    %555 = arith.addf %532, %554 : vector<32x1xf32>
    %cst_171 = arith.constant 1.500000e+01 : f32
    %556 = vector.broadcast %cst_171 : f32 to vector<32x1xf32>
    %557 = arith.cmpf ole, %532, %556 : vector<32x1xf32>
    %cst_172 = arith.constant 1.500000e+01 : f32
    %558 = vector.broadcast %cst_172 : f32 to vector<32x1xf32>
    %559 = arith.cmpf ogt, %555, %558 : vector<32x1xf32>
    %560 = arith.andi %557, %559 : vector<32x1xi1>
    %cst_173 = arith.constant 3.000000e+01 : f32
    %561 = vector.broadcast %cst_173 : f32 to vector<32x1xf32>
    %562 = arith.cmpf ole, %532, %561 : vector<32x1xf32>
    %cst_174 = arith.constant 3.000000e+01 : f32
    %563 = vector.broadcast %cst_174 : f32 to vector<32x1xf32>
    %564 = arith.cmpf ogt, %555, %563 : vector<32x1xf32>
    %565 = arith.andi %562, %564 : vector<32x1xi1>
    %566 = arith.select %560, %548, %543 : vector<32x1xi1>, vector<32x1xf32>
    %567 = arith.select %565, %548, %544 : vector<32x1xi1>, vector<32x1xf32>
    %cst_175 = arith.constant 0x7F800000 : f32
    %568 = vector.broadcast %cst_175 : f32 to vector<32x32xf32>
    %569 = arith.select %550, %568, %546 : vector<32x32xi1>, vector<32x32xf32>
    %c24_i32 = arith.constant 24 : i32
    %cst_176 = arith.constant dense<0x7F800000> : vector<32xf32>
    %570 = vector.multi_reduction <minimumf>, %569, %cst_176 [1] : vector<32x32xf32> to vector<32xf32>
    %571 = vector.shape_cast %570 : vector<32xf32> to vector<32x1xf32>
    %572 = vector.broadcast %571 : vector<32x1xf32> to vector<32x32xf32>
    %573 = arith.cmpf oeq, %569, %572 : vector<32x32xf32>
    %574 = arith.extui %573 : vector<32x32xi1> to vector<32x32xi32>
    %575 = arith.sitofp %574 : vector<32x32xi32> to vector<32x32xf32>
    %cst_177 = arith.constant dense<0.000000e+00> : vector<32xf32>
    %576 = vector.multi_reduction <add>, %575, %cst_177 [1] : vector<32x32xf32> to vector<32xf32>
    %577 = vector.shape_cast %576 : vector<32xf32> to vector<32x1xf32>
    %578 = arith.addf %555, %577 : vector<32x1xf32>
    %cst_178 = arith.constant 1.500000e+01 : f32
    %579 = vector.broadcast %cst_178 : f32 to vector<32x1xf32>
    %580 = arith.cmpf ole, %555, %579 : vector<32x1xf32>
    %cst_179 = arith.constant 1.500000e+01 : f32
    %581 = vector.broadcast %cst_179 : f32 to vector<32x1xf32>
    %582 = arith.cmpf ogt, %578, %581 : vector<32x1xf32>
    %583 = arith.andi %580, %582 : vector<32x1xi1>
    %cst_180 = arith.constant 3.000000e+01 : f32
    %584 = vector.broadcast %cst_180 : f32 to vector<32x1xf32>
    %585 = arith.cmpf ole, %555, %584 : vector<32x1xf32>
    %cst_181 = arith.constant 3.000000e+01 : f32
    %586 = vector.broadcast %cst_181 : f32 to vector<32x1xf32>
    %587 = arith.cmpf ogt, %578, %586 : vector<32x1xf32>
    %588 = arith.andi %585, %587 : vector<32x1xi1>
    %589 = arith.select %583, %571, %566 : vector<32x1xi1>, vector<32x1xf32>
    %590 = arith.select %588, %571, %567 : vector<32x1xi1>, vector<32x1xf32>
    %cst_182 = arith.constant 0x7F800000 : f32
    %591 = vector.broadcast %cst_182 : f32 to vector<32x32xf32>
    %592 = arith.select %573, %591, %569 : vector<32x32xi1>, vector<32x32xf32>
    %c25_i32 = arith.constant 25 : i32
    %cst_183 = arith.constant dense<0x7F800000> : vector<32xf32>
    %593 = vector.multi_reduction <minimumf>, %592, %cst_183 [1] : vector<32x32xf32> to vector<32xf32>
    %594 = vector.shape_cast %593 : vector<32xf32> to vector<32x1xf32>
    %595 = vector.broadcast %594 : vector<32x1xf32> to vector<32x32xf32>
    %596 = arith.cmpf oeq, %592, %595 : vector<32x32xf32>
    %597 = arith.extui %596 : vector<32x32xi1> to vector<32x32xi32>
    %598 = arith.sitofp %597 : vector<32x32xi32> to vector<32x32xf32>
    %cst_184 = arith.constant dense<0.000000e+00> : vector<32xf32>
    %599 = vector.multi_reduction <add>, %598, %cst_184 [1] : vector<32x32xf32> to vector<32xf32>
    %600 = vector.shape_cast %599 : vector<32xf32> to vector<32x1xf32>
    %601 = arith.addf %578, %600 : vector<32x1xf32>
    %cst_185 = arith.constant 1.500000e+01 : f32
    %602 = vector.broadcast %cst_185 : f32 to vector<32x1xf32>
    %603 = arith.cmpf ole, %578, %602 : vector<32x1xf32>
    %cst_186 = arith.constant 1.500000e+01 : f32
    %604 = vector.broadcast %cst_186 : f32 to vector<32x1xf32>
    %605 = arith.cmpf ogt, %601, %604 : vector<32x1xf32>
    %606 = arith.andi %603, %605 : vector<32x1xi1>
    %cst_187 = arith.constant 3.000000e+01 : f32
    %607 = vector.broadcast %cst_187 : f32 to vector<32x1xf32>
    %608 = arith.cmpf ole, %578, %607 : vector<32x1xf32>
    %cst_188 = arith.constant 3.000000e+01 : f32
    %609 = vector.broadcast %cst_188 : f32 to vector<32x1xf32>
    %610 = arith.cmpf ogt, %601, %609 : vector<32x1xf32>
    %611 = arith.andi %608, %610 : vector<32x1xi1>
    %612 = arith.select %606, %594, %589 : vector<32x1xi1>, vector<32x1xf32>
    %613 = arith.select %611, %594, %590 : vector<32x1xi1>, vector<32x1xf32>
    %cst_189 = arith.constant 0x7F800000 : f32
    %614 = vector.broadcast %cst_189 : f32 to vector<32x32xf32>
    %615 = arith.select %596, %614, %592 : vector<32x32xi1>, vector<32x32xf32>
    %c26_i32 = arith.constant 26 : i32
    %cst_190 = arith.constant dense<0x7F800000> : vector<32xf32>
    %616 = vector.multi_reduction <minimumf>, %615, %cst_190 [1] : vector<32x32xf32> to vector<32xf32>
    %617 = vector.shape_cast %616 : vector<32xf32> to vector<32x1xf32>
    %618 = vector.broadcast %617 : vector<32x1xf32> to vector<32x32xf32>
    %619 = arith.cmpf oeq, %615, %618 : vector<32x32xf32>
    %620 = arith.extui %619 : vector<32x32xi1> to vector<32x32xi32>
    %621 = arith.sitofp %620 : vector<32x32xi32> to vector<32x32xf32>
    %cst_191 = arith.constant dense<0.000000e+00> : vector<32xf32>
    %622 = vector.multi_reduction <add>, %621, %cst_191 [1] : vector<32x32xf32> to vector<32xf32>
    %623 = vector.shape_cast %622 : vector<32xf32> to vector<32x1xf32>
    %624 = arith.addf %601, %623 : vector<32x1xf32>
    %cst_192 = arith.constant 1.500000e+01 : f32
    %625 = vector.broadcast %cst_192 : f32 to vector<32x1xf32>
    %626 = arith.cmpf ole, %601, %625 : vector<32x1xf32>
    %cst_193 = arith.constant 1.500000e+01 : f32
    %627 = vector.broadcast %cst_193 : f32 to vector<32x1xf32>
    %628 = arith.cmpf ogt, %624, %627 : vector<32x1xf32>
    %629 = arith.andi %626, %628 : vector<32x1xi1>
    %cst_194 = arith.constant 3.000000e+01 : f32
    %630 = vector.broadcast %cst_194 : f32 to vector<32x1xf32>
    %631 = arith.cmpf ole, %601, %630 : vector<32x1xf32>
    %cst_195 = arith.constant 3.000000e+01 : f32
    %632 = vector.broadcast %cst_195 : f32 to vector<32x1xf32>
    %633 = arith.cmpf ogt, %624, %632 : vector<32x1xf32>
    %634 = arith.andi %631, %633 : vector<32x1xi1>
    %635 = arith.select %629, %617, %612 : vector<32x1xi1>, vector<32x1xf32>
    %636 = arith.select %634, %617, %613 : vector<32x1xi1>, vector<32x1xf32>
    %cst_196 = arith.constant 0x7F800000 : f32
    %637 = vector.broadcast %cst_196 : f32 to vector<32x32xf32>
    %638 = arith.select %619, %637, %615 : vector<32x32xi1>, vector<32x32xf32>
    %c27_i32 = arith.constant 27 : i32
    %cst_197 = arith.constant dense<0x7F800000> : vector<32xf32>
    %639 = vector.multi_reduction <minimumf>, %638, %cst_197 [1] : vector<32x32xf32> to vector<32xf32>
    %640 = vector.shape_cast %639 : vector<32xf32> to vector<32x1xf32>
    %641 = vector.broadcast %640 : vector<32x1xf32> to vector<32x32xf32>
    %642 = arith.cmpf oeq, %638, %641 : vector<32x32xf32>
    %643 = arith.extui %642 : vector<32x32xi1> to vector<32x32xi32>
    %644 = arith.sitofp %643 : vector<32x32xi32> to vector<32x32xf32>
    %cst_198 = arith.constant dense<0.000000e+00> : vector<32xf32>
    %645 = vector.multi_reduction <add>, %644, %cst_198 [1] : vector<32x32xf32> to vector<32xf32>
    %646 = vector.shape_cast %645 : vector<32xf32> to vector<32x1xf32>
    %647 = arith.addf %624, %646 : vector<32x1xf32>
    %cst_199 = arith.constant 1.500000e+01 : f32
    %648 = vector.broadcast %cst_199 : f32 to vector<32x1xf32>
    %649 = arith.cmpf ole, %624, %648 : vector<32x1xf32>
    %cst_200 = arith.constant 1.500000e+01 : f32
    %650 = vector.broadcast %cst_200 : f32 to vector<32x1xf32>
    %651 = arith.cmpf ogt, %647, %650 : vector<32x1xf32>
    %652 = arith.andi %649, %651 : vector<32x1xi1>
    %cst_201 = arith.constant 3.000000e+01 : f32
    %653 = vector.broadcast %cst_201 : f32 to vector<32x1xf32>
    %654 = arith.cmpf ole, %624, %653 : vector<32x1xf32>
    %cst_202 = arith.constant 3.000000e+01 : f32
    %655 = vector.broadcast %cst_202 : f32 to vector<32x1xf32>
    %656 = arith.cmpf ogt, %647, %655 : vector<32x1xf32>
    %657 = arith.andi %654, %656 : vector<32x1xi1>
    %658 = arith.select %652, %640, %635 : vector<32x1xi1>, vector<32x1xf32>
    %659 = arith.select %657, %640, %636 : vector<32x1xi1>, vector<32x1xf32>
    %cst_203 = arith.constant 0x7F800000 : f32
    %660 = vector.broadcast %cst_203 : f32 to vector<32x32xf32>
    %661 = arith.select %642, %660, %638 : vector<32x32xi1>, vector<32x32xf32>
    %c28_i32 = arith.constant 28 : i32
    %cst_204 = arith.constant dense<0x7F800000> : vector<32xf32>
    %662 = vector.multi_reduction <minimumf>, %661, %cst_204 [1] : vector<32x32xf32> to vector<32xf32>
    %663 = vector.shape_cast %662 : vector<32xf32> to vector<32x1xf32>
    %664 = vector.broadcast %663 : vector<32x1xf32> to vector<32x32xf32>
    %665 = arith.cmpf oeq, %661, %664 : vector<32x32xf32>
    %666 = arith.extui %665 : vector<32x32xi1> to vector<32x32xi32>
    %667 = arith.sitofp %666 : vector<32x32xi32> to vector<32x32xf32>
    %cst_205 = arith.constant dense<0.000000e+00> : vector<32xf32>
    %668 = vector.multi_reduction <add>, %667, %cst_205 [1] : vector<32x32xf32> to vector<32xf32>
    %669 = vector.shape_cast %668 : vector<32xf32> to vector<32x1xf32>
    %670 = arith.addf %647, %669 : vector<32x1xf32>
    %cst_206 = arith.constant 1.500000e+01 : f32
    %671 = vector.broadcast %cst_206 : f32 to vector<32x1xf32>
    %672 = arith.cmpf ole, %647, %671 : vector<32x1xf32>
    %cst_207 = arith.constant 1.500000e+01 : f32
    %673 = vector.broadcast %cst_207 : f32 to vector<32x1xf32>
    %674 = arith.cmpf ogt, %670, %673 : vector<32x1xf32>
    %675 = arith.andi %672, %674 : vector<32x1xi1>
    %cst_208 = arith.constant 3.000000e+01 : f32
    %676 = vector.broadcast %cst_208 : f32 to vector<32x1xf32>
    %677 = arith.cmpf ole, %647, %676 : vector<32x1xf32>
    %cst_209 = arith.constant 3.000000e+01 : f32
    %678 = vector.broadcast %cst_209 : f32 to vector<32x1xf32>
    %679 = arith.cmpf ogt, %670, %678 : vector<32x1xf32>
    %680 = arith.andi %677, %679 : vector<32x1xi1>
    %681 = arith.select %675, %663, %658 : vector<32x1xi1>, vector<32x1xf32>
    %682 = arith.select %680, %663, %659 : vector<32x1xi1>, vector<32x1xf32>
    %cst_210 = arith.constant 0x7F800000 : f32
    %683 = vector.broadcast %cst_210 : f32 to vector<32x32xf32>
    %684 = arith.select %665, %683, %661 : vector<32x32xi1>, vector<32x32xf32>
    %c29_i32 = arith.constant 29 : i32
    %cst_211 = arith.constant dense<0x7F800000> : vector<32xf32>
    %685 = vector.multi_reduction <minimumf>, %684, %cst_211 [1] : vector<32x32xf32> to vector<32xf32>
    %686 = vector.shape_cast %685 : vector<32xf32> to vector<32x1xf32>
    %687 = vector.broadcast %686 : vector<32x1xf32> to vector<32x32xf32>
    %688 = arith.cmpf oeq, %684, %687 : vector<32x32xf32>
    %689 = arith.extui %688 : vector<32x32xi1> to vector<32x32xi32>
    %690 = arith.sitofp %689 : vector<32x32xi32> to vector<32x32xf32>
    %cst_212 = arith.constant dense<0.000000e+00> : vector<32xf32>
    %691 = vector.multi_reduction <add>, %690, %cst_212 [1] : vector<32x32xf32> to vector<32xf32>
    %692 = vector.shape_cast %691 : vector<32xf32> to vector<32x1xf32>
    %693 = arith.addf %670, %692 : vector<32x1xf32>
    %cst_213 = arith.constant 1.500000e+01 : f32
    %694 = vector.broadcast %cst_213 : f32 to vector<32x1xf32>
    %695 = arith.cmpf ole, %670, %694 : vector<32x1xf32>
    %cst_214 = arith.constant 1.500000e+01 : f32
    %696 = vector.broadcast %cst_214 : f32 to vector<32x1xf32>
    %697 = arith.cmpf ogt, %693, %696 : vector<32x1xf32>
    %698 = arith.andi %695, %697 : vector<32x1xi1>
    %cst_215 = arith.constant 3.000000e+01 : f32
    %699 = vector.broadcast %cst_215 : f32 to vector<32x1xf32>
    %700 = arith.cmpf ole, %670, %699 : vector<32x1xf32>
    %cst_216 = arith.constant 3.000000e+01 : f32
    %701 = vector.broadcast %cst_216 : f32 to vector<32x1xf32>
    %702 = arith.cmpf ogt, %693, %701 : vector<32x1xf32>
    %703 = arith.andi %700, %702 : vector<32x1xi1>
    %704 = arith.select %698, %686, %681 : vector<32x1xi1>, vector<32x1xf32>
    %705 = arith.select %703, %686, %682 : vector<32x1xi1>, vector<32x1xf32>
    %cst_217 = arith.constant 0x7F800000 : f32
    %706 = vector.broadcast %cst_217 : f32 to vector<32x32xf32>
    %707 = arith.select %688, %706, %684 : vector<32x32xi1>, vector<32x32xf32>
    %c30_i32 = arith.constant 30 : i32
    %cst_218 = arith.constant dense<0x7F800000> : vector<32xf32>
    %708 = vector.multi_reduction <minimumf>, %707, %cst_218 [1] : vector<32x32xf32> to vector<32xf32>
    %709 = vector.shape_cast %708 : vector<32xf32> to vector<32x1xf32>
    %710 = vector.broadcast %709 : vector<32x1xf32> to vector<32x32xf32>
    %711 = arith.cmpf oeq, %707, %710 : vector<32x32xf32>
    %712 = arith.extui %711 : vector<32x32xi1> to vector<32x32xi32>
    %713 = arith.sitofp %712 : vector<32x32xi32> to vector<32x32xf32>
    %cst_219 = arith.constant dense<0.000000e+00> : vector<32xf32>
    %714 = vector.multi_reduction <add>, %713, %cst_219 [1] : vector<32x32xf32> to vector<32xf32>
    %715 = vector.shape_cast %714 : vector<32xf32> to vector<32x1xf32>
    %716 = arith.addf %693, %715 : vector<32x1xf32>
    %cst_220 = arith.constant 1.500000e+01 : f32
    %717 = vector.broadcast %cst_220 : f32 to vector<32x1xf32>
    %718 = arith.cmpf ole, %693, %717 : vector<32x1xf32>
    %cst_221 = arith.constant 1.500000e+01 : f32
    %719 = vector.broadcast %cst_221 : f32 to vector<32x1xf32>
    %720 = arith.cmpf ogt, %716, %719 : vector<32x1xf32>
    %721 = arith.andi %718, %720 : vector<32x1xi1>
    %cst_222 = arith.constant 3.000000e+01 : f32
    %722 = vector.broadcast %cst_222 : f32 to vector<32x1xf32>
    %723 = arith.cmpf ole, %693, %722 : vector<32x1xf32>
    %cst_223 = arith.constant 3.000000e+01 : f32
    %724 = vector.broadcast %cst_223 : f32 to vector<32x1xf32>
    %725 = arith.cmpf ogt, %716, %724 : vector<32x1xf32>
    %726 = arith.andi %723, %725 : vector<32x1xi1>
    %727 = arith.select %721, %709, %704 : vector<32x1xi1>, vector<32x1xf32>
    %728 = arith.select %726, %709, %705 : vector<32x1xi1>, vector<32x1xf32>
    %cst_224 = arith.constant 0x7F800000 : f32
    %729 = vector.broadcast %cst_224 : f32 to vector<32x32xf32>
    %730 = arith.select %711, %729, %707 : vector<32x32xi1>, vector<32x32xf32>
    %731 = math.sqrt %727 : vector<32x1xf32>
    %732 = math.sqrt %728 : vector<32x1xf32>
    %cst_225 = arith.constant 3.000000e-01 : f32
    %733 = vector.broadcast %cst_225 : f32 to vector<32x1xf32>
    %734 = arith.addf %733, %731 : vector<32x1xf32>
    %735 = arith.subf %734, %732 : vector<32x1xf32>
    %cst_226 = arith.constant 0.000000e+00 : f32
    %736 = vector.broadcast %cst_226 : f32 to vector<32x1xf32>
    %737 = arith.maximumf %736, %735 : vector<32x1xf32>
    %c32_i32 = arith.constant 32 : i32
    %738 = arith.muli %arg0, %c32_i32 : i32
    %739 = tpu.iota {dimensions = array<i32: 0>} : vector<32x1xi32>
    %740 = vector.broadcast %738 : i32 to vector<32x1xi32>
    %741 = arith.addi %740, %739 : vector<32x1xi32>
    %c32_i32_227 = arith.constant 32 : i32
    %742 = vector.broadcast %c32_i32_227 : i32 to vector<32x1xi32>
    %743 = arith.cmpi slt, %741, %742 : vector<32x1xi32>
    %cst_228 = arith.constant 0.000000e+00 : f32
    %744 = vector.broadcast %cst_228 : f32 to vector<32x1xf32>
    %745 = arith.select %743, %737, %744 : vector<32x1xi1>, vector<32x1xf32>
    %746 = vector.shape_cast %745 : vector<32x1xf32> to vector<1x32x1xf32>
    %cst_229 = arith.constant dense<0.000000e+00> : vector<1xf32>
    %747 = vector.multi_reduction <add>, %746, %cst_229 [1, 2] : vector<1x32x1xf32> to vector<1xf32>
    %748 = vector.shape_cast %747 : vector<1xf32> to vector<1x1x1xf32>
    %749 = vector.extract %748[0, 0, 0] : f32 from vector<1x1x1xf32>
    %750 = tpu.iota {dimensions = array<i32: 0>} : vector<8x128xi32>
    %751 = tpu.iota {dimensions = array<i32: 1>} : vector<8x128xi32>
    %c0_i32_230 = arith.constant 0 : i32
    %752 = vector.broadcast %c0_i32_230 : i32 to vector<8x128xi32>
    %753 = arith.cmpi eq, %750, %752 : vector<8x128xi32>
    %c0_i32_231 = arith.constant 0 : i32
    %754 = vector.broadcast %c0_i32_231 : i32 to vector<8x128xi32>
    %755 = arith.cmpi eq, %751, %754 : vector<8x128xi32>
    %756 = arith.andi %753, %755 : vector<8x128xi1>
    %cst_232 = arith.constant 0.000000e+00 : f32
    %757 = vector.broadcast %749 : f32 to vector<8x128xf32>
    %758 = vector.broadcast %cst_232 : f32 to vector<8x128xf32>
    %759 = arith.select %756, %757, %758 : vector<8x128xi1>, vector<8x128xf32>
    %c0_233 = arith.constant 0 : index
    %c0_234 = arith.constant 0 : index
    %760 = vector.load %arg3[%c0_233, %c0_234] : memref<8x128xf32, #tpu.memory_space<vmem>>, vector<8x128xf32>
    tpu.vector_store %arg3[%c0_233, %c0_234], %759 {strides = array<i32>} : memref<8x128xf32, #tpu.memory_space<vmem>>, vector<8x128xf32>,
    return
  }
  func.func @transform_0(%arg0: i32) -> (i32, i32) {
    %c0_i32 = arith.constant 0 : i32
    %c0_i32_0 = arith.constant 0 : i32
    return %arg0, %c0_i32 : i32, i32
  }
  func.func @transform_1(%arg0: i32) -> (i32, i32) {
    %c0_i32 = arith.constant 0 : i32
    %c0_i32_0 = arith.constant 0 : i32
    %c0_i32_1 = arith.constant 0 : i32
    return %c0_i32, %c0_i32_0 : i32, i32
  }
  func.func @transform_2(%arg0: i32) -> (i32, i32) {
    %c0_i32 = arith.constant 0 : i32
    %c0_i32_0 = arith.constant 0 : i32
    return %arg0, %c0_i32 : i32, i32
  }
}

</mosaic_0001>

<llo_original>
// kernel: tpu_custom_call.1
$region0: #{tpu_custom_call.1}
  #allocation0 [shape = 'u32[]', space=smem, size = 0x4, offset = 0x4, fixed_abs, tag = 'smem constant byte address 0x4 - core index']
  #allocation1 [shape = 'u32[144,128]{1,0:T(1,128)}', space=vmem, size = 0x12000, scoped, tag = 'internal scratch']
  %s0 = inlined_call_operand.hbm [shape: f32[32,64], index: 0, kind: input, shape index: {}]
  %s1 = inlined_call_operand.hbm [shape: f32[32,64], index: 1, kind: input, shape index: {}]
  %s2 = inlined_call_operand.hbm [shape: f32[8,128], index: 2, kind: output, shape index: {}]
  %s3 = sld [smem:[#allocation0]]
  $region26: #{tpu_custom_call.1} parent=0
    _
  %s5 = ssub.s32 1, %s3
  %s6 = scalar_select 0, %s5, %s3
  $region1: #{tpu_custom_call.1} parent=0
    #allocation2 [shape = 'u8[16384]{0}', space=vmem, size = 0x4000, scoped, tag = 'input window, operand 0, single buffered']
    #allocation3 [shape = 's32[1]{0}', space=sflag, size = 0x4, scoped, tag = 'scoped memory for tpu_custom_call.1']
    #allocation4 [shape = 's32[1]{0}', space=sflag, size = 0x4, scoped, tag = 'scoped memory for tpu_custom_call.1']
    #allocation5 [shape = 'u8[16384]{0}', space=vmem, size = 0x4000, scoped, tag = 'input window, operand 1, single buffered']
    #allocation6 [shape = 's32[1]{0}', space=sflag, size = 0x4, scoped, tag = 'scoped memory for tpu_custom_call.1']
    #allocation7 [shape = 'u8[4096]{0}', space=vmem, size = 0x1000, scoped, tag = 'output window, operand 0, single buffered']
    %7 = vsyncpa [#allocation3], 0
    %8 = vsyncpa [#allocation6], 0
    %9 = vsyncpa [#allocation4], 0
    // Predicated region
    $region2: #{tpu_custom_call.1} parent=1 // pred_check
      _
    $region3: #{tpu_custom_call.1} parent=1 // pred_check_branch
      %11 = sbr.rel (0) target = $region5
    $region4: #{tpu_custom_call.1} parent=1 // pred_region
      %s13 = ssub.s32 512, 512
      %14 = vsyncadd [#allocation3], %s13
      %s15 = sshll.u32 [#allocation2], 4
      %s16 = int_to_ptr.vmem [resolvable:$true] %s15
      %21 = dma.hbm_to_vmem [thread:$0]  %s0, 512, %s16, [#allocation3], 128, 128, 8
    $region5: #{tpu_custom_call.1} parent=1 // pred_fallthru
      _
    // Predicated region
    $region6: #{tpu_custom_call.1} parent=1 // pred_check
      _
    $region7: #{tpu_custom_call.1} parent=1 // pred_check_branch
      %23 = sbr.rel (0) target = $region9
    $region8: #{tpu_custom_call.1} parent=1 // pred_region
      %s25 = ssub.s32 512, 512
      %26 = vsyncadd [#allocation6], %s25
      %s27 = sshll.u32 [#allocation5], 4
      %s28 = int_to_ptr.vmem [resolvable:$true] %s27
      %33 = dma.hbm_to_vmem [thread:$0]  %s1, 512, %s28, [#allocation6], 128, 128, 8
    $region9: #{tpu_custom_call.1} parent=1 // pred_fallthru
      _
    // Predicated region
    $region10: #{tpu_custom_call.1} parent=1 // pred_check
      _
    $region11: #{tpu_custom_call.1} parent=1 // pred_check_branch
      %35 = sbr.rel (0) target = $region13
    $region12: #{tpu_custom_call.1} parent=1 // pred_region
      %36 = dma.done [#allocation3], 512
    $region13: #{tpu_custom_call.1} parent=1 // pred_fallthru
      _
    // Predicated region
    $region14: #{tpu_custom_call.1} parent=1 // pred_check
      _
    $region15: #{tpu_custom_call.1} parent=1 // pred_check_branch
      %38 = sbr.rel (0) target = $region17
    $region16: #{tpu_custom_call.1} parent=1 // pred_region
      %39 = dma.done [#allocation6], 512
    $region17: #{tpu_custom_call.1} parent=1 // pred_fallthru
      _
    %v40 = vld [vmem:[#allocation2] sm:$0xff]
    %v41 = vld [vmem:[#allocation2 + $0x8] sm:$0xff]
    %v42 = vld [vmem:[#allocation2 + $0x10] sm:$0xff]
    %v43 = vld [vmem:[#allocation2 + $0x18] sm:$0xff]
    %v44 = vld [vmem:[#allocation5] sm:$0xff]
    %v45 = vld [vmem:[#allocation5 + $0x8] sm:$0xff]
    %v46 = vld [vmem:[#allocation5 + $0x10] sm:$0xff]
    %v47 = vld [vmem:[#allocation5 + $0x18] sm:$0xff]
    %v48 = vmul.f32 %v40, %v40
    %v49 = vmul.f32 %v41, %v41
    %v50 = vmul.f32 %v42, %v42
    %v51 = vmul.f32 %v43, %v43
    %vm52 = vcmask 523264
    %v53 = vsel %vm52, %v48, 0.0
    %54 = vadd.xlane.f32.xlu0 %v53
    %v55 = vpop.xlane.xlu0 %54
    %v56 = vsel %vm52, %v49, 0.0
    %57 = vadd.xlane.f32.xlu0 %v56
    %v58 = vpop.xlane.xlu0 %57
    %v59 = vsel %vm52, %v50, 0.0
    %60 = vadd.xlane.f32.xlu0 %v59
    %v61 = vpop.xlane.xlu0 %60
    %v62 = vsel %vm52, %v51, 0.0
    %63 = vadd.xlane.f32.xlu0 %v62
    %v64 = vpop.xlane.xlu0 %63
    %v65 = vmul.f32 %v44, %v44
    %v66 = vmul.f32 %v45, %v45
    %v67 = vmul.f32 %v46, %v46
    %v68 = vmul.f32 %v47, %v47
    %v69 = vsel %vm52, %v65, 0.0
    %70 = vadd.xlane.f32.xlu0 %v69
    %v71 = vpop.xlane.xlu0 %70
    %v72 = vsel %vm52, %v66, 0.0
    %73 = vadd.xlane.f32.xlu0 %v72
    %v74 = vpop.xlane.xlu0 %73
    %v75 = vsel %vm52, %v67, 0.0
    %76 = vadd.xlane.f32.xlu0 %v75
    %v77 = vpop.xlane.xlu0 %76
    %v78 = vsel %vm52, %v68, 0.0
    %79 = vadd.xlane.f32.xlu0 %v78
    %v80 = vpop.xlane.xlu0 %79
    %v82 = vsel %vm52, %v40, 0
    %v85 = vsel %vm52, %v41, 0
    %v88 = vsel %vm52, %v42, 0
    %v91 = vsel %vm52, %v43, 0
    %v94 = vsel %vm52, %v44, 0
    %v97 = vsel %vm52, %v45, 0
    %v100 = vsel %vm52, %v46, 0
    %v103 = vsel %vm52, %v47, 0
    %105 = vmatprep.subr.mxu0 0.0
    %106 = vmatpush1.xpose.msra.mxu0 %v94
    %107 = vmatprep.subr.mxu0 0.0
    %108 = vmatpush1.xpose.msra.mxu0 %v97
    %109 = vmatprep.subr.mxu0 0.0
    %110 = vmatpush1.xpose.msra.mxu0 %v100
    %111 = vmatprep.subr.mxu0 0.0
    %112 = vmatpush1.xpose.msra.mxu0 %v103
    %113 = vmatprep.subr.mxu0 0.0
    %114 = vmatpush1.xpose.msra.mxu0 0.0
    %115 = vmatprep.subr.mxu0 0.0
    %116 = vmatpush1.xpose.msra.mxu0 0.0
    %117 = vmatprep.subr.mxu0 0.0
    %118 = vmatpush1.xpose.msra.mxu0 0.0
    %119 = vmatprep.subr.mxu0 0.0
    %120 = vmatpush1.xpose.msra.mxu0 0.0
    %121 = vmatprep.subr.mxu0 0.0
    %122 = vmatpush1.xpose.msra.mxu0 0.0
    %123 = vmatprep.subr.mxu0 0.0
    %124 = vmatpush1.xpose.msra.mxu0 0.0
    %125 = vmatprep.subr.mxu0 0.0
    %126 = vmatpush1.xpose.msra.mxu0 0.0
    %127 = vmatprep.subr.mxu0 0.0
    %128 = vmatpush1.xpose.msra.mxu0 0.0
    %129 = vmatprep.subr.mxu0 0.0
    %130 = vmatpush1.xpose.msra.mxu0 0.0
    %131 = vmatprep.subr.mxu0 0.0
    %132 = vmatpush1.xpose.msra.mxu0 0.0
    %133 = vmatprep.subr.mxu0 0.0
    %134 = vmatpush1.xpose.msra.mxu0 0.0
    %135 = vmatprep.subr.mxu0 0.0
    %136 = vmatpush1.xpose.msra.mxu0 0.0
    %137 = vmatprep.subr.mxu0 0.0
    %138 = vmatpush1.xpose.msra.mxu0 0.0
    %139 = vmatprep.subr.mxu0 0.0
    %140 = vmatpush1.xpose.msra.mxu0 0.0
    %141 = vmatprep.subr.mxu0 0.0
    %142 = vmatpush1.xpose.msra.mxu0 0.0
    %143 = vmatprep.subr.mxu0 0.0
    %144 = vmatpush1.xpose.msra.mxu0 0.0
    %145 = vmatprep.subr.mxu0 0.0
    %146 = vmatpush1.xpose.msra.mxu0 0.0
    %147 = vmatprep.subr.mxu0 0.0
    %148 = vmatpush1.xpose.msra.mxu0 0.0
    %149 = vmatprep.subr.mxu0 0.0
    %150 = vmatpush1.xpose.msra.mxu0 0.0
    %151 = vmatprep.subr.mxu0 0.0
    %152 = vmatpush1.xpose.msra.mxu0 0.0
    %153 = vmatprep.subr.mxu0 0.0
    %154 = vmatpush1.xpose.msra.mxu0 0.0
    %155 = vmatprep.subr.mxu0 0.0
    %156 = vmatpush1.xpose.msra.mxu0 0.0
    %157 = vmatprep.subr.mxu0 0.0
    %158 = vmatpush1.xpose.msra.mxu0 0.0
    %159 = vmatprep.subr.mxu0 0.0
    %160 = vmatpush1.xpose.msra.mxu0 0.0
    %161 = vmatprep.subr.mxu0 0.0
    %162 = vmatpush1.xpose.msra.mxu0 0.0
    %163 = vmatprep.subr.mxu0 0.0
    %164 = vmatpush1.xpose.msra.mxu0 0.0
    %165 = vmatprep.subr.mxu0 0.0
    %166 = vmatpush1.xpose.msra.mxu0 0.0
    %167 = vmatprep.subr.mxu0 0.0
    %168 = vmatpush1.xpose.msra.mxu0 0.0
    %169 = vmatprep.mubr.f32.mxu0 0.0
    %170 = vmatmul.mubr.f32.gmra.mrb[0].mxu0 %v82
    %v171 = vpop.f32.mrb[0].mxu0
    %v172 = vadd.f32 0.0, %v171
    %v173 = vpop.f32.mrb[0].mxu0
    %174 = vmatprep.mubr.f32.mxu0 0.0
    %175 = vmatmul.mubr.f32.gmra.mrb[0].mxu0 %v85
    %v176 = vpop.f32.mrb[0].mxu0
    %v177 = vadd.f32 0.0, %v176
    %v178 = vpop.f32.mrb[0].mxu0
    %179 = vmatprep.mubr.f32.mxu0 0.0
    %180 = vmatmul.mubr.f32.gmra.mrb[0].mxu0 %v88
    %v181 = vpop.f32.mrb[0].mxu0
    %v182 = vadd.f32 0.0, %v181
    %v183 = vpop.f32.mrb[0].mxu0
    %184 = vmatprep.mubr.f32.mxu0 0.0
    %185 = vmatmul.mubr.f32.gmra.mrb[0].mxu0 %v91
    %v186 = vpop.f32.mrb[0].mxu0
    %v187 = vadd.f32 0.0, %v186
    %v188 = vpop.f32.mrb[0].mxu0
    %189 = vdwg.mxu0
    %v194 = vlaneseq
    %v195 = vand.u32 %v194, 127
    %v196 = vlaneseq
    %v197 = vshrl.u32 %v196, 7
    %v198 = vsub.s32 %v195, %v197
    %v199 = vrot.slane %v71, %v198
    %v200 = vadd.s32 %v195, 4294967288
    %v201 = vlaneseq
    %v202 = vshrl.u32 %v201, 7
    %v203 = vsub.s32 %v200, %v202
    %v204 = vrot.slane %v74, %v203
    %vm205 = vcmask 130112
    %v206 = vsel %vm205, %v204, %v199
    %v207 = vadd.s32 %v195, 4294967280
    %v208 = vlaneseq
    %v209 = vshrl.u32 %v208, 7
    %v210 = vsub.s32 %v207, %v209
    %v211 = vrot.slane %v77, %v210
    %vm212 = vcmask 195712
    %v213 = vsel %vm212, %v211, %v206
    %v214 = vadd.s32 %v195, 4294967272
    %v215 = vlaneseq
    %v216 = vshrl.u32 %v215, 7
    %v217 = vsub.s32 %v214, %v216
    %v218 = vrot.slane %v80, %v217
    %vm219 = vcmask 261312
    %v220 = vsel %vm219, %v218, %v213
    %vm221 = vcmask 1042434
    %v222 = vsel %vm221, %v220, %v220
    %vm223 = vcmask 1043459
    %v224 = vsel %vm223, %v220, %v222
    %vm225 = vcmask 1044484
    %v226 = vsel %vm225, %v220, %v224
    %vm227 = vcmask 1045509
    %v228 = vsel %vm227, %v220, %v226
    %vm229 = vcmask 1046534
    %v230 = vsel %vm229, %v220, %v228
    %vm231 = vcmask 1047559
    %v232 = vsel %vm231, %v220, %v230
    %v234 = vadd.f32 %v55, %v232
    %v235 = vadd.f32 %v58, %v232
    %v236 = vadd.f32 %v61, %v232
    %v237 = vadd.f32 %v64, %v232
    %v238 = vmul.f32 %v172, 2.0
    %v239 = vmul.f32 %v177, 2.0
    %v240 = vmul.f32 %v182, 2.0
    %v241 = vmul.f32 %v187, 2.0
    %v242 = vsub.f32 %v234, %v238
    %v243 = vsub.f32 %v235, %v239
    %v244 = vsub.f32 %v236, %v240
    %v245 = vsub.f32 %v237, %v241
    %v246 = vmax.f32 %v242, 1e-12
    %v247 = vmax.f32 %v243, 1e-12
    %v248 = vmax.f32 %v244, 1e-12
    %v249 = vmax.f32 %v245, 1e-12
    %vm250 = vcmask 261120
    %v251 = vsel %vm250, %v246, inf
    %252 = vmin.xlane.f32.xlu0 %v251
    %v253 = vpop.xlane.xlu0 %252
    %v254 = vsel %vm250, %v247, inf
    %255 = vmin.xlane.f32.xlu0 %v254
    %v256 = vpop.xlane.xlu0 %255
    %v257 = vsel %vm250, %v248, inf
    %258 = vmin.xlane.f32.xlu0 %v257
    %v259 = vpop.xlane.xlu0 %258
    %v260 = vsel %vm250, %v249, inf
    %261 = vmin.xlane.f32.xlu0 %v260
    %v262 = vpop.xlane.xlu0 %261
    %vm263 = vcmp.eq.f32.partialorder %v246, %v253
    %vm264 = vcmp.eq.f32.partialorder %v247, %v256
    %vm265 = vcmp.eq.f32.partialorder %v248, %v259
    %vm266 = vcmp.eq.f32.partialorder %v249, %v262
    %v267 = vsel %vm263, 1, 0
    %v268 = vsel %vm264, 1, 0
    %v269 = vsel %vm265, 1, 0
    %v270 = vsel %vm266, 1, 0
    %v271 = vcvt.s32.f32 %v267
    %v272 = vcvt.s32.f32 %v268
    %v273 = vcvt.s32.f32 %v269
    %v274 = vcvt.s32.f32 %v270
    %v275 = vsel %vm250, %v271, 0.0
    %276 = vadd.xlane.f32.xlu0 %v275
    %v277 = vpop.xlane.xlu0 %276
    %v278 = vsel %vm250, %v272, 0.0
    %279 = vadd.xlane.f32.xlu0 %v278
    %v280 = vpop.xlane.xlu0 %279
    %v281 = vsel %vm250, %v273, 0.0
    %282 = vadd.xlane.f32.xlu0 %v281
    %v283 = vpop.xlane.xlu0 %282
    %v284 = vsel %vm250, %v274, 0.0
    %285 = vadd.xlane.f32.xlu0 %v284
    %v286 = vpop.xlane.xlu0 %285
    %v287 = vadd.f32 %v277, 0.0
    %v288 = vadd.f32 %v280, 0.0
    %v289 = vadd.f32 %v283, 0.0
    %v290 = vadd.f32 %v286, 0.0
    %vm291 = vcmp.le.f32.partialorder 0.0, 15.0
    %vm292 = vcmp.gt.f32.partialorder %v287, 15.0
    %vm293 = vcmp.gt.f32.partialorder %v288, 15.0
    %vm294 = vcmp.gt.f32.partialorder %v289, 15.0
    %vm295 = vcmp.gt.f32.partialorder %v290, 15.0
    %vm296 = vmand %vm291, %vm292
    %vm297 = vmand %vm291, %vm293
    %vm298 = vmand %vm291, %vm294
    %vm299 = vmand %vm291, %vm295
    %vm300 = vcmp.le.f32.partialorder 0.0, 30.0
    %vm301 = vcmp.gt.f32.partialorder %v287, 30.0
    %vm302 = vcmp.gt.f32.partialorder %v288, 30.0
    %vm303 = vcmp.gt.f32.partialorder %v289, 30.0
    %vm304 = vcmp.gt.f32.partialorder %v290, 30.0
    %vm305 = vmand %vm300, %vm301
    %vm306 = vmand %vm300, %vm302
    %vm307 = vmand %vm300, %vm303
    %vm308 = vmand %vm300, %vm304
    %v309 = vsel %vm296, %v253, 0.0
    %v310 = vsel %vm297, %v256, 0.0
    %v311 = vsel %vm298, %v259, 0.0
    %v312 = vsel %vm299, %v262, 0.0
    %v313 = vsel %vm305, %v253, 0.0
    %v314 = vsel %vm306, %v256, 0.0
    %v315 = vsel %vm307, %v259, 0.0
    %v316 = vsel %vm308, %v262, 0.0
    %v317 = vsel %vm263, inf, %v246
    %v318 = vsel %vm264, inf, %v247
    %v319 = vsel %vm265, inf, %v248
    %v320 = vsel %vm266, inf, %v249
    %v321 = vsel %vm250, %v317, inf
    %322 = vmin.xlane.f32.xlu0 %v321
    %v323 = vpop.xlane.xlu0 %322
    %v324 = vsel %vm250, %v318, inf
    %325 = vmin.xlane.f32.xlu0 %v324
    %v326 = vpop.xlane.xlu0 %325
    %v327 = vsel %vm250, %v319, inf
    %328 = vmin.xlane.f32.xlu0 %v327
    %v329 = vpop.xlane.xlu0 %328
    %v330 = vsel %vm250, %v320, inf
    %331 = vmin.xlane.f32.xlu0 %v330
    %v332 = vpop.xlane.xlu0 %331
    %vm333 = vcmp.eq.f32.partialorder %v317, %v323
    %vm334 = vcmp.eq.f32.partialorder %v318, %v326
    %vm335 = vcmp.eq.f32.partialorder %v319, %v329
    %vm336 = vcmp.eq.f32.partialorder %v320, %v332
    %v337 = vsel %vm333, 1, 0
    %v338 = vsel %vm334, 1, 0
    %v339 = vsel %vm335, 1, 0
    %v340 = vsel %vm336, 1, 0
    %v341 = vcvt.s32.f32 %v337
    %v342 = vcvt.s32.f32 %v338
    %v343 = vcvt.s32.f32 %v339
    %v344 = vcvt.s32.f32 %v340
    %v345 = vsel %vm250, %v341, 0.0
    %346 = vadd.xlane.f32.xlu0 %v345
    %v347 = vpop.xlane.xlu0 %346
    %v348 = vsel %vm250, %v342, 0.0
    %349 = vadd.xlane.f32.xlu0 %v348
    %v350 = vpop.xlane.xlu0 %349
    %v351 = vsel %vm250, %v343, 0.0
    %352 = vadd.xlane.f32.xlu0 %v351
    %v353 = vpop.xlane.xlu0 %352
    %v354 = vsel %vm250, %v344, 0.0
    %355 = vadd.xlane.f32.xlu0 %v354
    %v356 = vpop.xlane.xlu0 %355
    %v357 = vadd.f32 %v287, %v347
    %v358 = vadd.f32 %v288, %v350
    %v359 = vadd.f32 %v289, %v353
    %v360 = vadd.f32 %v290, %v356
    %vm361 = vcmp.le.f32.partialorder %v287, 15.0
    %vm362 = vcmp.le.f32.partialorder %v288, 15.0
    %vm363 = vcmp.le.f32.partialorder %v289, 15.0
    %vm364 = vcmp.le.f32.partialorder %v290, 15.0
    %vm365 = vcmp.gt.f32.partialorder %v357, 15.0
    %vm366 = vcmp.gt.f32.partialorder %v358, 15.0
    %vm367 = vcmp.gt.f32.partialorder %v359, 15.0
    %vm368 = vcmp.gt.f32.partialorder %v360, 15.0
    %vm369 = vmand %vm361, %vm365
    %vm370 = vmand %vm362, %vm366
    %vm371 = vmand %vm363, %vm367
    %vm372 = vmand %vm364, %vm368
    %vm373 = vcmp.le.f32.partialorder %v287, 30.0
    %vm374 = vcmp.le.f32.partialorder %v288, 30.0
    %vm375 = vcmp.le.f32.partialorder %v289, 30.0
    %vm376 = vcmp.le.f32.partialorder %v290, 30.0
    %vm377 = vcmp.gt.f32.partialorder %v357, 30.0
    %vm378 = vcmp.gt.f32.partialorder %v358, 30.0
    %vm379 = vcmp.gt.f32.partialorder %v359, 30.0
    %vm380 = vcmp.gt.f32.partialorder %v360, 30.0
    %vm381 = vmand %vm373, %vm377
    %vm382 = vmand %vm374, %vm378
    %vm383 = vmand %vm375, %vm379
    %vm384 = vmand %vm376, %vm380
    %v385 = vsel %vm369, %v323, %v309
    %v386 = vsel %vm370, %v326, %v310
    %v387 = vsel %vm371, %v329, %v311
    %v388 = vsel %vm372, %v332, %v312
    %v389 = vsel %vm381, %v323, %v313
    %v390 = vsel %vm382, %v326, %v314
    %v391 = vsel %vm383, %v329, %v315
    %v392 = vsel %vm384, %v332, %v316
    %v393 = vsel %vm333, inf, %v317
    %v394 = vsel %vm334, inf, %v318
    %v395 = vsel %vm335, inf, %v319
    %v396 = vsel %vm336, inf, %v320
    %v397 = vsel %vm250, %v393, inf
    %398 = vmin.xlane.f32.xlu0 %v397
    %v399 = vpop.xlane.xlu0 %398
    %v400 = vsel %vm250, %v394, inf
    %401 = vmin.xlane.f32.xlu0 %v400
    %v402 = vpop.xlane.xlu0 %401
    %v403 = vsel %vm250, %v395, inf
    %404 = vmin.xlane.f32.xlu0 %v403
    %v405 = vpop.xlane.xlu0 %404
    %v406 = vsel %vm250, %v396, inf
    %407 = vmin.xlane.f32.xlu0 %v406
    %v408 = vpop.xlane.xlu0 %407
    %vm409 = vcmp.eq.f32.partialorder %v393, %v399
    %vm410 = vcmp.eq.f32.partialorder %v394, %v402
    %vm411 = vcmp.eq.f32.partialorder %v395, %v405
    %vm412 = vcmp.eq.f32.partialorder %v396, %v408
    %v413 = vsel %vm409, 1, 0
    %v414 = vsel %vm410, 1, 0
    %v415 = vsel %vm411, 1, 0
    %v416 = vsel %vm412, 1, 0
    %v417 = vcvt.s32.f32 %v413
    %v418 = vcvt.s32.f32 %v414
    %v419 = vcvt.s32.f32 %v415
    %v420 = vcvt.s32.f32 %v416
    %v421 = vsel %vm250, %v417, 0.0
    %422 = vadd.xlane.f32.xlu0 %v421
    %v423 = vpop.xlane.xlu0 %422
    %v424 = vsel %vm250, %v418, 0.0
    %425 = vadd.xlane.f32.xlu0 %v424
    %v426 = vpop.xlane.xlu0 %425
    %v427 = vsel %vm250, %v419, 0.0
    %428 = vadd.xlane.f32.xlu0 %v427
    %v429 = vpop.xlane.xlu0 %428
    %v430 = vsel %vm250, %v420, 0.0
    %431 = vadd.xlane.f32.xlu0 %v430
    %v432 = vpop.xlane.xlu0 %431
    %v433 = vadd.f32 %v357, %v423
    %v434 = vadd.f32 %v358, %v426
    %v435 = vadd.f32 %v359, %v429
    %v436 = vadd.f32 %v360, %v432
    %vm437 = vcmp.le.f32.partialorder %v357, 15.0
    %vm438 = vcmp.le.f32.partialorder %v358, 15.0
    %vm439 = vcmp.le.f32.partialorder %v359, 15.0
    %vm440 = vcmp.le.f32.partialorder %v360, 15.0
    %vm441 = vcmp.gt.f32.partialorder %v433, 15.0
    %vm442 = vcmp.gt.f32.partialorder %v434, 15.0
    %vm443 = vcmp.gt.f32.partialorder %v435, 15.0
    %vm444 = vcmp.gt.f32.partialorder %v436, 15.0
    %vm445 = vmand %vm437, %vm441
    %vm446 = vmand %vm438, %vm442
    %vm447 = vmand %vm439, %vm443
    %vm448 = vmand %vm440, %vm444
    %vm449 = vcmp.le.f32.partialorder %v357, 30.0
    %vm450 = vcmp.le.f32.partialorder %v358, 30.0
    %vm451 = vcmp.le.f32.partialorder %v359, 30.0
    %vm452 = vcmp.le.f32.partialorder %v360, 30.0
    %vm453 = vcmp.gt.f32.partialorder %v433, 30.0
    %vm454 = vcmp.gt.f32.partialorder %v434, 30.0
    %vm455 = vcmp.gt.f32.partialorder %v435, 30.0
    %vm456 = vcmp.gt.f32.partialorder %v436, 30.0
    %vm457 = vmand %vm449, %vm453
    %vm458 = vmand %vm450, %vm454
    %vm459 = vmand %vm451, %vm455
    %vm460 = vmand %vm452, %vm456
    %v461 = vsel %vm445, %v399, %v385
    %v462 = vsel %vm446, %v402, %v386
    %v463 = vsel %vm447, %v405, %v387
    %v464 = vsel %vm448, %v408, %v388
    %v465 = vsel %vm457, %v399, %v389
    %v466 = vsel %vm458, %v402, %v390
    %v467 = vsel %vm459, %v405, %v391
    %v468 = vsel %vm460, %v408, %v392
    %v469 = vsel %vm409, inf, %v393
    %v470 = vsel %vm410, inf, %v394
    %v471 = vsel %vm411, inf, %v395
    %v472 = vsel %vm412, inf, %v396
    %v473 = vsel %vm250, %v469, inf
    %474 = vmin.xlane.f32.xlu0 %v473
    %v475 = vpop.xlane.xlu0 %474
    %v476 = vsel %vm250, %v470, inf
    %477 = vmin.xlane.f32.xlu0 %v476
    %v478 = vpop.xlane.xlu0 %477
    %v479 = vsel %vm250, %v471, inf
    %480 = vmin.xlane.f32.xlu0 %v479
    %v481 = vpop.xlane.xlu0 %480
    %v482 = vsel %vm250, %v472, inf
    %483 = vmin.xlane.f32.xlu0 %v482
    %v484 = vpop.xlane.xlu0 %483
    %vm485 = vcmp.eq.f32.partialorder %v469, %v475
    %vm486 = vcmp.eq.f32.partialorder %v470, %v478
    %vm487 = vcmp.eq.f32.partialorder %v471, %v481
    %vm488 = vcmp.eq.f32.partialorder %v472, %v484
    %v489 = vsel %vm485, 1, 0
    %v490 = vsel %vm486, 1, 0
    %v491 = vsel %vm487, 1, 0
    %v492 = vsel %vm488, 1, 0
    %v493 = vcvt.s32.f32 %v489
    %v494 = vcvt.s32.f32 %v490
    %v495 = vcvt.s32.f32 %v491
    %v496 = vcvt.s32.f32 %v492
    %v497 = vsel %vm250, %v493, 0.0
    %498 = vadd.xlane.f32.xlu0 %v497
    %v499 = vpop.xlane.xlu0 %498
    %v500 = vsel %vm250, %v494, 0.0
    %501 = vadd.xlane.f32.xlu0 %v500
    %v502 = vpop.xlane.xlu0 %501
    %v503 = vsel %vm250, %v495, 0.0
    %504 = vadd.xlane.f32.xlu0 %v503
    %v505 = vpop.xlane.xlu0 %504
    %v506 = vsel %vm250, %v496, 0.0
    %507 = vadd.xlane.f32.xlu0 %v506
    %v508 = vpop.xlane.xlu0 %507
    %v509 = vadd.f32 %v433, %v499
    %v510 = vadd.f32 %v434, %v502
    %v511 = vadd.f32 %v435, %v505
    %v512 = vadd.f32 %v436, %v508
    %vm513 = vcmp.le.f32.partialorder %v433, 15.0
    %vm514 = vcmp.le.f32.partialorder %v434, 15.0
    %vm515 = vcmp.le.f32.partialorder %v435, 15.0
    %vm516 = vcmp.le.f32.partialorder %v436, 15.0
    %vm517 = vcmp.gt.f32.partialorder %v509, 15.0
    %vm518 = vcmp.gt.f32.partialorder %v510, 15.0
    %vm519 = vcmp.gt.f32.partialorder %v511, 15.0
    %vm520 = vcmp.gt.f32.partialorder %v512, 15.0
    %vm521 = vmand %vm513, %vm517
    %vm522 = vmand %vm514, %vm518
    %vm523 = vmand %vm515, %vm519
    %vm524 = vmand %vm516, %vm520
    %vm525 = vcmp.le.f32.partialorder %v433, 30.0
    %vm526 = vcmp.le.f32.partialorder %v434, 30.0
    %vm527 = vcmp.le.f32.partialorder %v435, 30.0
    %vm528 = vcmp.le.f32.partialorder %v436, 30.0
    %vm529 = vcmp.gt.f32.partialorder %v509, 30.0
    %vm530 = vcmp.gt.f32.partialorder %v510, 30.0
    %vm531 = vcmp.gt.f32.partialorder %v511, 30.0
    %vm532 = vcmp.gt.f32.partialorder %v512, 30.0
    %vm533 = vmand %vm525, %vm529
    %vm534 = vmand %vm526, %vm530
    %vm535 = vmand %vm527, %vm531
    %vm536 = vmand %vm528, %vm532
    %v537 = vsel %vm521, %v475, %v461
    %v538 = vsel %vm522, %v478, %v462
    %v539 = vsel %vm523, %v481, %v463
    %v540 = vsel %vm524, %v484, %v464
    %v541 = vsel %vm533, %v475, %v465
    %v542 = vsel %vm534, %v478, %v466
    %v543 = vsel %vm535, %v481, %v467
    %v544 = vsel %vm536, %v484, %v468
    %v545 = vsel %vm485, inf, %v469
    %v546 = vsel %vm486, inf, %v470
    %v547 = vsel %vm487, inf, %v471
    %v548 = vsel %vm488, inf, %v472
    %v549 = vsel %vm250, %v545, inf
    %550 = vmin.xlane.f32.xlu0 %v549
    %v551 = vpop.xlane.xlu0 %550
    %v552 = vsel %vm250, %v546, inf
    %553 = vmin.xlane.f32.xlu0 %v552
    %v554 = vpop.xlane.xlu0 %553
    %v555 = vsel %vm250, %v547, inf
    %556 = vmin.xlane.f32.xlu0 %v555
    %v557 = vpop.xlane.xlu0 %556
    %v558 = vsel %vm250, %v548, inf
    %559 = vmin.xlane.f32.xlu0 %v558
    %v560 = vpop.xlane.xlu0 %559
    %vm561 = vcmp.eq.f32.partialorder %v545, %v551
    %vm562 = vcmp.eq.f32.partialorder %v546, %v554
    %vm563 = vcmp.eq.f32.partialorder %v547, %v557
    %vm564 = vcmp.eq.f32.partialorder %v548, %v560
    %v565 = vsel %vm561, 1, 0
    %v566 = vsel %vm562, 1, 0
    %v567 = vsel %vm563, 1, 0
    %v568 = vsel %vm564, 1, 0
    %v569 = vcvt.s32.f32 %v565
    %v570 = vcvt.s32.f32 %v566
    %v571 = vcvt.s32.f32 %v567
    %v572 = vcvt.s32.f32 %v568
    %v573 = vsel %vm250, %v569, 0.0
    %574 = vadd.xlane.f32.xlu0 %v573
    %v575 = vpop.xlane.xlu0 %574
    %v576 = vsel %vm250, %v570, 0.0
    %577 = vadd.xlane.f32.xlu0 %v576
    %v578 = vpop.xlane.xlu0 %577
    %v579 = vsel %vm250, %v571, 0.0
    %580 = vadd.xlane.f32.xlu0 %v579
    %v581 = vpop.xlane.xlu0 %580
    %v582 = vsel %vm250, %v572, 0.0
    %583 = vadd.xlane.f32.xlu0 %v582
    %v584 = vpop.xlane.xlu0 %583
    %v585 = vadd.f32 %v509, %v575
    %v586 = vadd.f32 %v510, %v578
    %v587 = vadd.f32 %v511, %v581
    %v588 = vadd.f32 %v512, %v584
    %vm589 = vcmp.le.f32.partialorder %v509, 15.0
    %vm590 = vcmp.le.f32.partialorder %v510, 15.0
    %vm591 = vcmp.le.f32.partialorder %v511, 15.0
    %vm592 = vcmp.le.f32.partialorder %v512, 15.0
    %vm593 = vcmp.gt.f32.partialorder %v585, 15.0
    %vm594 = vcmp.gt.f32.partialorder %v586, 15.0
    %vm595 = vcmp.gt.f32.partialorder %v587, 15.0
    %vm596 = vcmp.gt.f32.partialorder %v588, 15.0
    %vm597 = vmand %vm589, %vm593
    %vm598 = vmand %vm590, %vm594
    %vm599 = vmand %vm591, %vm595
    %vm600 = vmand %vm592, %vm596
    %vm601 = vcmp.le.f32.partialorder %v509, 30.0
    %vm602 = vcmp.le.f32.partialorder %v510, 30.0
    %vm603 = vcmp.le.f32.partialorder %v511, 30.0
    %vm604 = vcmp.le.f32.partialorder %v512, 30.0
    %vm605 = vcmp.gt.f32.partialorder %v585, 30.0
    %vm606 = vcmp.gt.f32.partialorder %v586, 30.0
    %vm607 = vcmp.gt.f32.partialorder %v587, 30.0
    %vm608 = vcmp.gt.f32.partialorder %v588, 30.0
    %vm609 = vmand %vm601, %vm605
    %vm610 = vmand %vm602, %vm606
    %vm611 = vmand %vm603, %vm607
    %vm612 = vmand %vm604, %vm608
    %v613 = vsel %vm597, %v551, %v537
    %v614 = vsel %vm598, %v554, %v538
    %v615 = vsel %vm599, %v557, %v539
    %v616 = vsel %vm600, %v560, %v540
    %v617 = vsel %vm609, %v551, %v541
    %v618 = vsel %vm610, %v554, %v542
    %v619 = vsel %vm611, %v557, %v543
    %v620 = vsel %vm612, %v560, %v544
    %v621 = vsel %vm561, inf, %v545
    %v622 = vsel %vm562, inf, %v546
    %v623 = vsel %vm563, inf, %v547
    %v624 = vsel %vm564, inf, %v548
    %v625 = vsel %vm250, %v621, inf
    %626 = vmin.xlane.f32.xlu0 %v625
    %v627 = vpop.xlane.xlu0 %626
    %v628 = vsel %vm250, %v622, inf
    %629 = vmin.xlane.f32.xlu0 %v628
    %v630 = vpop.xlane.xlu0 %629
    %v631 = vsel %vm250, %v623, inf
    %632 = vmin.xlane.f32.xlu0 %v631
    %v633 = vpop.xlane.xlu0 %632
    %v634 = vsel %vm250, %v624, inf
    %635 = vmin.xlane.f32.xlu0 %v634
    %v636 = vpop.xlane.xlu0 %635
    %vm637 = vcmp.eq.f32.partialorder %v621, %v627
    %vm638 = vcmp.eq.f32.partialorder %v622, %v630
    %vm639 = vcmp.eq.f32.partialorder %v623, %v633
    %vm640 = vcmp.eq.f32.partialorder %v624, %v636
    %v641 = vsel %vm637, 1, 0
    %v642 = vsel %vm638, 1, 0
    %v643 = vsel %vm639, 1, 0
    %v644 = vsel %vm640, 1, 0
    %v645 = vcvt.s32.f32 %v641
    %v646 = vcvt.s32.f32 %v642
    %v647 = vcvt.s32.f32 %v643
    %v648 = vcvt.s32.f32 %v644
    %v649 = vsel %vm250, %v645, 0.0
    %650 = vadd.xlane.f32.xlu0 %v649
    %v651 = vpop.xlane.xlu0 %650
    %v652 = vsel %vm250, %v646, 0.0
    %653 = vadd.xlane.f32.xlu0 %v652
    %v654 = vpop.xlane.xlu0 %653
    %v655 = vsel %vm250, %v647, 0.0
    %656 = vadd.xlane.f32.xlu0 %v655
    %v657 = vpop.xlane.xlu0 %656
    %v658 = vsel %vm250, %v648, 0.0
    %659 = vadd.xlane.f32.xlu0 %v658
    %v660 = vpop.xlane.xlu0 %659
    %v661 = vadd.f32 %v585, %v651
    %v662 = vadd.f32 %v586, %v654
    %v663 = vadd.f32 %v587, %v657
    %v664 = vadd.f32 %v588, %v660
    %vm665 = vcmp.le.f32.partialorder %v585, 15.0
    %vm666 = vcmp.le.f32.partialorder %v586, 15.0
    %vm667 = vcmp.le.f32.partialorder %v587, 15.0
    %vm668 = vcmp.le.f32.partialorder %v588, 15.0
    %vm669 = vcmp.gt.f32.partialorder %v661, 15.0
    %vm670 = vcmp.gt.f32.partialorder %v662, 15.0
    %vm671 = vcmp.gt.f32.partialorder %v663, 15.0
    %vm672 = vcmp.gt.f32.partialorder %v664, 15.0
    %vm673 = vmand %vm665, %vm669
    %vm674 = vmand %vm666, %vm670
    %vm675 = vmand %vm667, %vm671
    %vm676 = vmand %vm668, %vm672
    %vm677 = vcmp.le.f32.partialorder %v585, 30.0
    %vm678 = vcmp.le.f32.partialorder %v586, 30.0
    %vm679 = vcmp.le.f32.partialorder %v587, 30.0
    %vm680 = vcmp.le.f32.partialorder %v588, 30.0
    %vm681 = vcmp.gt.f32.partialorder %v661, 30.0
    %vm682 = vcmp.gt.f32.partialorder %v662, 30.0
    %vm683 = vcmp.gt.f32.partialorder %v663, 30.0
    %vm684 = vcmp.gt.f32.partialorder %v664, 30.0
    %vm685 = vmand %vm677, %vm681
    %vm686 = vmand %vm678, %vm682
    %vm687 = vmand %vm679, %vm683
    %vm688 = vmand %vm680, %vm684
    %v689 = vsel %vm673, %v627, %v613
    %v690 = vsel %vm674, %v630, %v614
    %v691 = vsel %vm675, %v633, %v615
    %v692 = vsel %vm676, %v636, %v616
    %v693 = vsel %vm685, %v627, %v617
    %v694 = vsel %vm686, %v630, %v618
    %v695 = vsel %vm687, %v633, %v619
    %v696 = vsel %vm688, %v636, %v620
    %v697 = vsel %vm637, inf, %v621
    %v698 = vsel %vm638, inf, %v622
    %v699 = vsel %vm639, inf, %v623
    %v700 = vsel %vm640, inf, %v624
    %v701 = vsel %vm250, %v697, inf
    %702 = vmin.xlane.f32.xlu0 %v701
    %v703 = vpop.xlane.xlu0 %702
    %v704 = vsel %vm250, %v698, inf
    %705 = vmin.xlane.f32.xlu0 %v704
    %v706 = vpop.xlane.xlu0 %705
    %v707 = vsel %vm250, %v699, inf
    %708 = vmin.xlane.f32.xlu0 %v707
    %v709 = vpop.xlane.xlu0 %708
    %v710 = vsel %vm250, %v700, inf
    %711 = vmin.xlane.f32.xlu0 %v710
    %v712 = vpop.xlane.xlu0 %711
    %vm713 = vcmp.eq.f32.partialorder %v697, %v703
    %vm714 = vcmp.eq.f32.partialorder %v698, %v706
    %vm715 = vcmp.eq.f32.partialorder %v699, %v709
    %vm716 = vcmp.eq.f32.partialorder %v700, %v712
    %v717 = vsel %vm713, 1, 0
    %v718 = vsel %vm714, 1, 0
    %v719 = vsel %vm715, 1, 0
    %v720 = vsel %vm716, 1, 0
    %v721 = vcvt.s32.f32 %v717
    %v722 = vcvt.s32.f32 %v718
    %v723 = vcvt.s32.f32 %v719
    %v724 = vcvt.s32.f32 %v720
    %v725 = vsel %vm250, %v721, 0.0
    %726 = vadd.xlane.f32.xlu0 %v725
    %v727 = vpop.xlane.xlu0 %726
    %v728 = vsel %vm250, %v722, 0.0
    %729 = vadd.xlane.f32.xlu0 %v728
    %v730 = vpop.xlane.xlu0 %729
    %v731 = vsel %vm250, %v723, 0.0
    %732 = vadd.xlane.f32.xlu0 %v731
    %v733 = vpop.xlane.xlu0 %732
    %v734 = vsel %vm250, %v724, 0.0
    %735 = vadd.xlane.f32.xlu0 %v734
    %v736 = vpop.xlane.xlu0 %735
    %v737 = vadd.f32 %v661, %v727
    %v738 = vadd.f32 %v662, %v730
    %v739 = vadd.f32 %v663, %v733
    %v740 = vadd.f32 %v664, %v736
    %vm741 = vcmp.le.f32.partialorder %v661, 15.0
    %vm742 = vcmp.le.f32.partialorder %v662, 15.0
    %vm743 = vcmp.le.f32.partialorder %v663, 15.0
    %vm744 = vcmp.le.f32.partialorder %v664, 15.0
    %vm745 = vcmp.gt.f32.partialorder %v737, 15.0
    %vm746 = vcmp.gt.f32.partialorder %v738, 15.0
    %vm747 = vcmp.gt.f32.partialorder %v739, 15.0
    %vm748 = vcmp.gt.f32.partialorder %v740, 15.0
    %vm749 = vmand %vm741, %vm745
    %vm750 = vmand %vm742, %vm746
    %vm751 = vmand %vm743, %vm747
    %vm752 = vmand %vm744, %vm748
    %vm753 = vcmp.le.f32.partialorder %v661, 30.0
    %vm754 = vcmp.le.f32.partialorder %v662, 30.0
    %vm755 = vcmp.le.f32.partialorder %v663, 30.0
    %vm756 = vcmp.le.f32.partialorder %v664, 30.0
    %vm757 = vcmp.gt.f32.partialorder %v737, 30.0
    %vm758 = vcmp.gt.f32.partialorder %v738, 30.0
    %vm759 = vcmp.gt.f32.partialorder %v739, 30.0
    %vm760 = vcmp.gt.f32.partialorder %v740, 30.0
    %vm761 = vmand %vm753, %vm757
    %vm762 = vmand %vm754, %vm758
    %vm763 = vmand %vm755, %vm759
    %vm764 = vmand %vm756, %vm760
    %v765 = vsel %vm749, %v703, %v689
    %v766 = vsel %vm750, %v706, %v690
    %v767 = vsel %vm751, %v709, %v691
    %v768 = vsel %vm752, %v712, %v692
    %v769 = vsel %vm761, %v703, %v693
    %v770 = vsel %vm762, %v706, %v694
    %v771 = vsel %vm763, %v709, %v695
    %v772 = vsel %vm764, %v712, %v696
    %v773 = vsel %vm713, inf, %v697
    %v774 = vsel %vm714, inf, %v698
    %v775 = vsel %vm715, inf, %v699
    %v776 = vsel %vm716, inf, %v700
    %v777 = vsel %vm250, %v773, inf
    %778 = vmin.xlane.f32.xlu0 %v777
    %v779 = vpop.xlane.xlu0 %778
    %v780 = vsel %vm250, %v774, inf
    %781 = vmin.xlane.f32.xlu0 %v780
    %v782 = vpop.xlane.xlu0 %781
    %v783 = vsel %vm250, %v775, inf
    %784 = vmin.xlane.f32.xlu0 %v783
    %v785 = vpop.xlane.xlu0 %784
    %v786 = vsel %vm250, %v776, inf
    %787 = vmin.xlane.f32.xlu0 %v786
    %v788 = vpop.xlane.xlu0 %787
    %vm789 = vcmp.eq.f32.partialorder %v773, %v779
    %vm790 = vcmp.eq.f32.partialorder %v774, %v782
    %vm791 = vcmp.eq.f32.partialorder %v775, %v785
    %vm792 = vcmp.eq.f32.partialorder %v776, %v788
    %v793 = vsel %vm789, 1, 0
    %v794 = vsel %vm790, 1, 0
    %v795 = vsel %vm791, 1, 0
    %v796 = vsel %vm792, 1, 0
    %v797 = vcvt.s32.f32 %v793
    %v798 = vcvt.s32.f32 %v794
    %v799 = vcvt.s32.f32 %v795
    %v800 = vcvt.s32.f32 %v796
    %v801 = vsel %vm250, %v797, 0.0
    %802 = vadd.xlane.f32.xlu0 %v801
    %v803 = vpop.xlane.xlu0 %802
    %v804 = vsel %vm250, %v798, 0.0
    %805 = vadd.xlane.f32.xlu0 %v804
    %v806 = vpop.xlane.xlu0 %805
    %v807 = vsel %vm250, %v799, 0.0
    %808 = vadd.xlane.f32.xlu0 %v807
    %v809 = vpop.xlane.xlu0 %808
    %v810 = vsel %vm250, %v800, 0.0
    %811 = vadd.xlane.f32.xlu0 %v810
    %v812 = vpop.xlane.xlu0 %811
    %v813 = vadd.f32 %v737, %v803
    %v814 = vadd.f32 %v738, %v806
    %v815 = vadd.f32 %v739, %v809
    %v816 = vadd.f32 %v740, %v812
    %vm817 = vcmp.le.f32.partialorder %v737, 15.0
    %vm818 = vcmp.le.f32.partialorder %v738, 15.0
    %vm819 = vcmp.le.f32.partialorder %v739, 15.0
    %vm820 = vcmp.le.f32.partialorder %v740, 15.0
    %vm821 = vcmp.gt.f32.partialorder %v813, 15.0
    %vm822 = vcmp.gt.f32.partialorder %v814, 15.0
    %vm823 = vcmp.gt.f32.partialorder %v815, 15.0
    %vm824 = vcmp.gt.f32.partialorder %v816, 15.0
    %vm825 = vmand %vm817, %vm821
    %vm826 = vmand %vm818, %vm822
    %vm827 = vmand %vm819, %vm823
    %vm828 = vmand %vm820, %vm824
    %vm829 = vcmp.le.f32.partialorder %v737, 30.0
    %vm830 = vcmp.le.f32.partialorder %v738, 30.0
    %vm831 = vcmp.le.f32.partialorder %v739, 30.0
    %vm832 = vcmp.le.f32.partialorder %v740, 30.0
    %vm833 = vcmp.gt.f32.partialorder %v813, 30.0
    %vm834 = vcmp.gt.f32.partialorder %v814, 30.0
    %vm835 = vcmp.gt.f32.partialorder %v815, 30.0
    %vm836 = vcmp.gt.f32.partialorder %v816, 30.0
    %vm837 = vmand %vm829, %vm833
    %vm838 = vmand %vm830, %vm834
    %vm839 = vmand %vm831, %vm835
    %vm840 = vmand %vm832, %vm836
    %v841 = vsel %vm825, %v779, %v765
    %v842 = vsel %vm826, %v782, %v766
    %v843 = vsel %vm827, %v785, %v767
    %v844 = vsel %vm828, %v788, %v768
    %v845 = vsel %vm837, %v779, %v769
    %v846 = vsel %vm838, %v782, %v770
    %v847 = vsel %vm839, %v785, %v771
    %v848 = vsel %vm840, %v788, %v772
    %v849 = vsel %vm789, inf, %v773
    %v850 = vsel %vm790, inf, %v774
    %v851 = vsel %vm791, inf, %v775
    %v852 = vsel %vm792, inf, %v776
    %v853 = vsel %vm250, %v849, inf
    %854 = vmin.xlane.f32.xlu0 %v853
    %v855 = vpop.xlane.xlu0 %854
    %v856 = vsel %vm250, %v850, inf
    %857 = vmin.xlane.f32.xlu0 %v856
    %v858 = vpop.xlane.xlu0 %857
    %v859 = vsel %vm250, %v851, inf
    %860 = vmin.xlane.f32.xlu0 %v859
    %v861 = vpop.xlane.xlu0 %860
    %v862 = vsel %vm250, %v852, inf
    %863 = vmin.xlane.f32.xlu0 %v862
    %v864 = vpop.xlane.xlu0 %863
    %vm865 = vcmp.eq.f32.partialorder %v849, %v855
    %vm866 = vcmp.eq.f32.partialorder %v850, %v858
    %vm867 = vcmp.eq.f32.partialorder %v851, %v861
    %vm868 = vcmp.eq.f32.partialorder %v852, %v864
    %v869 = vsel %vm865, 1, 0
    %v870 = vsel %vm866, 1, 0
    %v871 = vsel %vm867, 1, 0
    %v872 = vsel %vm868, 1, 0
    %v873 = vcvt.s32.f32 %v869
    %v874 = vcvt.s32.f32 %v870
    %v875 = vcvt.s32.f32 %v871
    %v876 = vcvt.s32.f32 %v872
    %v877 = vsel %vm250, %v873, 0.0
    %878 = vadd.xlane.f32.xlu0 %v877
    %v879 = vpop.xlane.xlu0 %878
    %v880 = vsel %vm250, %v874, 0.0
    %881 = vadd.xlane.f32.xlu0 %v880
    %v882 = vpop.xlane.xlu0 %881
    %v883 = vsel %vm250, %v875, 0.0
    %884 = vadd.xlane.f32.xlu0 %v883
    %v885 = vpop.xlane.xlu0 %884
    %v886 = vsel %vm250, %v876, 0.0
    %887 = vadd.xlane.f32.xlu0 %v886
    %v888 = vpop.xlane.xlu0 %887
    %v889 = vadd.f32 %v813, %v879
    %v890 = vadd.f32 %v814, %v882
    %v891 = vadd.f32 %v815, %v885
    %v892 = vadd.f32 %v816, %v888
    %vm893 = vcmp.le.f32.partialorder %v813, 15.0
    %vm894 = vcmp.le.f32.partialorder %v814, 15.0
    %vm895 = vcmp.le.f32.partialorder %v815, 15.0
    %vm896 = vcmp.le.f32.partialorder %v816, 15.0
    %vm897 = vcmp.gt.f32.partialorder %v889, 15.0
    %vm898 = vcmp.gt.f32.partialorder %v890, 15.0
    %vm899 = vcmp.gt.f32.partialorder %v891, 15.0
    %vm900 = vcmp.gt.f32.partialorder %v892, 15.0
    %vm901 = vmand %vm893, %vm897
    %vm902 = vmand %vm894, %vm898
    %vm903 = vmand %vm895, %vm899
    %vm904 = vmand %vm896, %vm900
    %vm905 = vcmp.le.f32.partialorder %v813, 30.0
    %vm906 = vcmp.le.f32.partialorder %v814, 30.0
    %vm907 = vcmp.le.f32.partialorder %v815, 30.0
    %vm908 = vcmp.le.f32.partialorder %v816, 30.0
    %vm909 = vcmp.gt.f32.partialorder %v889, 30.0
    %vm910 = vcmp.gt.f32.partialorder %v890, 30.0
    %vm911 = vcmp.gt.f32.partialorder %v891, 30.0
    %vm912 = vcmp.gt.f32.partialorder %v892, 30.0
    %vm913 = vmand %vm905, %vm909
    %vm914 = vmand %vm906, %vm910
    %vm915 = vmand %vm907, %vm911
    %vm916 = vmand %vm908, %vm912
    %v917 = vsel %vm901, %v855, %v841
    %v918 = vsel %vm902, %v858, %v842
    %v919 = vsel %vm903, %v861, %v843
    %v920 = vsel %vm904, %v864, %v844
    %v921 = vsel %vm913, %v855, %v845
    %v922 = vsel %vm914, %v858, %v846
    %v923 = vsel %vm915, %v861, %v847
    %v924 = vsel %vm916, %v864, %v848
    %v925 = vsel %vm865, inf, %v849
    %v926 = vsel %vm866, inf, %v850
    %v927 = vsel %vm867, inf, %v851
    %v928 = vsel %vm868, inf, %v852
    %v929 = vsel %vm250, %v925, inf
    %930 = vmin.xlane.f32.xlu0 %v929
    %v931 = vpop.xlane.xlu0 %930
    %v932 = vsel %vm250, %v926, inf
    %933 = vmin.xlane.f32.xlu0 %v932
    %v934 = vpop.xlane.xlu0 %933
    %v935 = vsel %vm250, %v927, inf
    %936 = vmin.xlane.f32.xlu0 %v935
    %v937 = vpop.xlane.xlu0 %936
    %v938 = vsel %vm250, %v928, inf
    %939 = vmin.xlane.f32.xlu0 %v938
    %v940 = vpop.xlane.xlu0 %939
    %vm941 = vcmp.eq.f32.partialorder %v925, %v931
    %vm942 = vcmp.eq.f32.partialorder %v926, %v934
    %vm943 = vcmp.eq.f32.partialorder %v927, %v937
    %vm944 = vcmp.eq.f32.partialorder %v928, %v940
    %v945 = vsel %vm941, 1, 0
    %v946 = vsel %vm942, 1, 0
    %v947 = vsel %vm943, 1, 0
    %v948 = vsel %vm944, 1, 0
    %v949 = vcvt.s32.f32 %v945
    %v950 = vcvt.s32.f32 %v946
    %v951 = vcvt.s32.f32 %v947
    %v952 = vcvt.s32.f32 %v948
    %v953 = vsel %vm250, %v949, 0.0
    %954 = vadd.xlane.f32.xlu0 %v953
    %v955 = vpop.xlane.xlu0 %954
    %v956 = vsel %vm250, %v950, 0.0
    %957 = vadd.xlane.f32.xlu0 %v956
    %v958 = vpop.xlane.xlu0 %957
    %v959 = vsel %vm250, %v951, 0.0
    %960 = vadd.xlane.f32.xlu0 %v959
    %v961 = vpop.xlane.xlu0 %960
    %v962 = vsel %vm250, %v952, 0.0
    %963 = vadd.xlane.f32.xlu0 %v962
    %v964 = vpop.xlane.xlu0 %963
    %v965 = vadd.f32 %v889, %v955
    %v966 = vadd.f32 %v890, %v958
    %v967 = vadd.f32 %v891, %v961
    %v968 = vadd.f32 %v892, %v964
    %vm969 = vcmp.le.f32.partialorder %v889, 15.0
    %vm970 = vcmp.le.f32.partialorder %v890, 15.0
    %vm971 = vcmp.le.f32.partialorder %v891, 15.0
    %vm972 = vcmp.le.f32.partialorder %v892, 15.0
    %vm973 = vcmp.gt.f32.partialorder %v965, 15.0
    %vm974 = vcmp.gt.f32.partialorder %v966, 15.0
    %vm975 = vcmp.gt.f32.partialorder %v967, 15.0
    %vm976 = vcmp.gt.f32.partialorder %v968, 15.0
    %vm977 = vmand %vm969, %vm973
    %vm978 = vmand %vm970, %vm974
    %vm979 = vmand %vm971, %vm975
    %vm980 = vmand %vm972, %vm976
    %vm981 = vcmp.le.f32.partialorder %v889, 30.0
    %vm982 = vcmp.le.f32.partialorder %v890, 30.0
    %vm983 = vcmp.le.f32.partialorder %v891, 30.0
    %vm984 = vcmp.le.f32.partialorder %v892, 30.0
    %vm985 = vcmp.gt.f32.partialorder %v965, 30.0
    %vm986 = vcmp.gt.f32.partialorder %v966, 30.0
    %vm987 = vcmp.gt.f32.partialorder %v967, 30.0
    %vm988 = vcmp.gt.f32.partialorder %v968, 30.0
    %vm989 = vmand %vm981, %vm985
    %vm990 = vmand %vm982, %vm986
    %vm991 = vmand %vm983, %vm987
    %vm992 = vmand %vm984, %vm988
    %v993 = vsel %vm977, %v931, %v917
    %v994 = vsel %vm978, %v934, %v918
    %v995 = vsel %vm979, %v937, %v919
    %v996 = vsel %vm980, %v940, %v920
    %v997 = vsel %vm989, %v931, %v921
    %v998 = vsel %vm990, %v934, %v922
    %v999 = vsel %vm991, %v937, %v923
    %v1000 = vsel %vm992, %v940, %v924
    %v1001 = vsel %vm941, inf, %v925
    %v1002 = vsel %vm942, inf, %v926
    %v1003 = vsel %vm943, inf, %v927
    %v1004 = vsel %vm944, inf, %v928
    %v1005 = vsel %vm250, %v1001, inf
    %1006 = vmin.xlane.f32.xlu0 %v1005
    %v1007 = vpop.xlane.xlu0 %1006
    %v1008 = vsel %vm250, %v1002, inf
    %1009 = vmin.xlane.f32.xlu0 %v1008
    %v1010 = vpop.xlane.xlu0 %1009
    %v1011 = vsel %vm250, %v1003, inf
    %1012 = vmin.xlane.f32.xlu0 %v1011
    %v1013 = vpop.xlane.xlu0 %1012
    %v1014 = vsel %vm250, %v1004, inf
    %1015 = vmin.xlane.f32.xlu0 %v1014
    %v1016 = vpop.xlane.xlu0 %1015
    %vm1017 = vcmp.eq.f32.partialorder %v1001, %v1007
    %vm1018 = vcmp.eq.f32.partialorder %v1002, %v1010
    %vm1019 = vcmp.eq.f32.partialorder %v1003, %v1013
    %vm1020 = vcmp.eq.f32.partialorder %v1004, %v1016
    %v1021 = vsel %vm1017, 1, 0
    %v1022 = vsel %vm1018, 1, 0
    %v1023 = vsel %vm1019, 1, 0
    %v1024 = vsel %vm1020, 1, 0
    %v1025 = vcvt.s32.f32 %v1021
    %v1026 = vcvt.s32.f32 %v1022
    %v1027 = vcvt.s32.f32 %v1023
    %v1028 = vcvt.s32.f32 %v1024
    %v1029 = vsel %vm250, %v1025, 0.0
    %1030 = vadd.xlane.f32.xlu0 %v1029
    %v1031 = vpop.xlane.xlu0 %1030
    %v1032 = vsel %vm250, %v1026, 0.0
    %1033 = vadd.xlane.f32.xlu0 %v1032
    %v1034 = vpop.xlane.xlu0 %1033
    %v1035 = vsel %vm250, %v1027, 0.0
    %1036 = vadd.xlane.f32.xlu0 %v1035
    %v1037 = vpop.xlane.xlu0 %1036
    %v1038 = vsel %vm250, %v1028, 0.0
    %1039 = vadd.xlane.f32.xlu0 %v1038
    %v1040 = vpop.xlane.xlu0 %1039
    %v1041 = vadd.f32 %v965, %v1031
    %v1042 = vadd.f32 %v966, %v1034
    %v1043 = vadd.f32 %v967, %v1037
    %v1044 = vadd.f32 %v968, %v1040
    %vm1045 = vcmp.le.f32.partialorder %v965, 15.0
    %vm1046 = vcmp.le.f32.partialorder %v966, 15.0
    %vm1047 = vcmp.le.f32.partialorder %v967, 15.0
    %vm1048 = vcmp.le.f32.partialorder %v968, 15.0
    %vm1049 = vcmp.gt.f32.partialorder %v1041, 15.0
    %vm1050 = vcmp.gt.f32.partialorder %v1042, 15.0
    %vm1051 = vcmp.gt.f32.partialorder %v1043, 15.0
    %vm1052 = vcmp.gt.f32.partialorder %v1044, 15.0
    %vm1053 = vmand %vm1045, %vm1049
    %vm1054 = vmand %vm1046, %vm1050
    %vm1055 = vmand %vm1047, %vm1051
    %vm1056 = vmand %vm1048, %vm1052
    %vm1057 = vcmp.le.f32.partialorder %v965, 30.0
    %vm1058 = vcmp.le.f32.partialorder %v966, 30.0
    %vm1059 = vcmp.le.f32.partialorder %v967, 30.0
    %vm1060 = vcmp.le.f32.partialorder %v968, 30.0
    %vm1061 = vcmp.gt.f32.partialorder %v1041, 30.0
    %vm1062 = vcmp.gt.f32.partialorder %v1042, 30.0
    %vm1063 = vcmp.gt.f32.partialorder %v1043, 30.0
    %vm1064 = vcmp.gt.f32.partialorder %v1044, 30.0
    %vm1065 = vmand %vm1057, %vm1061
    %vm1066 = vmand %vm1058, %vm1062
    %vm1067 = vmand %vm1059, %vm1063
    %vm1068 = vmand %vm1060, %vm1064
    %v1069 = vsel %vm1053, %v1007, %v993
    %v1070 = vsel %vm1054, %v1010, %v994
    %v1071 = vsel %vm1055, %v1013, %v995
    %v1072 = vsel %vm1056, %v1016, %v996
    %v1073 = vsel %vm1065, %v1007, %v997
    %v1074 = vsel %vm1066, %v1010, %v998
    %v1075 = vsel %vm1067, %v1013, %v999
    %v1076 = vsel %vm1068, %v1016, %v1000
    %v1077 = vsel %vm1017, inf, %v1001
    %v1078 = vsel %vm1018, inf, %v1002
    %v1079 = vsel %vm1019, inf, %v1003
    %v1080 = vsel %vm1020, inf, %v1004
    %v1081 = vsel %vm250, %v1077, inf
    %1082 = vmin.xlane.f32.xlu0 %v1081
    %v1083 = vpop.xlane.xlu0 %1082
    %v1084 = vsel %vm250, %v1078, inf
    %1085 = vmin.xlane.f32.xlu0 %v1084
    %v1086 = vpop.xlane.xlu0 %1085
    %v1087 = vsel %vm250, %v1079, inf
    %1088 = vmin.xlane.f32.xlu0 %v1087
    %v1089 = vpop.xlane.xlu0 %1088
    %v1090 = vsel %vm250, %v1080, inf
    %1091 = vmin.xlane.f32.xlu0 %v1090
    %v1092 = vpop.xlane.xlu0 %1091
    %vm1093 = vcmp.eq.f32.partialorder %v1077, %v1083
    %vm1094 = vcmp.eq.f32.partialorder %v1078, %v1086
    %vm1095 = vcmp.eq.f32.partialorder %v1079, %v1089
    %vm1096 = vcmp.eq.f32.partialorder %v1080, %v1092
    %v1097 = vsel %vm1093, 1, 0
    %v1098 = vsel %vm1094, 1, 0
    %v1099 = vsel %vm1095, 1, 0
    %v1100 = vsel %vm1096, 1, 0
    %v1101 = vcvt.s32.f32 %v1097
    %v1102 = vcvt.s32.f32 %v1098
    %v1103 = vcvt.s32.f32 %v1099
    %v1104 = vcvt.s32.f32 %v1100
    %v1105 = vsel %vm250, %v1101, 0.0
    %1106 = vadd.xlane.f32.xlu0 %v1105
    %v1107 = vpop.xlane.xlu0 %1106
    %v1108 = vsel %vm250, %v1102, 0.0
    %1109 = vadd.xlane.f32.xlu0 %v1108
    %v1110 = vpop.xlane.xlu0 %1109
    %v1111 = vsel %vm250, %v1103, 0.0
    %1112 = vadd.xlane.f32.xlu0 %v1111
    %v1113 = vpop.xlane.xlu0 %1112
    %v1114 = vsel %vm250, %v1104, 0.0
    %1115 = vadd.xlane.f32.xlu0 %v1114
    %v1116 = vpop.xlane.xlu0 %1115
    %v1117 = vadd.f32 %v1041, %v1107
    %v1118 = vadd.f32 %v1042, %v1110
    %v1119 = vadd.f32 %v1043, %v1113
    %v1120 = vadd.f32 %v1044, %v1116
    %vm1121 = vcmp.le.f32.partialorder %v1041, 15.0
    %vm1122 = vcmp.le.f32.partialorder %v1042, 15.0
    %vm1123 = vcmp.le.f32.partialorder %v1043, 15.0
    %vm1124 = vcmp.le.f32.partialorder %v1044, 15.0
    %vm1125 = vcmp.gt.f32.partialorder %v1117, 15.0
    %vm1126 = vcmp.gt.f32.partialorder %v1118, 15.0
    %vm1127 = vcmp.gt.f32.partialorder %v1119, 15.0
    %vm1128 = vcmp.gt.f32.partialorder %v1120, 15.0
    %vm1129 = vmand %vm1121, %vm1125
    %vm1130 = vmand %vm1122, %vm1126
    %vm1131 = vmand %vm1123, %vm1127
    %vm1132 = vmand %vm1124, %vm1128
    %vm1133 = vcmp.le.f32.partialorder %v1041, 30.0
    %vm1134 = vcmp.le.f32.partialorder %v1042, 30.0
    %vm1135 = vcmp.le.f32.partialorder %v1043, 30.0
    %vm1136 = vcmp.le.f32.partialorder %v1044, 30.0
    %vm1137 = vcmp.gt.f32.partialorder %v1117, 30.0
    %vm1138 = vcmp.gt.f32.partialorder %v1118, 30.0
    %vm1139 = vcmp.gt.f32.partialorder %v1119, 30.0
    %vm1140 = vcmp.gt.f32.partialorder %v1120, 30.0
    %vm1141 = vmand %vm1133, %vm1137
    %vm1142 = vmand %vm1134, %vm1138
    %vm1143 = vmand %vm1135, %vm1139
    %vm1144 = vmand %vm1136, %vm1140
    %v1145 = vsel %vm1129, %v1083, %v1069
    %v1146 = vsel %vm1130, %v1086, %v1070
    %v1147 = vsel %vm1131, %v1089, %v1071
    %v1148 = vsel %vm1132, %v1092, %v1072
    %v1149 = vsel %vm1141, %v1083, %v1073
    %v1150 = vsel %vm1142, %v1086, %v1074
    %v1151 = vsel %vm1143, %v1089, %v1075
    %v1152 = vsel %vm1144, %v1092, %v1076
    %v1153 = vsel %vm1093, inf, %v1077
    %v1154 = vsel %vm1094, inf, %v1078
    %v1155 = vsel %vm1095, inf, %v1079
    %v1156 = vsel %vm1096, inf, %v1080
    %v1157 = vsel %vm250, %v1153, inf
    %1158 = vmin.xlane.f32.xlu0 %v1157
    %v1159 = vpop.xlane.xlu0 %1158
    %v1160 = vsel %vm250, %v1154, inf
    %1161 = vmin.xlane.f32.xlu0 %v1160
    %v1162 = vpop.xlane.xlu0 %1161
    %v1163 = vsel %vm250, %v1155, inf
    %1164 = vmin.xlane.f32.xlu0 %v1163
    %v1165 = vpop.xlane.xlu0 %1164
    %v1166 = vsel %vm250, %v1156, inf
    %1167 = vmin.xlane.f32.xlu0 %v1166
    %v1168 = vpop.xlane.xlu0 %1167
    %vm1169 = vcmp.eq.f32.partialorder %v1153, %v1159
    %vm1170 = vcmp.eq.f32.partialorder %v1154, %v1162
    %vm1171 = vcmp.eq.f32.partialorder %v1155, %v1165
    %vm1172 = vcmp.eq.f32.partialorder %v1156, %v1168
    %v1173 = vsel %vm1169, 1, 0
    %v1174 = vsel %vm1170, 1, 0
    %v1175 = vsel %vm1171, 1, 0
    %v1176 = vsel %vm1172, 1, 0
    %v1177 = vcvt.s32.f32 %v1173
    %v1178 = vcvt.s32.f32 %v1174
    %v1179 = vcvt.s32.f32 %v1175
    %v1180 = vcvt.s32.f32 %v1176
    %v1181 = vsel %vm250, %v1177, 0.0
    %1182 = vadd.xlane.f32.xlu0 %v1181
    %v1183 = vpop.xlane.xlu0 %1182
    %v1184 = vsel %vm250, %v1178, 0.0
    %1185 = vadd.xlane.f32.xlu0 %v1184
    %v1186 = vpop.xlane.xlu0 %1185
    %v1187 = vsel %vm250, %v1179, 0.0
    %1188 = vadd.xlane.f32.xlu0 %v1187
    %v1189 = vpop.xlane.xlu0 %1188
    %v1190 = vsel %vm250, %v1180, 0.0
    %1191 = vadd.xlane.f32.xlu0 %v1190
    %v1192 = vpop.xlane.xlu0 %1191
    %v1193 = vadd.f32 %v1117, %v1183
    %v1194 = vadd.f32 %v1118, %v1186
    %v1195 = vadd.f32 %v1119, %v1189
    %v1196 = vadd.f32 %v1120, %v1192
    %vm1197 = vcmp.le.f32.partialorder %v1117, 15.0
    %vm1198 = vcmp.le.f32.partialorder %v1118, 15.0
    %vm1199 = vcmp.le.f32.partialorder %v1119, 15.0
    %vm1200 = vcmp.le.f32.partialorder %v1120, 15.0
    %vm1201 = vcmp.gt.f32.partialorder %v1193, 15.0
    %vm1202 = vcmp.gt.f32.partialorder %v1194, 15.0
    %vm1203 = vcmp.gt.f32.partialorder %v1195, 15.0
    %vm1204 = vcmp.gt.f32.partialorder %v1196, 15.0
    %vm1205 = vmand %vm1197, %vm1201
    %vm1206 = vmand %vm1198, %vm1202
    %vm1207 = vmand %vm1199, %vm1203
    %vm1208 = vmand %vm1200, %vm1204
    %vm1209 = vcmp.le.f32.partialorder %v1117, 30.0
    %vm1210 = vcmp.le.f32.partialorder %v1118, 30.0
    %vm1211 = vcmp.le.f32.partialorder %v1119, 30.0
    %vm1212 = vcmp.le.f32.partialorder %v1120, 30.0
    %vm1213 = vcmp.gt.f32.partialorder %v1193, 30.0
    %vm1214 = vcmp.gt.f32.partialorder %v1194, 30.0
    %vm1215 = vcmp.gt.f32.partialorder %v1195, 30.0
    %vm1216 = vcmp.gt.f32.partialorder %v1196, 30.0
    %vm1217 = vmand %vm1209, %vm1213
    %vm1218 = vmand %vm1210, %vm1214
    %vm1219 = vmand %vm1211, %vm1215
    %vm1220 = vmand %vm1212, %vm1216
    %v1221 = vsel %vm1205, %v1159, %v1145
    %v1222 = vsel %vm1206, %v1162, %v1146
    %v1223 = vsel %vm1207, %v1165, %v1147
    %v1224 = vsel %vm1208, %v1168, %v1148
    %v1225 = vsel %vm1217, %v1159, %v1149
    %v1226 = vsel %vm1218, %v1162, %v1150
    %v1227 = vsel %vm1219, %v1165, %v1151
    %v1228 = vsel %vm1220, %v1168, %v1152
    %v1229 = vsel %vm1169, inf, %v1153
    %v1230 = vsel %vm1170, inf, %v1154
    %v1231 = vsel %vm1171, inf, %v1155
    %v1232 = vsel %vm1172, inf, %v1156
    %v1233 = vsel %vm250, %v1229, inf
    %1234 = vmin.xlane.f32.xlu0 %v1233
    %v1235 = vpop.xlane.xlu0 %1234
    %v1236 = vsel %vm250, %v1230, inf
    %1237 = vmin.xlane.f32.xlu0 %v1236
    %v1238 = vpop.xlane.xlu0 %1237
    %v1239 = vsel %vm250, %v1231, inf
    %1240 = vmin.xlane.f32.xlu0 %v1239
    %v1241 = vpop.xlane.xlu0 %1240
    %v1242 = vsel %vm250, %v1232, inf
    %1243 = vmin.xlane.f32.xlu0 %v1242
    %v1244 = vpop.xlane.xlu0 %1243
    %vm1245 = vcmp.eq.f32.partialorder %v1229, %v1235
    %vm1246 = vcmp.eq.f32.partialorder %v1230, %v1238
    %vm1247 = vcmp.eq.f32.partialorder %v1231, %v1241
    %vm1248 = vcmp.eq.f32.partialorder %v1232, %v1244
    %v1249 = vsel %vm1245, 1, 0
    %v1250 = vsel %vm1246, 1, 0
    %v1251 = vsel %vm1247, 1, 0
    %v1252 = vsel %vm1248, 1, 0
    %v1253 = vcvt.s32.f32 %v1249
    %v1254 = vcvt.s32.f32 %v1250
    %v1255 = vcvt.s32.f32 %v1251
    %v1256 = vcvt.s32.f32 %v1252
    %v1257 = vsel %vm250, %v1253, 0.0
    %1258 = vadd.xlane.f32.xlu0 %v1257
    %v1259 = vpop.xlane.xlu0 %1258
    %v1260 = vsel %vm250, %v1254, 0.0
    %1261 = vadd.xlane.f32.xlu0 %v1260
    %v1262 = vpop.xlane.xlu0 %1261
    %v1263 = vsel %vm250, %v1255, 0.0
    %1264 = vadd.xlane.f32.xlu0 %v1263
    %v1265 = vpop.xlane.xlu0 %1264
    %v1266 = vsel %vm250, %v1256, 0.0
    %1267 = vadd.xlane.f32.xlu0 %v1266
    %v1268 = vpop.xlane.xlu0 %1267
    %v1269 = vadd.f32 %v1193, %v1259
    %v1270 = vadd.f32 %v1194, %v1262
    %v1271 = vadd.f32 %v1195, %v1265
    %v1272 = vadd.f32 %v1196, %v1268
    %vm1273 = vcmp.le.f32.partialorder %v1193, 15.0
    %vm1274 = vcmp.le.f32.partialorder %v1194, 15.0
    %vm1275 = vcmp.le.f32.partialorder %v1195, 15.0
    %vm1276 = vcmp.le.f32.partialorder %v1196, 15.0
    %vm1277 = vcmp.gt.f32.partialorder %v1269, 15.0
    %vm1278 = vcmp.gt.f32.partialorder %v1270, 15.0
    %vm1279 = vcmp.gt.f32.partialorder %v1271, 15.0
    %vm1280 = vcmp.gt.f32.partialorder %v1272, 15.0
    %vm1281 = vmand %vm1273, %vm1277
    %vm1282 = vmand %vm1274, %vm1278
    %vm1283 = vmand %vm1275, %vm1279
    %vm1284 = vmand %vm1276, %vm1280
    %vm1285 = vcmp.le.f32.partialorder %v1193, 30.0
    %vm1286 = vcmp.le.f32.partialorder %v1194, 30.0
    %vm1287 = vcmp.le.f32.partialorder %v1195, 30.0
    %vm1288 = vcmp.le.f32.partialorder %v1196, 30.0
    %vm1289 = vcmp.gt.f32.partialorder %v1269, 30.0
    %vm1290 = vcmp.gt.f32.partialorder %v1270, 30.0
    %vm1291 = vcmp.gt.f32.partialorder %v1271, 30.0
    %vm1292 = vcmp.gt.f32.partialorder %v1272, 30.0
    %vm1293 = vmand %vm1285, %vm1289
    %vm1294 = vmand %vm1286, %vm1290
    %vm1295 = vmand %vm1287, %vm1291
    %vm1296 = vmand %vm1288, %vm1292
    %v1297 = vsel %vm1281, %v1235, %v1221
    %v1298 = vsel %vm1282, %v1238, %v1222
    %v1299 = vsel %vm1283, %v1241, %v1223
    %v1300 = vsel %vm1284, %v1244, %v1224
    %v1301 = vsel %vm1293, %v1235, %v1225
    %v1302 = vsel %vm1294, %v1238, %v1226
    %v1303 = vsel %vm1295, %v1241, %v1227
    %v1304 = vsel %vm1296, %v1244, %v1228
    %v1305 = vsel %vm1245, inf, %v1229
    %v1306 = vsel %vm1246, inf, %v1230
    %v1307 = vsel %vm1247, inf, %v1231
    %v1308 = vsel %vm1248, inf, %v1232
    %v1309 = vsel %vm250, %v1305, inf
    %1310 = vmin.xlane.f32.xlu0 %v1309
    %v1311 = vpop.xlane.xlu0 %1310
    %v1312 = vsel %vm250, %v1306, inf
    %1313 = vmin.xlane.f32.xlu0 %v1312
    %v1314 = vpop.xlane.xlu0 %1313
    %v1315 = vsel %vm250, %v1307, inf
    %1316 = vmin.xlane.f32.xlu0 %v1315
    %v1317 = vpop.xlane.xlu0 %1316
    %v1318 = vsel %vm250, %v1308, inf
    %1319 = vmin.xlane.f32.xlu0 %v1318
    %v1320 = vpop.xlane.xlu0 %1319
    %vm1321 = vcmp.eq.f32.partialorder %v1305, %v1311
    %vm1322 = vcmp.eq.f32.partialorder %v1306, %v1314
    %vm1323 = vcmp.eq.f32.partialorder %v1307, %v1317
    %vm1324 = vcmp.eq.f32.partialorder %v1308, %v1320
    %v1325 = vsel %vm1321, 1, 0
    %v1326 = vsel %vm1322, 1, 0
    %v1327 = vsel %vm1323, 1, 0
    %v1328 = vsel %vm1324, 1, 0
    %v1329 = vcvt.s32.f32 %v1325
    %v1330 = vcvt.s32.f32 %v1326
    %v1331 = vcvt.s32.f32 %v1327
    %v1332 = vcvt.s32.f32 %v1328
    %v1333 = vsel %vm250, %v1329, 0.0
    %1334 = vadd.xlane.f32.xlu0 %v1333
    %v1335 = vpop.xlane.xlu0 %1334
    %v1336 = vsel %vm250, %v1330, 0.0
    %1337 = vadd.xlane.f32.xlu0 %v1336
    %v1338 = vpop.xlane.xlu0 %1337
    %v1339 = vsel %vm250, %v1331, 0.0
    %1340 = vadd.xlane.f32.xlu0 %v1339
    %v1341 = vpop.xlane.xlu0 %1340
    %v1342 = vsel %vm250, %v1332, 0.0
    %1343 = vadd.xlane.f32.xlu0 %v1342
    %v1344 = vpop.xlane.xlu0 %1343
    %v1345 = vadd.f32 %v1269, %v1335
    %v1346 = vadd.f32 %v1270, %v1338
    %v1347 = vadd.f32 %v1271, %v1341
    %v1348 = vadd.f32 %v1272, %v1344
    %vm1349 = vcmp.le.f32.partialorder %v1269, 15.0
    %vm1350 = vcmp.le.f32.partialorder %v1270, 15.0
    %vm1351 = vcmp.le.f32.partialorder %v1271, 15.0
    %vm1352 = vcmp.le.f32.partialorder %v1272, 15.0
    %vm1353 = vcmp.gt.f32.partialorder %v1345, 15.0
    %vm1354 = vcmp.gt.f32.partialorder %v1346, 15.0
    %vm1355 = vcmp.gt.f32.partialorder %v1347, 15.0
    %vm1356 = vcmp.gt.f32.partialorder %v1348, 15.0
    %vm1357 = vmand %vm1349, %vm1353
    %vm1358 = vmand %vm1350, %vm1354
    %vm1359 = vmand %vm1351, %vm1355
    %vm1360 = vmand %vm1352, %vm1356
    %vm1361 = vcmp.le.f32.partialorder %v1269, 30.0
    %vm1362 = vcmp.le.f32.partialorder %v1270, 30.0
    %vm1363 = vcmp.le.f32.partialorder %v1271, 30.0
    %vm1364 = vcmp.le.f32.partialorder %v1272, 30.0
    %vm1365 = vcmp.gt.f32.partialorder %v1345, 30.0
    %vm1366 = vcmp.gt.f32.partialorder %v1346, 30.0
    %vm1367 = vcmp.gt.f32.partialorder %v1347, 30.0
    %vm1368 = vcmp.gt.f32.partialorder %v1348, 30.0
    %vm1369 = vmand %vm1361, %vm1365
    %vm1370 = vmand %vm1362, %vm1366
    %vm1371 = vmand %vm1363, %vm1367
    %vm1372 = vmand %vm1364, %vm1368
    %v1373 = vsel %vm1357, %v1311, %v1297
    %v1374 = vsel %vm1358, %v1314, %v1298
    %v1375 = vsel %vm1359, %v1317, %v1299
    %v1376 = vsel %vm1360, %v1320, %v1300
    %v1377 = vsel %vm1369, %v1311, %v1301
    %v1378 = vsel %vm1370, %v1314, %v1302
    %v1379 = vsel %vm1371, %v1317, %v1303
    %v1380 = vsel %vm1372, %v1320, %v1304
    %v1381 = vsel %vm1321, inf, %v1305
    %v1382 = vsel %vm1322, inf, %v1306
    %v1383 = vsel %vm1323, inf, %v1307
    %v1384 = vsel %vm1324, inf, %v1308
    %v1385 = vsel %vm250, %v1381, inf
    %1386 = vmin.xlane.f32.xlu0 %v1385
    %v1387 = vpop.xlane.xlu0 %1386
    %v1388 = vsel %vm250, %v1382, inf
    %1389 = vmin.xlane.f32.xlu0 %v1388
    %v1390 = vpop.xlane.xlu0 %1389
    %v1391 = vsel %vm250, %v1383, inf
    %1392 = vmin.xlane.f32.xlu0 %v1391
    %v1393 = vpop.xlane.xlu0 %1392
    %v1394 = vsel %vm250, %v1384, inf
    %1395 = vmin.xlane.f32.xlu0 %v1394
    %v1396 = vpop.xlane.xlu0 %1395
    %vm1397 = vcmp.eq.f32.partialorder %v1381, %v1387
    %vm1398 = vcmp.eq.f32.partialorder %v1382, %v1390
    %vm1399 = vcmp.eq.f32.partialorder %v1383, %v1393
    %vm1400 = vcmp.eq.f32.partialorder %v1384, %v1396
    %v1401 = vsel %vm1397, 1, 0
    %v1402 = vsel %vm1398, 1, 0
    %v1403 = vsel %vm1399, 1, 0
    %v1404 = vsel %vm1400, 1, 0
    %v1405 = vcvt.s32.f32 %v1401
    %v1406 = vcvt.s32.f32 %v1402
    %v1407 = vcvt.s32.f32 %v1403
    %v1408 = vcvt.s32.f32 %v1404
    %v1409 = vsel %vm250, %v1405, 0.0
    %1410 = vadd.xlane.f32.xlu0 %v1409
    %v1411 = vpop.xlane.xlu0 %1410
    %v1412 = vsel %vm250, %v1406, 0.0
    %1413 = vadd.xlane.f32.xlu0 %v1412
    %v1414 = vpop.xlane.xlu0 %1413
    %v1415 = vsel %vm250, %v1407, 0.0
    %1416 = vadd.xlane.f32.xlu0 %v1415
    %v1417 = vpop.xlane.xlu0 %1416
    %v1418 = vsel %vm250, %v1408, 0.0
    %1419 = vadd.xlane.f32.xlu0 %v1418
    %v1420 = vpop.xlane.xlu0 %1419
    %v1421 = vadd.f32 %v1345, %v1411
    %v1422 = vadd.f32 %v1346, %v1414
    %v1423 = vadd.f32 %v1347, %v1417
    %v1424 = vadd.f32 %v1348, %v1420
    %vm1425 = vcmp.le.f32.partialorder %v1345, 15.0
    %vm1426 = vcmp.le.f32.partialorder %v1346, 15.0
    %vm1427 = vcmp.le.f32.partialorder %v1347, 15.0
    %vm1428 = vcmp.le.f32.partialorder %v1348, 15.0
    %vm1429 = vcmp.gt.f32.partialorder %v1421, 15.0
    %vm1430 = vcmp.gt.f32.partialorder %v1422, 15.0
    %vm1431 = vcmp.gt.f32.partialorder %v1423, 15.0
    %vm1432 = vcmp.gt.f32.partialorder %v1424, 15.0
    %vm1433 = vmand %vm1425, %vm1429
    %vm1434 = vmand %vm1426, %vm1430
    %vm1435 = vmand %vm1427, %vm1431
    %vm1436 = vmand %vm1428, %vm1432
    %vm1437 = vcmp.le.f32.partialorder %v1345, 30.0
    %vm1438 = vcmp.le.f32.partialorder %v1346, 30.0
    %vm1439 = vcmp.le.f32.partialorder %v1347, 30.0
    %vm1440 = vcmp.le.f32.partialorder %v1348, 30.0
    %vm1441 = vcmp.gt.f32.partialorder %v1421, 30.0
    %vm1442 = vcmp.gt.f32.partialorder %v1422, 30.0
    %vm1443 = vcmp.gt.f32.partialorder %v1423, 30.0
    %vm1444 = vcmp.gt.f32.partialorder %v1424, 30.0
    %vm1445 = vmand %vm1437, %vm1441
    %vm1446 = vmand %vm1438, %vm1442
    %vm1447 = vmand %vm1439, %vm1443
    %vm1448 = vmand %vm1440, %vm1444
    %v1449 = vsel %vm1433, %v1387, %v1373
    %v1450 = vsel %vm1434, %v1390, %v1374
    %v1451 = vsel %vm1435, %v1393, %v1375
    %v1452 = vsel %vm1436, %v1396, %v1376
    %v1453 = vsel %vm1445, %v1387, %v1377
    %v1454 = vsel %vm1446, %v1390, %v1378
    %v1455 = vsel %vm1447, %v1393, %v1379
    %v1456 = vsel %vm1448, %v1396, %v1380
    %v1457 = vsel %vm1397, inf, %v1381
    %v1458 = vsel %vm1398, inf, %v1382
    %v1459 = vsel %vm1399, inf, %v1383
    %v1460 = vsel %vm1400, inf, %v1384
    %v1461 = vsel %vm250, %v1457, inf
    %1462 = vmin.xlane.f32.xlu0 %v1461
    %v1463 = vpop.xlane.xlu0 %1462
    %v1464 = vsel %vm250, %v1458, inf
    %1465 = vmin.xlane.f32.xlu0 %v1464
    %v1466 = vpop.xlane.xlu0 %1465
    %v1467 = vsel %vm250, %v1459, inf
    %1468 = vmin.xlane.f32.xlu0 %v1467
    %v1469 = vpop.xlane.xlu0 %1468
    %v1470 = vsel %vm250, %v1460, inf
    %1471 = vmin.xlane.f32.xlu0 %v1470
    %v1472 = vpop.xlane.xlu0 %1471
    %vm1473 = vcmp.eq.f32.partialorder %v1457, %v1463
    %vm1474 = vcmp.eq.f32.partialorder %v1458, %v1466
    %vm1475 = vcmp.eq.f32.partialorder %v1459, %v1469
    %vm1476 = vcmp.eq.f32.partialorder %v1460, %v1472
    %v1477 = vsel %vm1473, 1, 0
    %v1478 = vsel %vm1474, 1, 0
    %v1479 = vsel %vm1475, 1, 0
    %v1480 = vsel %vm1476, 1, 0
    %v1481 = vcvt.s32.f32 %v1477
    %v1482 = vcvt.s32.f32 %v1478
    %v1483 = vcvt.s32.f32 %v1479
    %v1484 = vcvt.s32.f32 %v1480
    %v1485 = vsel %vm250, %v1481, 0.0
    %1486 = vadd.xlane.f32.xlu0 %v1485
    %v1487 = vpop.xlane.xlu0 %1486
    %v1488 = vsel %vm250, %v1482, 0.0
    %1489 = vadd.xlane.f32.xlu0 %v1488
    %v1490 = vpop.xlane.xlu0 %1489
    %v1491 = vsel %vm250, %v1483, 0.0
    %1492 = vadd.xlane.f32.xlu0 %v1491
    %v1493 = vpop.xlane.xlu0 %1492
    %v1494 = vsel %vm250, %v1484, 0.0
    %1495 = vadd.xlane.f32.xlu0 %v1494
    %v1496 = vpop.xlane.xlu0 %1495
    %v1497 = vadd.f32 %v1421, %v1487
    %v1498 = vadd.f32 %v1422, %v1490
    %v1499 = vadd.f32 %v1423, %v1493
    %v1500 = vadd.f32 %v1424, %v1496
    %vm1501 = vcmp.le.f32.partialorder %v1421, 15.0
    %vm1502 = vcmp.le.f32.partialorder %v1422, 15.0
    %vm1503 = vcmp.le.f32.partialorder %v1423, 15.0
    %vm1504 = vcmp.le.f32.partialorder %v1424, 15.0
    %vm1505 = vcmp.gt.f32.partialorder %v1497, 15.0
    %vm1506 = vcmp.gt.f32.partialorder %v1498, 15.0
    %vm1507 = vcmp.gt.f32.partialorder %v1499, 15.0
    %vm1508 = vcmp.gt.f32.partialorder %v1500, 15.0
    %vm1509 = vmand %vm1501, %vm1505
    %vm1510 = vmand %vm1502, %vm1506
    %vm1511 = vmand %vm1503, %vm1507
    %vm1512 = vmand %vm1504, %vm1508
    %vm1513 = vcmp.le.f32.partialorder %v1421, 30.0
    %vm1514 = vcmp.le.f32.partialorder %v1422, 30.0
    %vm1515 = vcmp.le.f32.partialorder %v1423, 30.0
    %vm1516 = vcmp.le.f32.partialorder %v1424, 30.0
    %vm1517 = vcmp.gt.f32.partialorder %v1497, 30.0
    %vm1518 = vcmp.gt.f32.partialorder %v1498, 30.0
    %vm1519 = vcmp.gt.f32.partialorder %v1499, 30.0
    %vm1520 = vcmp.gt.f32.partialorder %v1500, 30.0
    %vm1521 = vmand %vm1513, %vm1517
    %vm1522 = vmand %vm1514, %vm1518
    %vm1523 = vmand %vm1515, %vm1519
    %vm1524 = vmand %vm1516, %vm1520
    %v1525 = vsel %vm1509, %v1463, %v1449
    %v1526 = vsel %vm1510, %v1466, %v1450
    %v1527 = vsel %vm1511, %v1469, %v1451
    %v1528 = vsel %vm1512, %v1472, %v1452
    %v1529 = vsel %vm1521, %v1463, %v1453
    %v1530 = vsel %vm1522, %v1466, %v1454
    %v1531 = vsel %vm1523, %v1469, %v1455
    %v1532 = vsel %vm1524, %v1472, %v1456
    %v1533 = vsel %vm1473, inf, %v1457
    %v1534 = vsel %vm1474, inf, %v1458
    %v1535 = vsel %vm1475, inf, %v1459
    %v1536 = vsel %vm1476, inf, %v1460
    %v1537 = vsel %vm250, %v1533, inf
    %1538 = vmin.xlane.f32.xlu0 %v1537
    %v1539 = vpop.xlane.xlu0 %1538
    %v1540 = vsel %vm250, %v1534, inf
    %1541 = vmin.xlane.f32.xlu0 %v1540
    %v1542 = vpop.xlane.xlu0 %1541
    %v1543 = vsel %vm250, %v1535, inf
    %1544 = vmin.xlane.f32.xlu0 %v1543
    %v1545 = vpop.xlane.xlu0 %1544
    %v1546 = vsel %vm250, %v1536, inf
    %1547 = vmin.xlane.f32.xlu0 %v1546
    %v1548 = vpop.xlane.xlu0 %1547
    %vm1549 = vcmp.eq.f32.partialorder %v1533, %v1539
    %vm1550 = vcmp.eq.f32.partialorder %v1534, %v1542
    %vm1551 = vcmp.eq.f32.partialorder %v1535, %v1545
    %vm1552 = vcmp.eq.f32.partialorder %v1536, %v1548
    %v1553 = vsel %vm1549, 1, 0
    %v1554 = vsel %vm1550, 1, 0
    %v1555 = vsel %vm1551, 1, 0
    %v1556 = vsel %vm1552, 1, 0
    %v1557 = vcvt.s32.f32 %v1553
    %v1558 = vcvt.s32.f32 %v1554
    %v1559 = vcvt.s32.f32 %v1555
    %v1560 = vcvt.s32.f32 %v1556
    %v1561 = vsel %vm250, %v1557, 0.0
    %1562 = vadd.xlane.f32.xlu0 %v1561
    %v1563 = vpop.xlane.xlu0 %1562
    %v1564 = vsel %vm250, %v1558, 0.0
    %1565 = vadd.xlane.f32.xlu0 %v1564
    %v1566 = vpop.xlane.xlu0 %1565
    %v1567 = vsel %vm250, %v1559, 0.0
    %1568 = vadd.xlane.f32.xlu0 %v1567
    %v1569 = vpop.xlane.xlu0 %1568
    %v1570 = vsel %vm250, %v1560, 0.0
    %1571 = vadd.xlane.f32.xlu0 %v1570
    %v1572 = vpop.xlane.xlu0 %1571
    %v1573 = vadd.f32 %v1497, %v1563
    %v1574 = vadd.f32 %v1498, %v1566
    %v1575 = vadd.f32 %v1499, %v1569
    %v1576 = vadd.f32 %v1500, %v1572
    %vm1577 = vcmp.le.f32.partialorder %v1497, 15.0
    %vm1578 = vcmp.le.f32.partialorder %v1498, 15.0
    %vm1579 = vcmp.le.f32.partialorder %v1499, 15.0
    %vm1580 = vcmp.le.f32.partialorder %v1500, 15.0
    %vm1581 = vcmp.gt.f32.partialorder %v1573, 15.0
    %vm1582 = vcmp.gt.f32.partialorder %v1574, 15.0
    %vm1583 = vcmp.gt.f32.partialorder %v1575, 15.0
    %vm1584 = vcmp.gt.f32.partialorder %v1576, 15.0
    %vm1585 = vmand %vm1577, %vm1581
    %vm1586 = vmand %vm1578, %vm1582
    %vm1587 = vmand %vm1579, %vm1583
    %vm1588 = vmand %vm1580, %vm1584
    %vm1589 = vcmp.le.f32.partialorder %v1497, 30.0
    %vm1590 = vcmp.le.f32.partialorder %v1498, 30.0
    %vm1591 = vcmp.le.f32.partialorder %v1499, 30.0
    %vm1592 = vcmp.le.f32.partialorder %v1500, 30.0
    %vm1593 = vcmp.gt.f32.partialorder %v1573, 30.0
    %vm1594 = vcmp.gt.f32.partialorder %v1574, 30.0
    %vm1595 = vcmp.gt.f32.partialorder %v1575, 30.0
    %vm1596 = vcmp.gt.f32.partialorder %v1576, 30.0
    %vm1597 = vmand %vm1589, %vm1593
    %vm1598 = vmand %vm1590, %vm1594
    %vm1599 = vmand %vm1591, %vm1595
    %vm1600 = vmand %vm1592, %vm1596
    %v1601 = vsel %vm1585, %v1539, %v1525
    %v1602 = vsel %vm1586, %v1542, %v1526
    %v1603 = vsel %vm1587, %v1545, %v1527
    %v1604 = vsel %vm1588, %v1548, %v1528
    %v1605 = vsel %vm1597, %v1539, %v1529
    %v1606 = vsel %vm1598, %v1542, %v1530
    %v1607 = vsel %vm1599, %v1545, %v1531
    %v1608 = vsel %vm1600, %v1548, %v1532
    %v1609 = vsel %vm1549, inf, %v1533
    %v1610 = vsel %vm1550, inf, %v1534
    %v1611 = vsel %vm1551, inf, %v1535
    %v1612 = vsel %vm1552, inf, %v1536
    %v1613 = vsel %vm250, %v1609, inf
    %1614 = vmin.xlane.f32.xlu0 %v1613
    %v1615 = vpop.xlane.xlu0 %1614
    %v1616 = vsel %vm250, %v1610, inf
    %1617 = vmin.xlane.f32.xlu0 %v1616
    %v1618 = vpop.xlane.xlu0 %1617
    %v1619 = vsel %vm250, %v1611, inf
    %1620 = vmin.xlane.f32.xlu0 %v1619
    %v1621 = vpop.xlane.xlu0 %1620
    %v1622 = vsel %vm250, %v1612, inf
    %1623 = vmin.xlane.f32.xlu0 %v1622
    %v1624 = vpop.xlane.xlu0 %1623
    %vm1625 = vcmp.eq.f32.partialorder %v1609, %v1615
    %vm1626 = vcmp.eq.f32.partialorder %v1610, %v1618
    %vm1627 = vcmp.eq.f32.partialorder %v1611, %v1621
    %vm1628 = vcmp.eq.f32.partialorder %v1612, %v1624
    %v1629 = vsel %vm1625, 1, 0
    %v1630 = vsel %vm1626, 1, 0
    %v1631 = vsel %vm1627, 1, 0
    %v1632 = vsel %vm1628, 1, 0
    %v1633 = vcvt.s32.f32 %v1629
    %v1634 = vcvt.s32.f32 %v1630
    %v1635 = vcvt.s32.f32 %v1631
    %v1636 = vcvt.s32.f32 %v1632
    %v1637 = vsel %vm250, %v1633, 0.0
    %1638 = vadd.xlane.f32.xlu0 %v1637
    %v1639 = vpop.xlane.xlu0 %1638
    %v1640 = vsel %vm250, %v1634, 0.0
    %1641 = vadd.xlane.f32.xlu0 %v1640
    %v1642 = vpop.xlane.xlu0 %1641
    %v1643 = vsel %vm250, %v1635, 0.0
    %1644 = vadd.xlane.f32.xlu0 %v1643
    %v1645 = vpop.xlane.xlu0 %1644
    %v1646 = vsel %vm250, %v1636, 0.0
    %1647 = vadd.xlane.f32.xlu0 %v1646
    %v1648 = vpop.xlane.xlu0 %1647
    %v1649 = vadd.f32 %v1573, %v1639
    %v1650 = vadd.f32 %v1574, %v1642
    %v1651 = vadd.f32 %v1575, %v1645
    %v1652 = vadd.f32 %v1576, %v1648
    %vm1653 = vcmp.le.f32.partialorder %v1573, 15.0
    %vm1654 = vcmp.le.f32.partialorder %v1574, 15.0
    %vm1655 = vcmp.le.f32.partialorder %v1575, 15.0
    %vm1656 = vcmp.le.f32.partialorder %v1576, 15.0
    %vm1657 = vcmp.gt.f32.partialorder %v1649, 15.0
    %vm1658 = vcmp.gt.f32.partialorder %v1650, 15.0
    %vm1659 = vcmp.gt.f32.partialorder %v1651, 15.0
    %vm1660 = vcmp.gt.f32.partialorder %v1652, 15.0
    %vm1661 = vmand %vm1653, %vm1657
    %vm1662 = vmand %vm1654, %vm1658
    %vm1663 = vmand %vm1655, %vm1659
    %vm1664 = vmand %vm1656, %vm1660
    %vm1665 = vcmp.le.f32.partialorder %v1573, 30.0
    %vm1666 = vcmp.le.f32.partialorder %v1574, 30.0
    %vm1667 = vcmp.le.f32.partialorder %v1575, 30.0
    %vm1668 = vcmp.le.f32.partialorder %v1576, 30.0
    %vm1669 = vcmp.gt.f32.partialorder %v1649, 30.0
    %vm1670 = vcmp.gt.f32.partialorder %v1650, 30.0
    %vm1671 = vcmp.gt.f32.partialorder %v1651, 30.0
    %vm1672 = vcmp.gt.f32.partialorder %v1652, 30.0
    %vm1673 = vmand %vm1665, %vm1669
    %vm1674 = vmand %vm1666, %vm1670
    %vm1675 = vmand %vm1667, %vm1671
    %vm1676 = vmand %vm1668, %vm1672
    %v1677 = vsel %vm1661, %v1615, %v1601
    %v1678 = vsel %vm1662, %v1618, %v1602
    %v1679 = vsel %vm1663, %v1621, %v1603
    %v1680 = vsel %vm1664, %v1624, %v1604
    %v1681 = vsel %vm1673, %v1615, %v1605
    %v1682 = vsel %vm1674, %v1618, %v1606
    %v1683 = vsel %vm1675, %v1621, %v1607
    %v1684 = vsel %vm1676, %v1624, %v1608
    %v1685 = vsel %vm1625, inf, %v1609
    %v1686 = vsel %vm1626, inf, %v1610
    %v1687 = vsel %vm1627, inf, %v1611
    %v1688 = vsel %vm1628, inf, %v1612
    %v1689 = vsel %vm250, %v1685, inf
    %1690 = vmin.xlane.f32.xlu0 %v1689
    %v1691 = vpop.xlane.xlu0 %1690
    %v1692 = vsel %vm250, %v1686, inf
    %1693 = vmin.xlane.f32.xlu0 %v1692
    %v1694 = vpop.xlane.xlu0 %1693
    %v1695 = vsel %vm250, %v1687, inf
    %1696 = vmin.xlane.f32.xlu0 %v1695
    %v1697 = vpop.xlane.xlu0 %1696
    %v1698 = vsel %vm250, %v1688, inf
    %1699 = vmin.xlane.f32.xlu0 %v1698
    %v1700 = vpop.xlane.xlu0 %1699
    %vm1701 = vcmp.eq.f32.partialorder %v1685, %v1691
    %vm1702 = vcmp.eq.f32.partialorder %v1686, %v1694
    %vm1703 = vcmp.eq.f32.partialorder %v1687, %v1697
    %vm1704 = vcmp.eq.f32.partialorder %v1688, %v1700
    %v1705 = vsel %vm1701, 1, 0
    %v1706 = vsel %vm1702, 1, 0
    %v1707 = vsel %vm1703, 1, 0
    %v1708 = vsel %vm1704, 1, 0
    %v1709 = vcvt.s32.f32 %v1705
    %v1710 = vcvt.s32.f32 %v1706
    %v1711 = vcvt.s32.f32 %v1707
    %v1712 = vcvt.s32.f32 %v1708
    %v1713 = vsel %vm250, %v1709, 0.0
    %1714 = vadd.xlane.f32.xlu0 %v1713
    %v1715 = vpop.xlane.xlu0 %1714
    %v1716 = vsel %vm250, %v1710, 0.0
    %1717 = vadd.xlane.f32.xlu0 %v1716
    %v1718 = vpop.xlane.xlu0 %1717
    %v1719 = vsel %vm250, %v1711, 0.0
    %1720 = vadd.xlane.f32.xlu0 %v1719
    %v1721 = vpop.xlane.xlu0 %1720
    %v1722 = vsel %vm250, %v1712, 0.0
    %1723 = vadd.xlane.f32.xlu0 %v1722
    %v1724 = vpop.xlane.xlu0 %1723
    %v1725 = vadd.f32 %v1649, %v1715
    %v1726 = vadd.f32 %v1650, %v1718
    %v1727 = vadd.f32 %v1651, %v1721
    %v1728 = vadd.f32 %v1652, %v1724
    %vm1729 = vcmp.le.f32.partialorder %v1649, 15.0
    %vm1730 = vcmp.le.f32.partialorder %v1650, 15.0
    %vm1731 = vcmp.le.f32.partialorder %v1651, 15.0
    %vm1732 = vcmp.le.f32.partialorder %v1652, 15.0
    %vm1733 = vcmp.gt.f32.partialorder %v1725, 15.0
    %vm1734 = vcmp.gt.f32.partialorder %v1726, 15.0
    %vm1735 = vcmp.gt.f32.partialorder %v1727, 15.0
    %vm1736 = vcmp.gt.f32.partialorder %v1728, 15.0
    %vm1737 = vmand %vm1729, %vm1733
    %vm1738 = vmand %vm1730, %vm1734
    %vm1739 = vmand %vm1731, %vm1735
    %vm1740 = vmand %vm1732, %vm1736
    %vm1741 = vcmp.le.f32.partialorder %v1649, 30.0
    %vm1742 = vcmp.le.f32.partialorder %v1650, 30.0
    %vm1743 = vcmp.le.f32.partialorder %v1651, 30.0
    %vm1744 = vcmp.le.f32.partialorder %v1652, 30.0
    %vm1745 = vcmp.gt.f32.partialorder %v1725, 30.0
    %vm1746 = vcmp.gt.f32.partialorder %v1726, 30.0
    %vm1747 = vcmp.gt.f32.partialorder %v1727, 30.0
    %vm1748 = vcmp.gt.f32.partialorder %v1728, 30.0
    %vm1749 = vmand %vm1741, %vm1745
    %vm1750 = vmand %vm1742, %vm1746
    %vm1751 = vmand %vm1743, %vm1747
    %vm1752 = vmand %vm1744, %vm1748
    %v1753 = vsel %vm1737, %v1691, %v1677
    %v1754 = vsel %vm1738, %v1694, %v1678
    %v1755 = vsel %vm1739, %v1697, %v1679
    %v1756 = vsel %vm1740, %v1700, %v1680
    %v1757 = vsel %vm1749, %v1691, %v1681
    %v1758 = vsel %vm1750, %v1694, %v1682
    %v1759 = vsel %vm1751, %v1697, %v1683
    %v1760 = vsel %vm1752, %v1700, %v1684
    %v1761 = vsel %vm1701, inf, %v1685
    %v1762 = vsel %vm1702, inf, %v1686
    %v1763 = vsel %vm1703, inf, %v1687
    %v1764 = vsel %vm1704, inf, %v1688
    %v1765 = vsel %vm250, %v1761, inf
    %1766 = vmin.xlane.f32.xlu0 %v1765
    %v1767 = vpop.xlane.xlu0 %1766
    %v1768 = vsel %vm250, %v1762, inf
    %1769 = vmin.xlane.f32.xlu0 %v1768
    %v1770 = vpop.xlane.xlu0 %1769
    %v1771 = vsel %vm250, %v1763, inf
    %1772 = vmin.xlane.f32.xlu0 %v1771
    %v1773 = vpop.xlane.xlu0 %1772
    %v1774 = vsel %vm250, %v1764, inf
    %1775 = vmin.xlane.f32.xlu0 %v1774
    %v1776 = vpop.xlane.xlu0 %1775
    %vm1777 = vcmp.eq.f32.partialorder %v1761, %v1767
    %vm1778 = vcmp.eq.f32.partialorder %v1762, %v1770
    %vm1779 = vcmp.eq.f32.partialorder %v1763, %v1773
    %vm1780 = vcmp.eq.f32.partialorder %v1764, %v1776
    %v1781 = vsel %vm1777, 1, 0
    %v1782 = vsel %vm1778, 1, 0
    %v1783 = vsel %vm1779, 1, 0
    %v1784 = vsel %vm1780, 1, 0
    %v1785 = vcvt.s32.f32 %v1781
    %v1786 = vcvt.s32.f32 %v1782
    %v1787 = vcvt.s32.f32 %v1783
    %v1788 = vcvt.s32.f32 %v1784
    %v1789 = vsel %vm250, %v1785, 0.0
    %1790 = vadd.xlane.f32.xlu0 %v1789
    %v1791 = vpop.xlane.xlu0 %1790
    %v1792 = vsel %vm250, %v1786, 0.0
    %1793 = vadd.xlane.f32.xlu0 %v1792
    %v1794 = vpop.xlane.xlu0 %1793
    %v1795 = vsel %vm250, %v1787, 0.0
    %1796 = vadd.xlane.f32.xlu0 %v1795
    %v1797 = vpop.xlane.xlu0 %1796
    %v1798 = vsel %vm250, %v1788, 0.0
    %1799 = vadd.xlane.f32.xlu0 %v1798
    %v1800 = vpop.xlane.xlu0 %1799
    %v1801 = vadd.f32 %v1725, %v1791
    %v1802 = vadd.f32 %v1726, %v1794
    %v1803 = vadd.f32 %v1727, %v1797
    %v1804 = vadd.f32 %v1728, %v1800
    %vm1805 = vcmp.le.f32.partialorder %v1725, 15.0
    %vm1806 = vcmp.le.f32.partialorder %v1726, 15.0
    %vm1807 = vcmp.le.f32.partialorder %v1727, 15.0
    %vm1808 = vcmp.le.f32.partialorder %v1728, 15.0
    %vm1809 = vcmp.gt.f32.partialorder %v1801, 15.0
    %vm1810 = vcmp.gt.f32.partialorder %v1802, 15.0
    %vm1811 = vcmp.gt.f32.partialorder %v1803, 15.0
    %vm1812 = vcmp.gt.f32.partialorder %v1804, 15.0
    %vm1813 = vmand %vm1805, %vm1809
    %vm1814 = vmand %vm1806, %vm1810
    %vm1815 = vmand %vm1807, %vm1811
    %vm1816 = vmand %vm1808, %vm1812
    %vm1817 = vcmp.le.f32.partialorder %v1725, 30.0
    %vm1818 = vcmp.le.f32.partialorder %v1726, 30.0
    %vm1819 = vcmp.le.f32.partialorder %v1727, 30.0
    %vm1820 = vcmp.le.f32.partialorder %v1728, 30.0
    %vm1821 = vcmp.gt.f32.partialorder %v1801, 30.0
    %vm1822 = vcmp.gt.f32.partialorder %v1802, 30.0
    %vm1823 = vcmp.gt.f32.partialorder %v1803, 30.0
    %vm1824 = vcmp.gt.f32.partialorder %v1804, 30.0
    %vm1825 = vmand %vm1817, %vm1821
    %vm1826 = vmand %vm1818, %vm1822
    %vm1827 = vmand %vm1819, %vm1823
    %vm1828 = vmand %vm1820, %vm1824
    %v1829 = vsel %vm1813, %v1767, %v1753
    %v1830 = vsel %vm1814, %v1770, %v1754
    %v1831 = vsel %vm1815, %v1773, %v1755
    %v1832 = vsel %vm1816, %v1776, %v1756
    %v1833 = vsel %vm1825, %v1767, %v1757
    %v1834 = vsel %vm1826, %v1770, %v1758
    %v1835 = vsel %vm1827, %v1773, %v1759
    %v1836 = vsel %vm1828, %v1776, %v1760
    %v1837 = vsel %vm1777, inf, %v1761
    %v1838 = vsel %vm1778, inf, %v1762
    %v1839 = vsel %vm1779, inf, %v1763
    %v1840 = vsel %vm1780, inf, %v1764
    %v1841 = vsel %vm250, %v1837, inf
    %1842 = vmin.xlane.f32.xlu0 %v1841
    %v1843 = vpop.xlane.xlu0 %1842
    %v1844 = vsel %vm250, %v1838, inf
    %1845 = vmin.xlane.f32.xlu0 %v1844
    %v1846 = vpop.xlane.xlu0 %1845
    %v1847 = vsel %vm250, %v1839, inf
    %1848 = vmin.xlane.f32.xlu0 %v1847
    %v1849 = vpop.xlane.xlu0 %1848
    %v1850 = vsel %vm250, %v1840, inf
    %1851 = vmin.xlane.f32.xlu0 %v1850
    %v1852 = vpop.xlane.xlu0 %1851
    %vm1853 = vcmp.eq.f32.partialorder %v1837, %v1843
    %vm1854 = vcmp.eq.f32.partialorder %v1838, %v1846
    %vm1855 = vcmp.eq.f32.partialorder %v1839, %v1849
    %vm1856 = vcmp.eq.f32.partialorder %v1840, %v1852
    %v1857 = vsel %vm1853, 1, 0
    %v1858 = vsel %vm1854, 1, 0
    %v1859 = vsel %vm1855, 1, 0
    %v1860 = vsel %vm1856, 1, 0
    %v1861 = vcvt.s32.f32 %v1857
    %v1862 = vcvt.s32.f32 %v1858
    %v1863 = vcvt.s32.f32 %v1859
    %v1864 = vcvt.s32.f32 %v1860
    %v1865 = vsel %vm250, %v1861, 0.0
    %1866 = vadd.xlane.f32.xlu0 %v1865
    %v1867 = vpop.xlane.xlu0 %1866
    %v1868 = vsel %vm250, %v1862, 0.0
    %1869 = vadd.xlane.f32.xlu0 %v1868
    %v1870 = vpop.xlane.xlu0 %1869
    %v1871 = vsel %vm250, %v1863, 0.0
    %1872 = vadd.xlane.f32.xlu0 %v1871
    %v1873 = vpop.xlane.xlu0 %1872
    %v1874 = vsel %vm250, %v1864, 0.0
    %1875 = vadd.xlane.f32.xlu0 %v1874
    %v1876 = vpop.xlane.xlu0 %1875
    %v1877 = vadd.f32 %v1801, %v1867
    %v1878 = vadd.f32 %v1802, %v1870
    %v1879 = vadd.f32 %v1803, %v1873
    %v1880 = vadd.f32 %v1804, %v1876
    %vm1881 = vcmp.le.f32.partialorder %v1801, 15.0
    %vm1882 = vcmp.le.f32.partialorder %v1802, 15.0
    %vm1883 = vcmp.le.f32.partialorder %v1803, 15.0
    %vm1884 = vcmp.le.f32.partialorder %v1804, 15.0
    %vm1885 = vcmp.gt.f32.partialorder %v1877, 15.0
    %vm1886 = vcmp.gt.f32.partialorder %v1878, 15.0
    %vm1887 = vcmp.gt.f32.partialorder %v1879, 15.0
    %vm1888 = vcmp.gt.f32.partialorder %v1880, 15.0
    %vm1889 = vmand %vm1881, %vm1885
    %vm1890 = vmand %vm1882, %vm1886
    %vm1891 = vmand %vm1883, %vm1887
    %vm1892 = vmand %vm1884, %vm1888
    %vm1893 = vcmp.le.f32.partialorder %v1801, 30.0
    %vm1894 = vcmp.le.f32.partialorder %v1802, 30.0
    %vm1895 = vcmp.le.f32.partialorder %v1803, 30.0
    %vm1896 = vcmp.le.f32.partialorder %v1804, 30.0
    %vm1897 = vcmp.gt.f32.partialorder %v1877, 30.0
    %vm1898 = vcmp.gt.f32.partialorder %v1878, 30.0
    %vm1899 = vcmp.gt.f32.partialorder %v1879, 30.0
    %vm1900 = vcmp.gt.f32.partialorder %v1880, 30.0
    %vm1901 = vmand %vm1893, %vm1897
    %vm1902 = vmand %vm1894, %vm1898
    %vm1903 = vmand %vm1895, %vm1899
    %vm1904 = vmand %vm1896, %vm1900
    %v1905 = vsel %vm1889, %v1843, %v1829
    %v1906 = vsel %vm1890, %v1846, %v1830
    %v1907 = vsel %vm1891, %v1849, %v1831
    %v1908 = vsel %vm1892, %v1852, %v1832
    %v1909 = vsel %vm1901, %v1843, %v1833
    %v1910 = vsel %vm1902, %v1846, %v1834
    %v1911 = vsel %vm1903, %v1849, %v1835
    %v1912 = vsel %vm1904, %v1852, %v1836
    %v1913 = vsel %vm1853, inf, %v1837
    %v1914 = vsel %vm1854, inf, %v1838
    %v1915 = vsel %vm1855, inf, %v1839
    %v1916 = vsel %vm1856, inf, %v1840
    %v1917 = vsel %vm250, %v1913, inf
    %1918 = vmin.xlane.f32.xlu0 %v1917
    %v1919 = vpop.xlane.xlu0 %1918
    %v1920 = vsel %vm250, %v1914, inf
    %1921 = vmin.xlane.f32.xlu0 %v1920
    %v1922 = vpop.xlane.xlu0 %1921
    %v1923 = vsel %vm250, %v1915, inf
    %1924 = vmin.xlane.f32.xlu0 %v1923
    %v1925 = vpop.xlane.xlu0 %1924
    %v1926 = vsel %vm250, %v1916, inf
    %1927 = vmin.xlane.f32.xlu0 %v1926
    %v1928 = vpop.xlane.xlu0 %1927
    %vm1929 = vcmp.eq.f32.partialorder %v1913, %v1919
    %vm1930 = vcmp.eq.f32.partialorder %v1914, %v1922
    %vm1931 = vcmp.eq.f32.partialorder %v1915, %v1925
    %vm1932 = vcmp.eq.f32.partialorder %v1916, %v1928
    %v1933 = vsel %vm1929, 1, 0
    %v1934 = vsel %vm1930, 1, 0
    %v1935 = vsel %vm1931, 1, 0
    %v1936 = vsel %vm1932, 1, 0
    %v1937 = vcvt.s32.f32 %v1933
    %v1938 = vcvt.s32.f32 %v1934
    %v1939 = vcvt.s32.f32 %v1935
    %v1940 = vcvt.s32.f32 %v1936
    %v1941 = vsel %vm250, %v1937, 0.0
    %1942 = vadd.xlane.f32.xlu0 %v1941
    %v1943 = vpop.xlane.xlu0 %1942
    %v1944 = vsel %vm250, %v1938, 0.0
    %1945 = vadd.xlane.f32.xlu0 %v1944
    %v1946 = vpop.xlane.xlu0 %1945
    %v1947 = vsel %vm250, %v1939, 0.0
    %1948 = vadd.xlane.f32.xlu0 %v1947
    %v1949 = vpop.xlane.xlu0 %1948
    %v1950 = vsel %vm250, %v1940, 0.0
    %1951 = vadd.xlane.f32.xlu0 %v1950
    %v1952 = vpop.xlane.xlu0 %1951
    %v1953 = vadd.f32 %v1877, %v1943
    %v1954 = vadd.f32 %v1878, %v1946
    %v1955 = vadd.f32 %v1879, %v1949
    %v1956 = vadd.f32 %v1880, %v1952
    %vm1957 = vcmp.le.f32.partialorder %v1877, 15.0
    %vm1958 = vcmp.le.f32.partialorder %v1878, 15.0
    %vm1959 = vcmp.le.f32.partialorder %v1879, 15.0
    %vm1960 = vcmp.le.f32.partialorder %v1880, 15.0
    %vm1961 = vcmp.gt.f32.partialorder %v1953, 15.0
    %vm1962 = vcmp.gt.f32.partialorder %v1954, 15.0
    %vm1963 = vcmp.gt.f32.partialorder %v1955, 15.0
    %vm1964 = vcmp.gt.f32.partialorder %v1956, 15.0
    %vm1965 = vmand %vm1957, %vm1961
    %vm1966 = vmand %vm1958, %vm1962
    %vm1967 = vmand %vm1959, %vm1963
    %vm1968 = vmand %vm1960, %vm1964
    %vm1969 = vcmp.le.f32.partialorder %v1877, 30.0
    %vm1970 = vcmp.le.f32.partialorder %v1878, 30.0
    %vm1971 = vcmp.le.f32.partialorder %v1879, 30.0
    %vm1972 = vcmp.le.f32.partialorder %v1880, 30.0
    %vm1973 = vcmp.gt.f32.partialorder %v1953, 30.0
    %vm1974 = vcmp.gt.f32.partialorder %v1954, 30.0
    %vm1975 = vcmp.gt.f32.partialorder %v1955, 30.0
    %vm1976 = vcmp.gt.f32.partialorder %v1956, 30.0
    %vm1977 = vmand %vm1969, %vm1973
    %vm1978 = vmand %vm1970, %vm1974
    %vm1979 = vmand %vm1971, %vm1975
    %vm1980 = vmand %vm1972, %vm1976
    %v1981 = vsel %vm1965, %v1919, %v1905
    %v1982 = vsel %vm1966, %v1922, %v1906
    %v1983 = vsel %vm1967, %v1925, %v1907
    %v1984 = vsel %vm1968, %v1928, %v1908
    %v1985 = vsel %vm1977, %v1919, %v1909
    %v1986 = vsel %vm1978, %v1922, %v1910
    %v1987 = vsel %vm1979, %v1925, %v1911
    %v1988 = vsel %vm1980, %v1928, %v1912
    %v1989 = vsel %vm1929, inf, %v1913
    %v1990 = vsel %vm1930, inf, %v1914
    %v1991 = vsel %vm1931, inf, %v1915
    %v1992 = vsel %vm1932, inf, %v1916
    %v1993 = vsel %vm250, %v1989, inf
    %1994 = vmin.xlane.f32.xlu0 %v1993
    %v1995 = vpop.xlane.xlu0 %1994
    %v1996 = vsel %vm250, %v1990, inf
    %1997 = vmin.xlane.f32.xlu0 %v1996
    %v1998 = vpop.xlane.xlu0 %1997
    %v1999 = vsel %vm250, %v1991, inf
    %2000 = vmin.xlane.f32.xlu0 %v1999
    %v2001 = vpop.xlane.xlu0 %2000
    %v2002 = vsel %vm250, %v1992, inf
    %2003 = vmin.xlane.f32.xlu0 %v2002
    %v2004 = vpop.xlane.xlu0 %2003
    %vm2005 = vcmp.eq.f32.partialorder %v1989, %v1995
    %vm2006 = vcmp.eq.f32.partialorder %v1990, %v1998
    %vm2007 = vcmp.eq.f32.partialorder %v1991, %v2001
    %vm2008 = vcmp.eq.f32.partialorder %v1992, %v2004
    %v2009 = vsel %vm2005, 1, 0
    %v2010 = vsel %vm2006, 1, 0
    %v2011 = vsel %vm2007, 1, 0
    %v2012 = vsel %vm2008, 1, 0
    %v2013 = vcvt.s32.f32 %v2009
    %v2014 = vcvt.s32.f32 %v2010
    %v2015 = vcvt.s32.f32 %v2011
    %v2016 = vcvt.s32.f32 %v2012
    %v2017 = vsel %vm250, %v2013, 0.0
    %2018 = vadd.xlane.f32.xlu0 %v2017
    %v2019 = vpop.xlane.xlu0 %2018
    %v2020 = vsel %vm250, %v2014, 0.0
    %2021 = vadd.xlane.f32.xlu0 %v2020
    %v2022 = vpop.xlane.xlu0 %2021
    %v2023 = vsel %vm250, %v2015, 0.0
    %2024 = vadd.xlane.f32.xlu0 %v2023
    %v2025 = vpop.xlane.xlu0 %2024
    %v2026 = vsel %vm250, %v2016, 0.0
    %2027 = vadd.xlane.f32.xlu0 %v2026
    %v2028 = vpop.xlane.xlu0 %2027
    %v2029 = vadd.f32 %v1953, %v2019
    %v2030 = vadd.f32 %v1954, %v2022
    %v2031 = vadd.f32 %v1955, %v2025
    %v2032 = vadd.f32 %v1956, %v2028
    %vm2033 = vcmp.le.f32.partialorder %v1953, 15.0
    %vm2034 = vcmp.le.f32.partialorder %v1954, 15.0
    %vm2035 = vcmp.le.f32.partialorder %v1955, 15.0
    %vm2036 = vcmp.le.f32.partialorder %v1956, 15.0
    %vm2037 = vcmp.gt.f32.partialorder %v2029, 15.0
    %vm2038 = vcmp.gt.f32.partialorder %v2030, 15.0
    %vm2039 = vcmp.gt.f32.partialorder %v2031, 15.0
    %vm2040 = vcmp.gt.f32.partialorder %v2032, 15.0
    %vm2041 = vmand %vm2033, %vm2037
    %vm2042 = vmand %vm2034, %vm2038
    %vm2043 = vmand %vm2035, %vm2039
    %vm2044 = vmand %vm2036, %vm2040
    %vm2045 = vcmp.le.f32.partialorder %v1953, 30.0
    %vm2046 = vcmp.le.f32.partialorder %v1954, 30.0
    %vm2047 = vcmp.le.f32.partialorder %v1955, 30.0
    %vm2048 = vcmp.le.f32.partialorder %v1956, 30.0
    %vm2049 = vcmp.gt.f32.partialorder %v2029, 30.0
    %vm2050 = vcmp.gt.f32.partialorder %v2030, 30.0
    %vm2051 = vcmp.gt.f32.partialorder %v2031, 30.0
    %vm2052 = vcmp.gt.f32.partialorder %v2032, 30.0
    %vm2053 = vmand %vm2045, %vm2049
    %vm2054 = vmand %vm2046, %vm2050
    %vm2055 = vmand %vm2047, %vm2051
    %vm2056 = vmand %vm2048, %vm2052
    %v2057 = vsel %vm2041, %v1995, %v1981
    %v2058 = vsel %vm2042, %v1998, %v1982
    %v2059 = vsel %vm2043, %v2001, %v1983
    %v2060 = vsel %vm2044, %v2004, %v1984
    %v2061 = vsel %vm2053, %v1995, %v1985
    %v2062 = vsel %vm2054, %v1998, %v1986
    %v2063 = vsel %vm2055, %v2001, %v1987
    %v2064 = vsel %vm2056, %v2004, %v1988
    %v2065 = vsel %vm2005, inf, %v1989
    %v2066 = vsel %vm2006, inf, %v1990
    %v2067 = vsel %vm2007, inf, %v1991
    %v2068 = vsel %vm2008, inf, %v1992
    %v2069 = vsel %vm250, %v2065, inf
    %2070 = vmin.xlane.f32.xlu0 %v2069
    %v2071 = vpop.xlane.xlu0 %2070
    %v2072 = vsel %vm250, %v2066, inf
    %2073 = vmin.xlane.f32.xlu0 %v2072
    %v2074 = vpop.xlane.xlu0 %2073
    %v2075 = vsel %vm250, %v2067, inf
    %2076 = vmin.xlane.f32.xlu0 %v2075
    %v2077 = vpop.xlane.xlu0 %2076
    %v2078 = vsel %vm250, %v2068, inf
    %2079 = vmin.xlane.f32.xlu0 %v2078
    %v2080 = vpop.xlane.xlu0 %2079
    %vm2081 = vcmp.eq.f32.partialorder %v2065, %v2071
    %vm2082 = vcmp.eq.f32.partialorder %v2066, %v2074
    %vm2083 = vcmp.eq.f32.partialorder %v2067, %v2077
    %vm2084 = vcmp.eq.f32.partialorder %v2068, %v2080
    %v2085 = vsel %vm2081, 1, 0
    %v2086 = vsel %vm2082, 1, 0
    %v2087 = vsel %vm2083, 1, 0
    %v2088 = vsel %vm2084, 1, 0
    %v2089 = vcvt.s32.f32 %v2085
    %v2090 = vcvt.s32.f32 %v2086
    %v2091 = vcvt.s32.f32 %v2087
    %v2092 = vcvt.s32.f32 %v2088
    %v2093 = vsel %vm250, %v2089, 0.0
    %2094 = vadd.xlane.f32.xlu0 %v2093
    %v2095 = vpop.xlane.xlu0 %2094
    %v2096 = vsel %vm250, %v2090, 0.0
    %2097 = vadd.xlane.f32.xlu0 %v2096
    %v2098 = vpop.xlane.xlu0 %2097
    %v2099 = vsel %vm250, %v2091, 0.0
    %2100 = vadd.xlane.f32.xlu0 %v2099
    %v2101 = vpop.xlane.xlu0 %2100
    %v2102 = vsel %vm250, %v2092, 0.0
    %2103 = vadd.xlane.f32.xlu0 %v2102
    %v2104 = vpop.xlane.xlu0 %2103
    %v2105 = vadd.f32 %v2029, %v2095
    %v2106 = vadd.f32 %v2030, %v2098
    %v2107 = vadd.f32 %v2031, %v2101
    %v2108 = vadd.f32 %v2032, %v2104
    %vm2109 = vcmp.le.f32.partialorder %v2029, 15.0
    %vm2110 = vcmp.le.f32.partialorder %v2030, 15.0
    %vm2111 = vcmp.le.f32.partialorder %v2031, 15.0
    %vm2112 = vcmp.le.f32.partialorder %v2032, 15.0
    %vm2113 = vcmp.gt.f32.partialorder %v2105, 15.0
    %vm2114 = vcmp.gt.f32.partialorder %v2106, 15.0
    %vm2115 = vcmp.gt.f32.partialorder %v2107, 15.0
    %vm2116 = vcmp.gt.f32.partialorder %v2108, 15.0
    %vm2117 = vmand %vm2109, %vm2113
    %vm2118 = vmand %vm2110, %vm2114
    %vm2119 = vmand %vm2111, %vm2115
    %vm2120 = vmand %vm2112, %vm2116
    %vm2121 = vcmp.le.f32.partialorder %v2029, 30.0
    %vm2122 = vcmp.le.f32.partialorder %v2030, 30.0
    %vm2123 = vcmp.le.f32.partialorder %v2031, 30.0
    %vm2124 = vcmp.le.f32.partialorder %v2032, 30.0
    %vm2125 = vcmp.gt.f32.partialorder %v2105, 30.0
    %vm2126 = vcmp.gt.f32.partialorder %v2106, 30.0
    %vm2127 = vcmp.gt.f32.partialorder %v2107, 30.0
    %vm2128 = vcmp.gt.f32.partialorder %v2108, 30.0
    %vm2129 = vmand %vm2121, %vm2125
    %vm2130 = vmand %vm2122, %vm2126
    %vm2131 = vmand %vm2123, %vm2127
    %vm2132 = vmand %vm2124, %vm2128
    %v2133 = vsel %vm2117, %v2071, %v2057
    %v2134 = vsel %vm2118, %v2074, %v2058
    %v2135 = vsel %vm2119, %v2077, %v2059
    %v2136 = vsel %vm2120, %v2080, %v2060
    %v2137 = vsel %vm2129, %v2071, %v2061
    %v2138 = vsel %vm2130, %v2074, %v2062
    %v2139 = vsel %vm2131, %v2077, %v2063
    %v2140 = vsel %vm2132, %v2080, %v2064
    %v2141 = vsel %vm2081, inf, %v2065
    %v2142 = vsel %vm2082, inf, %v2066
    %v2143 = vsel %vm2083, inf, %v2067
    %v2144 = vsel %vm2084, inf, %v2068
    %v2145 = vsel %vm250, %v2141, inf
    %2146 = vmin.xlane.f32.xlu0 %v2145
    %v2147 = vpop.xlane.xlu0 %2146
    %v2148 = vsel %vm250, %v2142, inf
    %2149 = vmin.xlane.f32.xlu0 %v2148
    %v2150 = vpop.xlane.xlu0 %2149
    %v2151 = vsel %vm250, %v2143, inf
    %2152 = vmin.xlane.f32.xlu0 %v2151
    %v2153 = vpop.xlane.xlu0 %2152
    %v2154 = vsel %vm250, %v2144, inf
    %2155 = vmin.xlane.f32.xlu0 %v2154
    %v2156 = vpop.xlane.xlu0 %2155
    %vm2157 = vcmp.eq.f32.partialorder %v2141, %v2147
    %vm2158 = vcmp.eq.f32.partialorder %v2142, %v2150
    %vm2159 = vcmp.eq.f32.partialorder %v2143, %v2153
    %vm2160 = vcmp.eq.f32.partialorder %v2144, %v2156
    %v2161 = vsel %vm2157, 1, 0
    %v2162 = vsel %vm2158, 1, 0
    %v2163 = vsel %vm2159, 1, 0
    %v2164 = vsel %vm2160, 1, 0
    %v2165 = vcvt.s32.f32 %v2161
    %v2166 = vcvt.s32.f32 %v2162
    %v2167 = vcvt.s32.f32 %v2163
    %v2168 = vcvt.s32.f32 %v2164
    %v2169 = vsel %vm250, %v2165, 0.0
    %2170 = vadd.xlane.f32.xlu0 %v2169
    %v2171 = vpop.xlane.xlu0 %2170
    %v2172 = vsel %vm250, %v2166, 0.0
    %2173 = vadd.xlane.f32.xlu0 %v2172
    %v2174 = vpop.xlane.xlu0 %2173
    %v2175 = vsel %vm250, %v2167, 0.0
    %2176 = vadd.xlane.f32.xlu0 %v2175
    %v2177 = vpop.xlane.xlu0 %2176
    %v2178 = vsel %vm250, %v2168, 0.0
    %2179 = vadd.xlane.f32.xlu0 %v2178
    %v2180 = vpop.xlane.xlu0 %2179
    %v2181 = vadd.f32 %v2105, %v2171
    %v2182 = vadd.f32 %v2106, %v2174
    %v2183 = vadd.f32 %v2107, %v2177
    %v2184 = vadd.f32 %v2108, %v2180
    %vm2185 = vcmp.le.f32.partialorder %v2105, 15.0
    %vm2186 = vcmp.le.f32.partialorder %v2106, 15.0
    %vm2187 = vcmp.le.f32.partialorder %v2107, 15.0
    %vm2188 = vcmp.le.f32.partialorder %v2108, 15.0
    %vm2189 = vcmp.gt.f32.partialorder %v2181, 15.0
    %vm2190 = vcmp.gt.f32.partialorder %v2182, 15.0
    %vm2191 = vcmp.gt.f32.partialorder %v2183, 15.0
    %vm2192 = vcmp.gt.f32.partialorder %v2184, 15.0
    %vm2193 = vmand %vm2185, %vm2189
    %vm2194 = vmand %vm2186, %vm2190
    %vm2195 = vmand %vm2187, %vm2191
    %vm2196 = vmand %vm2188, %vm2192
    %vm2197 = vcmp.le.f32.partialorder %v2105, 30.0
    %vm2198 = vcmp.le.f32.partialorder %v2106, 30.0
    %vm2199 = vcmp.le.f32.partialorder %v2107, 30.0
    %vm2200 = vcmp.le.f32.partialorder %v2108, 30.0
    %vm2201 = vcmp.gt.f32.partialorder %v2181, 30.0
    %vm2202 = vcmp.gt.f32.partialorder %v2182, 30.0
    %vm2203 = vcmp.gt.f32.partialorder %v2183, 30.0
    %vm2204 = vcmp.gt.f32.partialorder %v2184, 30.0
    %vm2205 = vmand %vm2197, %vm2201
    %vm2206 = vmand %vm2198, %vm2202
    %vm2207 = vmand %vm2199, %vm2203
    %vm2208 = vmand %vm2200, %vm2204
    %v2209 = vsel %vm2193, %v2147, %v2133
    %v2210 = vsel %vm2194, %v2150, %v2134
    %v2211 = vsel %vm2195, %v2153, %v2135
    %v2212 = vsel %vm2196, %v2156, %v2136
    %v2213 = vsel %vm2205, %v2147, %v2137
    %v2214 = vsel %vm2206, %v2150, %v2138
    %v2215 = vsel %vm2207, %v2153, %v2139
    %v2216 = vsel %vm2208, %v2156, %v2140
    %v2217 = vsel %vm2157, inf, %v2141
    %v2218 = vsel %vm2158, inf, %v2142
    %v2219 = vsel %vm2159, inf, %v2143
    %v2220 = vsel %vm2160, inf, %v2144
    %v2221 = vsel %vm250, %v2217, inf
    %2222 = vmin.xlane.f32.xlu0 %v2221
    %v2223 = vpop.xlane.xlu0 %2222
    %v2224 = vsel %vm250, %v2218, inf
    %2225 = vmin.xlane.f32.xlu0 %v2224
    %v2226 = vpop.xlane.xlu0 %2225
    %v2227 = vsel %vm250, %v2219, inf
    %2228 = vmin.xlane.f32.xlu0 %v2227
    %v2229 = vpop.xlane.xlu0 %2228
    %v2230 = vsel %vm250, %v2220, inf
    %2231 = vmin.xlane.f32.xlu0 %v2230
    %v2232 = vpop.xlane.xlu0 %2231
    %vm2233 = vcmp.eq.f32.partialorder %v2217, %v2223
    %vm2234 = vcmp.eq.f32.partialorder %v2218, %v2226
    %vm2235 = vcmp.eq.f32.partialorder %v2219, %v2229
    %vm2236 = vcmp.eq.f32.partialorder %v2220, %v2232
    %v2237 = vsel %vm2233, 1, 0
    %v2238 = vsel %vm2234, 1, 0
    %v2239 = vsel %vm2235, 1, 0
    %v2240 = vsel %vm2236, 1, 0
    %v2241 = vcvt.s32.f32 %v2237
    %v2242 = vcvt.s32.f32 %v2238
    %v2243 = vcvt.s32.f32 %v2239
    %v2244 = vcvt.s32.f32 %v2240
    %v2245 = vsel %vm250, %v2241, 0.0
    %2246 = vadd.xlane.f32.xlu0 %v2245
    %v2247 = vpop.xlane.xlu0 %2246
    %v2248 = vsel %vm250, %v2242, 0.0
    %2249 = vadd.xlane.f32.xlu0 %v2248
    %v2250 = vpop.xlane.xlu0 %2249
    %v2251 = vsel %vm250, %v2243, 0.0
    %2252 = vadd.xlane.f32.xlu0 %v2251
    %v2253 = vpop.xlane.xlu0 %2252
    %v2254 = vsel %vm250, %v2244, 0.0
    %2255 = vadd.xlane.f32.xlu0 %v2254
    %v2256 = vpop.xlane.xlu0 %2255
    %v2257 = vadd.f32 %v2181, %v2247
    %v2258 = vadd.f32 %v2182, %v2250
    %v2259 = vadd.f32 %v2183, %v2253
    %v2260 = vadd.f32 %v2184, %v2256
    %vm2261 = vcmp.le.f32.partialorder %v2181, 15.0
    %vm2262 = vcmp.le.f32.partialorder %v2182, 15.0
    %vm2263 = vcmp.le.f32.partialorder %v2183, 15.0
    %vm2264 = vcmp.le.f32.partialorder %v2184, 15.0
    %vm2265 = vcmp.gt.f32.partialorder %v2257, 15.0
    %vm2266 = vcmp.gt.f32.partialorder %v2258, 15.0
    %vm2267 = vcmp.gt.f32.partialorder %v2259, 15.0
    %vm2268 = vcmp.gt.f32.partialorder %v2260, 15.0
    %vm2269 = vmand %vm2261, %vm2265
    %vm2270 = vmand %vm2262, %vm2266
    %vm2271 = vmand %vm2263, %vm2267
    %vm2272 = vmand %vm2264, %vm2268
    %vm2273 = vcmp.le.f32.partialorder %v2181, 30.0
    %vm2274 = vcmp.le.f32.partialorder %v2182, 30.0
    %vm2275 = vcmp.le.f32.partialorder %v2183, 30.0
    %vm2276 = vcmp.le.f32.partialorder %v2184, 30.0
    %vm2277 = vcmp.gt.f32.partialorder %v2257, 30.0
    %vm2278 = vcmp.gt.f32.partialorder %v2258, 30.0
    %vm2279 = vcmp.gt.f32.partialorder %v2259, 30.0
    %vm2280 = vcmp.gt.f32.partialorder %v2260, 30.0
    %vm2281 = vmand %vm2273, %vm2277
    %vm2282 = vmand %vm2274, %vm2278
    %vm2283 = vmand %vm2275, %vm2279
    %vm2284 = vmand %vm2276, %vm2280
    %v2285 = vsel %vm2269, %v2223, %v2209
    %v2286 = vsel %vm2270, %v2226, %v2210
    %v2287 = vsel %vm2271, %v2229, %v2211
    %v2288 = vsel %vm2272, %v2232, %v2212
    %v2289 = vsel %vm2281, %v2223, %v2213
    %v2290 = vsel %vm2282, %v2226, %v2214
    %v2291 = vsel %vm2283, %v2229, %v2215
    %v2292 = vsel %vm2284, %v2232, %v2216
    %v2293 = vsel %vm2233, inf, %v2217
    %v2294 = vsel %vm2234, inf, %v2218
    %v2295 = vsel %vm2235, inf, %v2219
    %v2296 = vsel %vm2236, inf, %v2220
    %v2297 = vsel %vm250, %v2293, inf
    %2298 = vmin.xlane.f32.xlu0 %v2297
    %v2299 = vpop.xlane.xlu0 %2298
    %v2300 = vsel %vm250, %v2294, inf
    %2301 = vmin.xlane.f32.xlu0 %v2300
    %v2302 = vpop.xlane.xlu0 %2301
    %v2303 = vsel %vm250, %v2295, inf
    %2304 = vmin.xlane.f32.xlu0 %v2303
    %v2305 = vpop.xlane.xlu0 %2304
    %v2306 = vsel %vm250, %v2296, inf
    %2307 = vmin.xlane.f32.xlu0 %v2306
    %v2308 = vpop.xlane.xlu0 %2307
    %vm2309 = vcmp.eq.f32.partialorder %v2293, %v2299
    %vm2310 = vcmp.eq.f32.partialorder %v2294, %v2302
    %vm2311 = vcmp.eq.f32.partialorder %v2295, %v2305
    %vm2312 = vcmp.eq.f32.partialorder %v2296, %v2308
    %v2313 = vsel %vm2309, 1, 0
    %v2314 = vsel %vm2310, 1, 0
    %v2315 = vsel %vm2311, 1, 0
    %v2316 = vsel %vm2312, 1, 0
    %v2317 = vcvt.s32.f32 %v2313
    %v2318 = vcvt.s32.f32 %v2314
    %v2319 = vcvt.s32.f32 %v2315
    %v2320 = vcvt.s32.f32 %v2316
    %v2321 = vsel %vm250, %v2317, 0.0
    %2322 = vadd.xlane.f32.xlu0 %v2321
    %v2323 = vpop.xlane.xlu0 %2322
    %v2324 = vsel %vm250, %v2318, 0.0
    %2325 = vadd.xlane.f32.xlu0 %v2324
    %v2326 = vpop.xlane.xlu0 %2325
    %v2327 = vsel %vm250, %v2319, 0.0
    %2328 = vadd.xlane.f32.xlu0 %v2327
    %v2329 = vpop.xlane.xlu0 %2328
    %v2330 = vsel %vm250, %v2320, 0.0
    %2331 = vadd.xlane.f32.xlu0 %v2330
    %v2332 = vpop.xlane.xlu0 %2331
    %v2333 = vadd.f32 %v2257, %v2323
    %v2334 = vadd.f32 %v2258, %v2326
    %v2335 = vadd.f32 %v2259, %v2329
    %v2336 = vadd.f32 %v2260, %v2332
    %vm2337 = vcmp.le.f32.partialorder %v2257, 15.0
    %vm2338 = vcmp.le.f32.partialorder %v2258, 15.0
    %vm2339 = vcmp.le.f32.partialorder %v2259, 15.0
    %vm2340 = vcmp.le.f32.partialorder %v2260, 15.0
    %vm2341 = vcmp.gt.f32.partialorder %v2333, 15.0
    %vm2342 = vcmp.gt.f32.partialorder %v2334, 15.0
    %vm2343 = vcmp.gt.f32.partialorder %v2335, 15.0
    %vm2344 = vcmp.gt.f32.partialorder %v2336, 15.0
    %vm2345 = vmand %vm2337, %vm2341
    %vm2346 = vmand %vm2338, %vm2342
    %vm2347 = vmand %vm2339, %vm2343
    %vm2348 = vmand %vm2340, %vm2344
    %vm2349 = vcmp.le.f32.partialorder %v2257, 30.0
    %vm2350 = vcmp.le.f32.partialorder %v2258, 30.0
    %vm2351 = vcmp.le.f32.partialorder %v2259, 30.0
    %vm2352 = vcmp.le.f32.partialorder %v2260, 30.0
    %vm2353 = vcmp.gt.f32.partialorder %v2333, 30.0
    %vm2354 = vcmp.gt.f32.partialorder %v2334, 30.0
    %vm2355 = vcmp.gt.f32.partialorder %v2335, 30.0
    %vm2356 = vcmp.gt.f32.partialorder %v2336, 30.0
    %vm2357 = vmand %vm2349, %vm2353
    %vm2358 = vmand %vm2350, %vm2354
    %vm2359 = vmand %vm2351, %vm2355
    %vm2360 = vmand %vm2352, %vm2356
    %v2361 = vsel %vm2345, %v2299, %v2285
    %v2362 = vsel %vm2346, %v2302, %v2286
    %v2363 = vsel %vm2347, %v2305, %v2287
    %v2364 = vsel %vm2348, %v2308, %v2288
    %v2365 = vsel %vm2357, %v2299, %v2289
    %v2366 = vsel %vm2358, %v2302, %v2290
    %v2367 = vsel %vm2359, %v2305, %v2291
    %v2368 = vsel %vm2360, %v2308, %v2292
    %v2369 = vsel %vm2309, inf, %v2293
    %v2370 = vsel %vm2310, inf, %v2294
    %v2371 = vsel %vm2311, inf, %v2295
    %v2372 = vsel %vm2312, inf, %v2296
    %v2373 = vsel %vm250, %v2369, inf
    %2374 = vmin.xlane.f32.xlu0 %v2373
    %v2375 = vpop.xlane.xlu0 %2374
    %v2376 = vsel %vm250, %v2370, inf
    %2377 = vmin.xlane.f32.xlu0 %v2376
    %v2378 = vpop.xlane.xlu0 %2377
    %v2379 = vsel %vm250, %v2371, inf
    %2380 = vmin.xlane.f32.xlu0 %v2379
    %v2381 = vpop.xlane.xlu0 %2380
    %v2382 = vsel %vm250, %v2372, inf
    %2383 = vmin.xlane.f32.xlu0 %v2382
    %v2384 = vpop.xlane.xlu0 %2383
    %vm2385 = vcmp.eq.f32.partialorder %v2369, %v2375
    %vm2386 = vcmp.eq.f32.partialorder %v2370, %v2378
    %vm2387 = vcmp.eq.f32.partialorder %v2371, %v2381
    %vm2388 = vcmp.eq.f32.partialorder %v2372, %v2384
    %v2389 = vsel %vm2385, 1, 0
    %v2390 = vsel %vm2386, 1, 0
    %v2391 = vsel %vm2387, 1, 0
    %v2392 = vsel %vm2388, 1, 0
    %v2393 = vcvt.s32.f32 %v2389
    %v2394 = vcvt.s32.f32 %v2390
    %v2395 = vcvt.s32.f32 %v2391
    %v2396 = vcvt.s32.f32 %v2392
    %v2397 = vsel %vm250, %v2393, 0.0
    %2398 = vadd.xlane.f32.xlu0 %v2397
    %v2399 = vpop.xlane.xlu0 %2398
    %v2400 = vsel %vm250, %v2394, 0.0
    %2401 = vadd.xlane.f32.xlu0 %v2400
    %v2402 = vpop.xlane.xlu0 %2401
    %v2403 = vsel %vm250, %v2395, 0.0
    %2404 = vadd.xlane.f32.xlu0 %v2403
    %v2405 = vpop.xlane.xlu0 %2404
    %v2406 = vsel %vm250, %v2396, 0.0
    %2407 = vadd.xlane.f32.xlu0 %v2406
    %v2408 = vpop.xlane.xlu0 %2407
    %v2409 = vadd.f32 %v2333, %v2399
    %v2410 = vadd.f32 %v2334, %v2402
    %v2411 = vadd.f32 %v2335, %v2405
    %v2412 = vadd.f32 %v2336, %v2408
    %vm2413 = vcmp.le.f32.partialorder %v2333, 15.0
    %vm2414 = vcmp.le.f32.partialorder %v2334, 15.0
    %vm2415 = vcmp.le.f32.partialorder %v2335, 15.0
    %vm2416 = vcmp.le.f32.partialorder %v2336, 15.0
    %vm2417 = vcmp.gt.f32.partialorder %v2409, 15.0
    %vm2418 = vcmp.gt.f32.partialorder %v2410, 15.0
    %vm2419 = vcmp.gt.f32.partialorder %v2411, 15.0
    %vm2420 = vcmp.gt.f32.partialorder %v2412, 15.0
    %vm2421 = vmand %vm2413, %vm2417
    %vm2422 = vmand %vm2414, %vm2418
    %vm2423 = vmand %vm2415, %vm2419
    %vm2424 = vmand %vm2416, %vm2420
    %vm2425 = vcmp.le.f32.partialorder %v2333, 30.0
    %vm2426 = vcmp.le.f32.partialorder %v2334, 30.0
    %vm2427 = vcmp.le.f32.partialorder %v2335, 30.0
    %vm2428 = vcmp.le.f32.partialorder %v2336, 30.0
    %vm2429 = vcmp.gt.f32.partialorder %v2409, 30.0
    %vm2430 = vcmp.gt.f32.partialorder %v2410, 30.0
    %vm2431 = vcmp.gt.f32.partialorder %v2411, 30.0
    %vm2432 = vcmp.gt.f32.partialorder %v2412, 30.0
    %vm2433 = vmand %vm2425, %vm2429
    %vm2434 = vmand %vm2426, %vm2430
    %vm2435 = vmand %vm2427, %vm2431
    %vm2436 = vmand %vm2428, %vm2432
    %v2437 = vsel %vm2421, %v2375, %v2361
    %v2438 = vsel %vm2422, %v2378, %v2362
    %v2439 = vsel %vm2423, %v2381, %v2363
    %v2440 = vsel %vm2424, %v2384, %v2364
    %v2441 = vsel %vm2433, %v2375, %v2365
    %v2442 = vsel %vm2434, %v2378, %v2366
    %v2443 = vsel %vm2435, %v2381, %v2367
    %v2444 = vsel %vm2436, %v2384, %v2368
    %v2445 = vsel %vm2385, inf, %v2369
    %v2446 = vsel %vm2386, inf, %v2370
    %v2447 = vsel %vm2387, inf, %v2371
    %v2448 = vsel %vm2388, inf, %v2372
    %v2449 = vsel %vm250, %v2445, inf
    %2450 = vmin.xlane.f32.xlu0 %v2449
    %v2451 = vpop.xlane.xlu0 %2450
    %v2452 = vsel %vm250, %v2446, inf
    %2453 = vmin.xlane.f32.xlu0 %v2452
    %v2454 = vpop.xlane.xlu0 %2453
    %v2455 = vsel %vm250, %v2447, inf
    %2456 = vmin.xlane.f32.xlu0 %v2455
    %v2457 = vpop.xlane.xlu0 %2456
    %v2458 = vsel %vm250, %v2448, inf
    %2459 = vmin.xlane.f32.xlu0 %v2458
    %v2460 = vpop.xlane.xlu0 %2459
    %vm2461 = vcmp.eq.f32.partialorder %v2445, %v2451
    %vm2462 = vcmp.eq.f32.partialorder %v2446, %v2454
    %vm2463 = vcmp.eq.f32.partialorder %v2447, %v2457
    %vm2464 = vcmp.eq.f32.partialorder %v2448, %v2460
    %v2465 = vsel %vm2461, 1, 0
    %v2466 = vsel %vm2462, 1, 0
    %v2467 = vsel %vm2463, 1, 0
    %v2468 = vsel %vm2464, 1, 0
    %v2469 = vcvt.s32.f32 %v2465
    %v2470 = vcvt.s32.f32 %v2466
    %v2471 = vcvt.s32.f32 %v2467
    %v2472 = vcvt.s32.f32 %v2468
    %v2473 = vsel %vm250, %v2469, 0.0
    %2474 = vadd.xlane.f32.xlu0 %v2473
    %v2475 = vpop.xlane.xlu0 %2474
    %v2476 = vsel %vm250, %v2470, 0.0
    %2477 = vadd.xlane.f32.xlu0 %v2476
    %v2478 = vpop.xlane.xlu0 %2477
    %v2479 = vsel %vm250, %v2471, 0.0
    %2480 = vadd.xlane.f32.xlu0 %v2479
    %v2481 = vpop.xlane.xlu0 %2480
    %v2482 = vsel %vm250, %v2472, 0.0
    %2483 = vadd.xlane.f32.xlu0 %v2482
    %v2484 = vpop.xlane.xlu0 %2483
    %v2485 = vadd.f32 %v2409, %v2475
    %v2486 = vadd.f32 %v2410, %v2478
    %v2487 = vadd.f32 %v2411, %v2481
    %v2488 = vadd.f32 %v2412, %v2484
    %vm2489 = vcmp.le.f32.partialorder %v2409, 15.0
    %vm2490 = vcmp.le.f32.partialorder %v2410, 15.0
    %vm2491 = vcmp.le.f32.partialorder %v2411, 15.0
    %vm2492 = vcmp.le.f32.partialorder %v2412, 15.0
    %vm2493 = vcmp.gt.f32.partialorder %v2485, 15.0
    %vm2494 = vcmp.gt.f32.partialorder %v2486, 15.0
    %vm2495 = vcmp.gt.f32.partialorder %v2487, 15.0
    %vm2496 = vcmp.gt.f32.partialorder %v2488, 15.0
    %vm2497 = vmand %vm2489, %vm2493
    %vm2498 = vmand %vm2490, %vm2494
    %vm2499 = vmand %vm2491, %vm2495
    %vm2500 = vmand %vm2492, %vm2496
    %vm2501 = vcmp.le.f32.partialorder %v2409, 30.0
    %vm2502 = vcmp.le.f32.partialorder %v2410, 30.0
    %vm2503 = vcmp.le.f32.partialorder %v2411, 30.0
    %vm2504 = vcmp.le.f32.partialorder %v2412, 30.0
    %vm2505 = vcmp.gt.f32.partialorder %v2485, 30.0
    %vm2506 = vcmp.gt.f32.partialorder %v2486, 30.0
    %vm2507 = vcmp.gt.f32.partialorder %v2487, 30.0
    %vm2508 = vcmp.gt.f32.partialorder %v2488, 30.0
    %vm2509 = vmand %vm2501, %vm2505
    %vm2510 = vmand %vm2502, %vm2506
    %vm2511 = vmand %vm2503, %vm2507
    %vm2512 = vmand %vm2504, %vm2508
    %v2513 = vsel %vm2497, %v2451, %v2437
    %v2514 = vsel %vm2498, %v2454, %v2438
    %v2515 = vsel %vm2499, %v2457, %v2439
    %v2516 = vsel %vm2500, %v2460, %v2440
    %v2517 = vsel %vm2509, %v2451, %v2441
    %v2518 = vsel %vm2510, %v2454, %v2442
    %v2519 = vsel %vm2511, %v2457, %v2443
    %v2520 = vsel %vm2512, %v2460, %v2444
    %v2521 = vsel %vm2461, inf, %v2445
    %v2522 = vsel %vm2462, inf, %v2446
    %v2523 = vsel %vm2463, inf, %v2447
    %v2524 = vsel %vm2464, inf, %v2448
    %v2525 = vsel %vm250, %v2521, inf
    %2526 = vmin.xlane.f32.xlu0 %v2525
    %v2527 = vpop.xlane.xlu0 %2526
    %v2528 = vsel %vm250, %v2522, inf
    %2529 = vmin.xlane.f32.xlu0 %v2528
    %v2530 = vpop.xlane.xlu0 %2529
    %v2531 = vsel %vm250, %v2523, inf
    %2532 = vmin.xlane.f32.xlu0 %v2531
    %v2533 = vpop.xlane.xlu0 %2532
    %v2534 = vsel %vm250, %v2524, inf
    %2535 = vmin.xlane.f32.xlu0 %v2534
    %v2536 = vpop.xlane.xlu0 %2535
    %vm2537 = vcmp.eq.f32.partialorder %v2521, %v2527
    %vm2538 = vcmp.eq.f32.partialorder %v2522, %v2530
    %vm2539 = vcmp.eq.f32.partialorder %v2523, %v2533
    %vm2540 = vcmp.eq.f32.partialorder %v2524, %v2536
    %v2541 = vsel %vm2537, 1, 0
    %v2542 = vsel %vm2538, 1, 0
    %v2543 = vsel %vm2539, 1, 0
    %v2544 = vsel %vm2540, 1, 0
    %v2545 = vcvt.s32.f32 %v2541
    %v2546 = vcvt.s32.f32 %v2542
    %v2547 = vcvt.s32.f32 %v2543
    %v2548 = vcvt.s32.f32 %v2544
    %v2549 = vsel %vm250, %v2545, 0.0
    %2550 = vadd.xlane.f32.xlu0 %v2549
    %v2551 = vpop.xlane.xlu0 %2550
    %v2552 = vsel %vm250, %v2546, 0.0
    %2553 = vadd.xlane.f32.xlu0 %v2552
    %v2554 = vpop.xlane.xlu0 %2553
    %v2555 = vsel %vm250, %v2547, 0.0
    %2556 = vadd.xlane.f32.xlu0 %v2555
    %v2557 = vpop.xlane.xlu0 %2556
    %v2558 = vsel %vm250, %v2548, 0.0
    %2559 = vadd.xlane.f32.xlu0 %v2558
    %v2560 = vpop.xlane.xlu0 %2559
    %v2561 = vadd.f32 %v2485, %v2551
    %v2562 = vadd.f32 %v2486, %v2554
    %v2563 = vadd.f32 %v2487, %v2557
    %v2564 = vadd.f32 %v2488, %v2560
    %vm2565 = vcmp.le.f32.partialorder %v2485, 15.0
    %vm2566 = vcmp.le.f32.partialorder %v2486, 15.0
    %vm2567 = vcmp.le.f32.partialorder %v2487, 15.0
    %vm2568 = vcmp.le.f32.partialorder %v2488, 15.0
    %vm2569 = vcmp.gt.f32.partialorder %v2561, 15.0
    %vm2570 = vcmp.gt.f32.partialorder %v2562, 15.0
    %vm2571 = vcmp.gt.f32.partialorder %v2563, 15.0
    %vm2572 = vcmp.gt.f32.partialorder %v2564, 15.0
    %vm2573 = vmand %vm2565, %vm2569
    %vm2574 = vmand %vm2566, %vm2570
    %vm2575 = vmand %vm2567, %vm2571
    %vm2576 = vmand %vm2568, %vm2572
    %vm2577 = vcmp.le.f32.partialorder %v2485, 30.0
    %vm2578 = vcmp.le.f32.partialorder %v2486, 30.0
    %vm2579 = vcmp.le.f32.partialorder %v2487, 30.0
    %vm2580 = vcmp.le.f32.partialorder %v2488, 30.0
    %vm2581 = vcmp.gt.f32.partialorder %v2561, 30.0
    %vm2582 = vcmp.gt.f32.partialorder %v2562, 30.0
    %vm2583 = vcmp.gt.f32.partialorder %v2563, 30.0
    %vm2584 = vcmp.gt.f32.partialorder %v2564, 30.0
    %vm2585 = vmand %vm2577, %vm2581
    %vm2586 = vmand %vm2578, %vm2582
    %vm2587 = vmand %vm2579, %vm2583
    %vm2588 = vmand %vm2580, %vm2584
    %v2589 = vsel %vm2573, %v2527, %v2513
    %v2590 = vsel %vm2574, %v2530, %v2514
    %v2591 = vsel %vm2575, %v2533, %v2515
    %v2592 = vsel %vm2576, %v2536, %v2516
    %v2593 = vsel %vm2585, %v2527, %v2517
    %v2594 = vsel %vm2586, %v2530, %v2518
    %v2595 = vsel %vm2587, %v2533, %v2519
    %v2596 = vsel %vm2588, %v2536, %v2520
    %v2597 = vrsqrt.pop %v2589
    %v2598 = vmul.f32 %v2589, %v2597
    %vm2599 = vcmp.eq.f32.partialorder %v2589, inf
    %v2600 = vsel %vm2599, %v2589, %v2598
    %vm2601 = vcmp.eq.f32.partialorder %v2589, 0.0
    %v2602 = vand.u32 %v2589, 2147483648
    %v2603 = vsel %vm2601, %v2602, %v2600
    %v2604 = vrsqrt.pop %v2590
    %v2605 = vmul.f32 %v2590, %v2604
    %vm2606 = vcmp.eq.f32.partialorder %v2590, inf
    %v2607 = vsel %vm2606, %v2590, %v2605
    %vm2608 = vcmp.eq.f32.partialorder %v2590, 0.0
    %v2609 = vand.u32 %v2590, 2147483648
    %v2610 = vsel %vm2608, %v2609, %v2607
    %v2611 = vrsqrt.pop %v2591
    %v2612 = vmul.f32 %v2591, %v2611
    %vm2613 = vcmp.eq.f32.partialorder %v2591, inf
    %v2614 = vsel %vm2613, %v2591, %v2612
    %vm2615 = vcmp.eq.f32.partialorder %v2591, 0.0
    %v2616 = vand.u32 %v2591, 2147483648
    %v2617 = vsel %vm2615, %v2616, %v2614
    %v2618 = vrsqrt.pop %v2592
    %v2619 = vmul.f32 %v2592, %v2618
    %vm2620 = vcmp.eq.f32.partialorder %v2592, inf
    %v2621 = vsel %vm2620, %v2592, %v2619
    %vm2622 = vcmp.eq.f32.partialorder %v2592, 0.0
    %v2623 = vand.u32 %v2592, 2147483648
    %v2624 = vsel %vm2622, %v2623, %v2621
    %v2625 = vrsqrt.pop %v2593
    %v2626 = vmul.f32 %v2593, %v2625
    %vm2627 = vcmp.eq.f32.partialorder %v2593, inf
    %v2628 = vsel %vm2627, %v2593, %v2626
    %vm2629 = vcmp.eq.f32.partialorder %v2593, 0.0
    %v2630 = vand.u32 %v2593, 2147483648
    %v2631 = vsel %vm2629, %v2630, %v2628
    %v2632 = vrsqrt.pop %v2594
    %v2633 = vmul.f32 %v2594, %v2632
    %vm2634 = vcmp.eq.f32.partialorder %v2594, inf
    %v2635 = vsel %vm2634, %v2594, %v2633
    %vm2636 = vcmp.eq.f32.partialorder %v2594, 0.0
    %v2637 = vand.u32 %v2594, 2147483648
    %v2638 = vsel %vm2636, %v2637, %v2635
    %v2639 = vrsqrt.pop %v2595
    %v2640 = vmul.f32 %v2595, %v2639
    %vm2641 = vcmp.eq.f32.partialorder %v2595, inf
    %v2642 = vsel %vm2641, %v2595, %v2640
    %vm2643 = vcmp.eq.f32.partialorder %v2595, 0.0
    %v2644 = vand.u32 %v2595, 2147483648
    %v2645 = vsel %vm2643, %v2644, %v2642
    %v2646 = vrsqrt.pop %v2596
    %v2647 = vmul.f32 %v2596, %v2646
    %vm2648 = vcmp.eq.f32.partialorder %v2596, inf
    %v2649 = vsel %vm2648, %v2596, %v2647
    %vm2650 = vcmp.eq.f32.partialorder %v2596, 0.0
    %v2651 = vand.u32 %v2596, 2147483648
    %v2652 = vsel %vm2650, %v2651, %v2649
    %v2653 = vadd.f32 %v2603, 0.3
    %v2654 = vadd.f32 %v2610, 0.3
    %v2655 = vadd.f32 %v2617, 0.3
    %v2656 = vadd.f32 %v2624, 0.3
    %v2657 = vsub.f32 %v2653, %v2631
    %v2658 = vsub.f32 %v2654, %v2638
    %v2659 = vsub.f32 %v2655, %v2645
    %v2660 = vsub.f32 %v2656, %v2652
    %v2661 = vmax.f32 %v2657, 0.0
    %v2662 = vmax.f32 %v2658, 0.0
    %v2663 = vmax.f32 %v2659, 0.0
    %v2664 = vmax.f32 %v2660, 0.0
    %s2665 = smul.u32 0, 32
    %v2666 = vlaneseq
    %v2667 = vshrl.u32 %v2666, 7
    %v2668 = vadd.s32 %v2667, 8
    %v2669 = vadd.s32 %v2667, 16
    %v2670 = vadd.s32 %v2667, 24
    %v2671 = vstv %s2665
    %v2672 = vadd.s32 %v2671, %v2667
    %v2673 = vadd.s32 %v2671, %v2668
    %v2674 = vadd.s32 %v2671, %v2669
    %v2675 = vadd.s32 %v2671, %v2670
    %vm2676 = vcmp.lt.s32.totalorder %v2672, 32
    %vm2677 = vcmp.lt.s32.totalorder %v2673, 32
    %vm2678 = vcmp.lt.s32.totalorder %v2674, 32
    %vm2679 = vcmp.lt.s32.totalorder %v2675, 32
    %v2680 = vsel %vm2676, %v2661, 0.0
    %v2681 = vsel %vm2677, %v2662, 0.0
    %v2682 = vsel %vm2678, %v2663, 0.0
    %v2683 = vsel %vm2679, %v2664, 0.0
    %vm2684 = vcmask 7168
    %v2685 = vsel %vm2684, %v2680, 0.0
    %v2686 = vsel %vm2684, %v2681, 0.0
    %v2687 = vadd.f32 %v2685, %v2686
    %v2688 = vsel %vm2684, %v2682, 0.0
    %v2689 = vadd.f32 %v2687, %v2688
    %v2690 = vsel %vm2684, %v2683, 0.0
    %v2691 = vadd.f32 %v2689, %v2690
    %2692 = vadd.xlane.f32.xlu0 %v2691
    %v2693 = vpop.xlane.xlu0 %2692
    %v2694 = vrot.slane %v2693, 4
    %v2695 = vadd.f32 %v2693, %v2694
    %v2696 = vrot.slane %v2695, 2
    %v2697 = vadd.f32 %v2695, %v2696
    %v2698 = vrot.slane %v2697, 1
    %v2699 = vadd.f32 %v2697, %v2698
    %s2700 = vtos %v2699
    %vm2701 = vcmp.eq.s32.totalorder %v2667, 0
    %vm2702 = vcmp.eq.s32.totalorder %v195, 0
    %vm2703 = vmand %vm2701, %vm2702
    %v2704 = vstv %s2700
    %v2705 = vsel %vm2703, %v2704, 0.0
    %2706 = vst [vmem:[#allocation7] sm:$0xff] %v2705
    // Predicated region
    $region18: #{tpu_custom_call.1} parent=1 // pred_check
      _
    $region19: #{tpu_custom_call.1} parent=1 // pred_check_branch
      %2708 = sbr.rel (0) target = $region21
    $region20: #{tpu_custom_call.1} parent=1 // pred_region
      %s2710 = ssub.s32 128, 128
      %2711 = vsyncadd [#allocation4], %s2710
      %s2713 = sshll.u32 [#allocation7], 4
      %s2714 = int_to_ptr.vmem [resolvable:$true] %s2713
      %2716 = dma.vmem_to_hbm [thread:$0]  %s2714, 128, %s2, [#allocation4]
    $region21: #{tpu_custom_call.1} parent=1 // pred_fallthru
      _
    // Predicated region
    $region22: #{tpu_custom_call.1} parent=1 // pred_check
      _
    $region23: #{tpu_custom_call.1} parent=1 // pred_check_branch
      %2718 = sbr.rel (0) target = $region25
    $region24: #{tpu_custom_call.1} parent=1 // pred_region
      %2719 = dma.done [#allocation4], 128
    $region25: #{tpu_custom_call.1} parent=1 // pred_fallthru
      _
    %2720 = vsyncpa [#allocation3], 1
    %2721 = vsyncpa [#allocation6], 1
    %2722 = vsyncpa [#allocation4], 1

</llo_original>
